<compile_context>
chip_gen: v7x
topology: tpu7x:2x2x1
jax: 0.10.0
libtpu: 0.0.40
codegen_flags: <defaults>
</compile_context>

<pallas_src>
import functools

import jax
import jax.numpy as jnp
import numpy as np
from jax.experimental import pallas as pl
from jax.experimental.pallas import tpu as pltpu

EPS = 1e-5
ROW_TILE = 512          # 512-row tiles: ~85% of HBM roofline vs ~63% at 256

_VMEM_LIMIT = None


def _vmem_limit_bytes():
    """Per-generation scoped-VMEM limit: ~3/4 of physical, capped at 100 MiB."""
    global _VMEM_LIMIT
    if _VMEM_LIMIT is None:
        try:
            cap = int(pltpu.get_tpu_info().vmem_capacity_bytes)
        except Exception:
            cap = 0
        if cap <= 0:
            _VMEM_LIMIT = 32 * 1024 * 1024        # conservative fallback
        else:
            _VMEM_LIMIT = min(cap * 3 // 4, 100 * 1024 * 1024)
    return _VMEM_LIMIT


def _compiler_params(semantics):
    try:
        return pltpu.CompilerParams(
            dimension_semantics=tuple(semantics),
            vmem_limit_bytes=_vmem_limit_bytes(),
        )
    except Exception:   # very old jax without CompilerParams: use defaults
        return None


def _finalize_stats(tot, count):
    """(sum, sum_sq) totals -> (mean, biased var), clamped against cancellation."""
    mean = tot[0] / count
    var = jnp.maximum(tot[1] / count - mean * mean, 0.0)
    return mean, var


def _bn_affine(gamma, beta, mean, var):
    """Fold train-mode BN into per-channel scale/shift (O(C) glue)."""
    scale = gamma * jax.lax.rsqrt(var + EPS)
    shift = beta - mean * scale
    return (scale.reshape(1, -1).astype(jnp.float32),
            shift.reshape(1, -1).astype(jnp.float32))


# --------------------------------------------------------------------------
# K1: per-channel (sum, sum_sq) of a (M, C) array, row-tiled, accumulated in
#     a VMEM-resident (2, C) output block across an "arbitrary" grid axis.
# --------------------------------------------------------------------------
def _make_stats_kernel(tile_rows, total_rows):
    need_mask = (total_rows % tile_rows) != 0

    def kernel(x_ref, st_ref):
        @pl.when(pl.program_id(0) == 0)
        def _():
            st_ref[...] = jnp.zeros(st_ref.shape, st_ref.dtype)
        x = x_ref[...]
        if need_mask:   # neutralize out-of-range rows of the last tile
            row0 = pl.program_id(0) * tile_rows
            rows = row0 + jax.lax.broadcasted_iota(jnp.int32, (tile_rows, 1), 0)
            x = jnp.where(rows < total_rows, x, 0.0)
        st_ref[...] += jnp.concatenate(
            [jnp.sum(x, axis=0, keepdims=True),
             jnp.sum(x * x, axis=0, keepdims=True)], axis=0)

    return kernel


def channel_stats(x_flat):
    """Train-mode BN batch statistics (mean, biased var) of a (M, C) array."""
    m, c = x_flat.shape
    tm = min(ROW_TILE, m)
    t = pl.cdiv(m, tm)
    tot = pl.pallas_call(
        _make_stats_kernel(tm, m),
        grid=(t,),
        in_specs=[pl.BlockSpec((tm, c), lambda i: (i, 0))],
        out_specs=pl.BlockSpec((2, c), lambda i: (0, 0)),   # resident accumulator
        out_shape=jax.ShapeDtypeStruct((2, c), jnp.float32),
        compiler_params=_compiler_params(("arbitrary",)),
    )(x_flat)
    return _finalize_stats(tot, m)


# --------------------------------------------------------------------------
# K2: fused BN1+ReLU -> kxk strided conv (+ 1x1 strided downsample conv)
#     + per-image (sum, sum_sq) partials of both results.  Grid over batch.
#     The kxk conv is ONE big-K MXU matmul over an in-VMEM im2col patch.
# --------------------------------------------------------------------------
def _make_conv_block_kernel(H, W, Cin, Cout, k, s, has_down):
    pad = k // 2
    Ho = (H + 2 * pad - k) // s + 1
    Wo = (W + 2 * pad - k) // s + 1

    def kernel(xps_ref, s1_ref, b1_ref, w1_ref, *rest):
        if has_down:
            wd_ref, h2_ref, st2_ref, d_ref, std_ref, ypad_ref, patch_ref = rest
        else:
            h2_ref, st2_ref, ypad_ref, patch_ref = rest

        # Zero the padded scratch ONCE.  The interior is fully overwritten at
        # exactly the same static offsets every grid step; only the constant
        # zero pad border must persist.  (Grid axis is "arbitrary" so the whole
        # grid runs sequentially on one core -> program_id==0 runs first.)
        @pl.when(pl.program_id(0) == 0)
        def _():
            ypad_ref[...] = jnp.zeros(ypad_ref.shape, ypad_ref.dtype)

        # ---- BN1 + ReLU prologue into the zero-padded VMEM scratch (f32) ----
        # (zeros in the scratch ARE the conv's zero padding: BN is applied only
        #  to real pixels, never to the padding, matching PyTorch semantics).
        s1 = s1_ref[...]          # (1, Cin) folded BN1 scale
        b1 = b1_ref[...]          # (1, Cin) folded BN1 shift
        for py in range(s):
            for px in range(s):
                blk = xps_ref[py * s + px].astype(jnp.float32)   # phase (py,px)
                y = jnp.maximum(blk * s1 + b1, 0.0)
                nh = (H - py + s - 1) // s                # real rows in phase
                nw = (W - px + s - 1) // s
                oq_y, ph_y = divmod(py + pad, s)
                oq_x, ph_x = divmod(px + pad, s)
                ypad_ref[ph_y * s + ph_x,
                         oq_y:oq_y + nh,
                         oq_x:oq_x + nw, :] = y[:nh, :nw, :]

        # ---- kxk strided conv = ONE bf16 MXU matmul, K = k*k*Cin ------------
        cols = []
        for dy in range(k):
            for dx in range(k):
                qy, ry = divmod(dy, s)
                qx, rx = divmod(dx, s)
                cols.append(ypad_ref[ry * s + rx, qy:qy + Ho, qx:qx + Wo, :])
        patch = jnp.concatenate(cols, axis=-1)            # (Ho, Wo, k*k*Cin) f32
        patch_ref[...] = patch.reshape(Ho * Wo, k * k * Cin).astype(jnp.bfloat16)
        acc = jnp.dot(patch_ref[...], w1_ref[...],
                      preferred_element_type=jnp.float32)  # (Ho*Wo, Cout) f32
        h2_ref[...] = acc.astype(h2_ref.dtype)
        st2_ref[...] = jnp.concatenate(
            [jnp.sum(acc, axis=0, keepdims=True),
             jnp.sum(acc * acc, axis=0, keepdims=True)], axis=0)

        # ---- fused downsample branch: 1x1 stride-s conv on *raw* x -----------
        if has_down:
            xd = (xps_ref[0, 0:Ho, 0:Wo, :]               # == x[::s, ::s, :]
                  .astype(jnp.float32)
                  .reshape(Ho * Wo, Cin)
                  .astype(jnp.bfloat16))
            dmm = jnp.dot(xd, wd_ref[...], preferred_element_type=jnp.float32)
            d_ref[...] = dmm.astype(d_ref.dtype)
            std_ref[...] = jnp.concatenate(
                [jnp.sum(dmm, axis=0, keepdims=True),
                 jnp.sum(dmm * dmm, axis=0, keepdims=True)], axis=0)

    return kernel


def conv_block(xps, scale1, shift1, w1r, wd, shape_info, has_down):
    (N, H, W, Cin, Cout, k, s, Ho, Wo, Hq_x, Wq_x, Hq_p, Wq_p) = shape_info
    kern = _make_conv_block_kernel(H, W, Cin, Cout, k, s, has_down)

    in_specs = [
        pl.BlockSpec((s * s, Hq_x, Wq_x, Cin), lambda n: (n, 0, 0, 0)),
        pl.BlockSpec((1, Cin), lambda n: (0, 0)),
        pl.BlockSpec((1, Cin), lambda n: (0, 0)),
        pl.BlockSpec((k * k * Cin, Cout), lambda n: (0, 0)),
    ]
    args = [xps, scale1, shift1, w1r]
    out_shape = [jax.ShapeDtypeStruct((N, Ho * Wo, Cout), jnp.bfloat16),
                 jax.ShapeDtypeStruct((N, 2, Cout), jnp.float32)]
    out_specs = [pl.BlockSpec((None, Ho * Wo, Cout), lambda n: (n, 0, 0)),
                 pl.BlockSpec((None, 2, Cout), lambda n: (n, 0, 0))]
    if has_down:
        in_specs.append(pl.BlockSpec((Cin, Cout), lambda n: (0, 0)))
        args.append(wd)
        out_shape += [jax.ShapeDtypeStruct((N, Ho * Wo, Cout), jnp.bfloat16),
                      jax.ShapeDtypeStruct((N, 2, Cout), jnp.float32)]
        out_specs += [pl.BlockSpec((None, Ho * Wo, Cout), lambda n: (n, 0, 0)),
                      pl.BlockSpec((None, 2, Cout), lambda n: (n, 0, 0))]

    return pl.pallas_call(
        kern,
        grid=(N,),
        in_specs=in_specs,
        out_specs=tuple(out_specs),
        out_shape=tuple(out_shape),
        scratch_shapes=[pltpu.VMEM((s * s, Hq_p, Wq_p, Cin), jnp.float32),
                        pltpu.VMEM((Ho * Wo, k * k * Cin), jnp.bfloat16)],
        # "arbitrary": required so the zero-once ypad init (program_id==0)
        # covers every grid step even on multi-TensorCore chips.
        compiler_params=_compiler_params(("arbitrary",)),
    )(*args)


# --------------------------------------------------------------------------
# K3: fused BN2+ReLU -> 1x1 conv, with BN3 (sum, sum_sq) accumulated in a
#     VMEM-resident (2, Cout) output block.  Row-tiled, "arbitrary" axis.
# --------------------------------------------------------------------------
def _make_bn_relu_conv1x1_kernel(tile_rows, total_rows):
    need_mask = (total_rows % tile_rows) != 0

    def kernel(h_ref, s_ref, b_ref, w_ref, o_ref, st_ref):
        @pl.when(pl.program_id(0) == 0)
        def _():
            st_ref[...] = jnp.zeros(st_ref.shape, st_ref.dtype)
        y = jnp.maximum(h_ref[...].astype(jnp.float32) * s_ref[...] + b_ref[...],
                        0.0)
        if need_mask:   # mask BEFORE the matmul: tail rows become exact zeros
            row0 = pl.program_id(0) * tile_rows
            rows = row0 + jax.lax.broadcasted_iota(jnp.int32, (tile_rows, 1), 0)
            y = jnp.where(rows < total_rows, y, 0.0)
        out = jnp.dot(y.astype(jnp.bfloat16), w_ref[...],
                      preferred_element_type=jnp.float32)
        o_ref[...] = out
        st_ref[...] += jnp.concatenate(
            [jnp.sum(out, axis=0, keepdims=True),
             jnp.sum(out * out, axis=0, keepdims=True)], axis=0)

    return kernel


def bn_relu_conv1x1(h_flat, scale, shift, w_bf16):
    m, cin = h_flat.shape
    cout = w_bf16.shape[1]
    tm = min(ROW_TILE, m)
    t = pl.cdiv(m, tm)
    h4, tot = pl.pallas_call(
        _make_bn_relu_conv1x1_kernel(tm, m),
        grid=(t,),
        in_specs=[pl.BlockSpec((tm, cin), lambda i: (i, 0)),
                  pl.BlockSpec((1, cin), lambda i: (0, 0)),
                  pl.BlockSpec((1, cin), lambda i: (0, 0)),
                  pl.BlockSpec((cin, cout), lambda i: (0, 0))],
        out_specs=(pl.BlockSpec((tm, cout), lambda i: (i, 0)),
                   pl.BlockSpec((2, cout), lambda i: (0, 0))),
        out_shape=(jax.ShapeDtypeStruct((m, cout), jnp.float32),
                   jax.ShapeDtypeStruct((2, cout), jnp.float32)),
        compiler_params=_compiler_params(("arbitrary",)),
    )(h_flat, scale, shift, w_bf16)
    mean, var = _finalize_stats(tot, m)
    return h4, mean, var


# --------------------------------------------------------------------------
# K4: fused residual merge  BN3(h) + BN_down(d)   (or identity d). Row-tiled.
# --------------------------------------------------------------------------
def _make_merge_kernel(has_down):
    def kernel(h_ref, s3_ref, b3_ref, d_ref, *rest):
        if has_down:
            sd_ref, bd_ref, o_ref = rest
            res = d_ref[...].astype(jnp.float32) * sd_ref[...] + bd_ref[...]
        else:
            (o_ref,) = rest
            res = d_ref[...].astype(jnp.float32)
        o_ref[...] = h_ref[...] * s3_ref[...] + b3_ref[...] + res
    return kernel


def bn_add(h4, scale3, shift3, d, scale_d=None, shift_d=None):
    has_down = scale_d is not None
    m, c = h4.shape
    tm = min(ROW_TILE, m)
    t = pl.cdiv(m, tm)
    in_specs = [pl.BlockSpec((tm, c), lambda i: (i, 0)),
                pl.BlockSpec((1, c), lambda i: (0, 0)),
                pl.BlockSpec((1, c), lambda i: (0, 0)),
                pl.BlockSpec((tm, d.shape[1]), lambda i: (i, 0))]
    args = [h4, scale3, shift3, d]
    if has_down:
        in_specs += [pl.BlockSpec((1, c), lambda i: (0, 0)),
                     pl.BlockSpec((1, c), lambda i: (0, 0))]
        args += [scale_d, shift_d]
    return pl.pallas_call(
        _make_merge_kernel(has_down),
        grid=(t,),
        in_specs=in_specs,
        out_specs=pl.BlockSpec((tm, c), lambda i: (i, 0)),
        out_shape=jax.ShapeDtypeStruct((m, c), jnp.float32),
        compiler_params=_compiler_params(("parallel",)),
    )(*args)


# --------------------------------------------------------------------------
# ResBlock forward
# --------------------------------------------------------------------------
def resblock_forward(x_nchw, params, kernel, stride):
    N, Cin, H, W = x_nchw.shape
    Cout = params["w1"].shape[0]
    k, s = kernel, stride
    assert k % 2 == 1, "ResBlock residual add only shape-checks for odd kernels"
    pad = k // 2
    has_down = (Cin != Cout) or (s != 1)

    Ho = (H + 2 * pad - k) // s + 1
    Wo = (W + 2 * pad - k) // s + 1
    M, M2 = N * H * W, N * Ho * Wo

    # NCHW -> NHWC once at the module boundary (channels ride the 128-lane axis).
    x = jnp.transpose(x_nchw, (0, 2, 3, 1)).astype(jnp.float32)

    # ---- K1: BN1 batch statistics (VMEM-accumulated Pallas row reduction) ----
    mean1, var1 = channel_stats(x.reshape(M, Cin))
    scale1, shift1 = _bn_affine(params["g1"], params["b1"], mean1, var1)

    # ---- space-to-batch phase split of the *raw* input (s*s phases) ---------
    # A 1x layout repack (no-op for stride 1), stored in bf16 to halve the HBM
    # round trip; BN1 statistics were already taken from the f32 x above.
    H2 = -(-H // s) * s
    W2 = -(-W // s) * s
    xpad = x if (H2 == H and W2 == W) else jnp.pad(
        x, ((0, 0), (0, H2 - H), (0, W2 - W), (0, 0)))
    Hq_x, Wq_x = H2 // s, W2 // s
    xps = (xpad.reshape(N, Hq_x, s, Wq_x, s, Cin)
           .transpose(0, 2, 4, 1, 3, 5)
           .reshape(N * s * s, Hq_x, Wq_x, Cin)).astype(jnp.bfloat16)
    Hq_p = -(-(H + 2 * pad) // s)
    Wq_p = -(-(W + 2 * pad) // s)

    # bf16 weights for the MXU (accumulation stays f32 inside the kernels).
    # Conv1 weight is pre-reshaped to (k*k*Cin, Cout) for the single big-K matmul.
    w1r = (jnp.transpose(params["w1"], (2, 3, 1, 0))
           .reshape(k * k * Cin, Cout).astype(jnp.bfloat16))
    wd = params["wd"][:, :, 0, 0].T.astype(jnp.bfloat16) if has_down else None

    shape_info = (N, H, W, Cin, Cout, k, s, Ho, Wo, Hq_x, Wq_x, Hq_p, Wq_p)
    res = conv_block(xps, scale1, shift1, w1r, wd, shape_info, has_down)
    if has_down:
        h2, st2, d, std = res
        d = d.reshape(M2, Cout)
    else:
        h2, st2 = res
        d = x.reshape(M, Cin)             # identity residual (s==1, Cin==Cout)
    h2 = h2.reshape(M2, Cout)

    # ---- BN2 fold from K2's fused partial statistics -------------------------
    mean2, var2 = _finalize_stats(st2.sum(axis=0), M2)
    scale2, shift2 = _bn_affine(params["g2"], params["b2"], mean2, var2)

    # ---- K3: BN2 + ReLU -> 1x1 conv (+ BN3 statistics) -----------------------
    w2m = params["w2"][:, :, 0, 0].T.astype(jnp.bfloat16)
    h4, mean3, var3 = bn_relu_conv1x1(h2, scale2, shift2, w2m)
    scale3, shift3 = _bn_affine(params["g3"], params["b3"], mean3, var3)

    # ---- K4: fused residual merge --------------------------------------------
    if has_down:
        meand, vard = _finalize_stats(std.sum(axis=0), M2)
        scale_d, shift_d = _bn_affine(params["gd"], params["bd"], meand, vard)
        out = bn_add(h4, scale3, shift3, d, scale_d, shift_d)
    else:
        out = bn_add(h4, scale3, shift3, d)

    out = out.reshape(N, Ho, Wo, Cout)
    return jnp.transpose(out, (0, 3, 1, 2))          # back to NCHW


# --------------------------------------------------------------------------
# pure-JAX f32 reference (train-mode BN, biased variance)
# --------------------------------------------------------------------------
def ref_resblock(x, params, kernel, stride):
    def bn(t, g, b):
        mean = t.mean(axis=(0, 2, 3), keepdims=True)
        var = ((t - mean) ** 2).mean(axis=(0, 2, 3), keepdims=True)
        return ((t - mean) / jnp.sqrt(var + EPS) * g.reshape(1, -1, 1, 1)
                + b.reshape(1, -1, 1, 1))

    def conv(t, w, s, p):
        return jax.lax.conv_general_dilated(
            t, w, (s, s), [(p, p), (p, p)],
            dimension_numbers=("NCHW", "OIHW", "NCHW"))

    h = jnp.maximum(bn(x, params["g1"], params["b1"]), 0.0)
    h = conv(h, params["w1"], stride, kernel // 2)
    h = jnp.maximum(bn(h, params["g2"], params["b2"]), 0.0)
    h = conv(h, params["w2"], 1, 0)
    h = bn(h, params["g3"], params["b3"])
    Cin, Cout = x.shape[1], params["w1"].shape[0]
    if Cin != Cout or stride != 1:
        d = bn(conv(x, params["wd"], stride, 0), params["gd"], params["bd"])
    else:
        d = x
    return d + h


# --------------------------------------------------------------------------
if __name__ == "__main__":
    N, Cin, H, W = 2, 4, 16, 16
    Cout, kernel, stride = 8, 3, 2

    key = jax.random.PRNGKey(0)
    ks = jax.random.split(key, 12)
    x = jax.random.normal(ks[0], (N, Cin, H, W), jnp.float32)

    params = {
        "w1": 0.1 * jax.random.normal(ks[1], (Cout, Cin, kernel, kernel), jnp.float32),
        "w2": 0.1 * jax.random.normal(ks[2], (Cout, Cout, 1, 1), jnp.float32),
        "wd": 0.1 * jax.random.normal(ks[3], (Cout, Cin, 1, 1), jnp.float32),
        "g1": 1.0 + 0.1 * jax.random.normal(ks[4], (Cin,), jnp.float32),
        "b1": 0.1 * jax.random.normal(ks[5], (Cin,), jnp.float32),
        "g2": 1.0 + 0.1 * jax.random.normal(ks[6], (Cout,), jnp.float32),
        "b2": 0.1 * jax.random.normal(ks[7], (Cout,), jnp.float32),
        "g3": 1.0 + 0.1 * jax.random.normal(ks[8], (Cout,), jnp.float32),
        "b3": 0.1 * jax.random.normal(ks[9], (Cout,), jnp.float32),
        "gd": 1.0 + 0.1 * jax.random.normal(ks[10], (Cout,), jnp.float32),
        "bd": 0.1 * jax.random.normal(ks[11], (Cout,), jnp.float32),
    }

    fwd = jax.jit(functools.partial(resblock_forward, kernel=kernel, stride=stride))
    out = jax.block_until_ready(fwd(x, params))

    ref = jax.block_until_ready(ref_resblock(x, params, kernel, stride))
    # bf16 MXU inputs + bf16 HBM intermediates (f32 accumulation & BN stats)
    # vs. the pure-f32 reference: ~1-2% error.
    np.testing.assert_allclose(np.asarray(out), np.asarray(ref), rtol=3e-2, atol=3e-2)

    print("KERNEL_OK")
</pallas_src>

<mosaic_0001>
module attributes {stable_mosaic.version = 11 : i64} {
  func.func @kernel(%arg0: i32, %arg1: memref<512x4xf32, #tpu.memory_space<vmem>>, %arg2: memref<2x4xf32, #tpu.memory_space<vmem>>) attributes {dimension_semantics = [#tpu.dimension_semantics<arbitrary>], iteration_bounds = array<i64: 1>, scalar_prefetch = 0 : i64, scratch_operands = 0 : i64, tpu.core_type = #tpu.core_type<tc>, window_params = [{transform_indices = @transform_0, window_bounds = array<i64: 512, 4>}, {pipeline_mode = #tpu.pipeline_mode<synchronous>, transform_indices = @transform_1, window_bounds = array<i64: 2, 4>}]} {
    %c0_i32 = arith.constant 0 : i32
    %0 = arith.cmpi eq, %arg0, %c0_i32 : i32
    %1 = arith.extui %0 : i1 to i32
    %c0_i32_0 = arith.constant 0 : i32
    %2 = arith.cmpi ne, %1, %c0_i32_0 : i32
    scf.if %2 {
      %cst_7 = arith.constant 0.000000e+00 : f32
      %13 = vector.broadcast %cst_7 : f32 to vector<2x4xf32>
      %c0_8 = arith.constant 0 : index
      %c0_9 = arith.constant 0 : index
      %14 = vector.load %arg2[%c0_8, %c0_9] : memref<2x4xf32, #tpu.memory_space<vmem>>, vector<2x4xf32>
      tpu.vector_store %arg2[%c0_8, %c0_9], %13 {strides = array<i32>} : memref<2x4xf32, #tpu.memory_space<vmem>>, vector<2x4xf32>,
    } else {
    }
    %c0 = arith.constant 0 : index
    %c0_1 = arith.constant 0 : index
    %3 = vector.load %arg1[%c0, %c0_1] : memref<512x4xf32, #tpu.memory_space<vmem>>, vector<512x4xf32>
    %c0_2 = arith.constant 0 : index
    %c0_3 = arith.constant 0 : index
    %4 = vector.load %arg2[%c0_2, %c0_3] : memref<2x4xf32, #tpu.memory_space<vmem>>, vector<2x4xf32>
    %cst = arith.constant dense<0.000000e+00> : vector<4xf32>
    %5 = vector.multi_reduction <add>, %3, %cst [0] : vector<512x4xf32> to vector<4xf32>
    %6 = vector.shape_cast %5 : vector<4xf32> to vector<1x4xf32>
    %7 = arith.mulf %3, %3 : vector<512x4xf32>
    %cst_4 = arith.constant dense<0.000000e+00> : vector<4xf32>
    %8 = vector.multi_reduction <add>, %7, %cst_4 [0] : vector<512x4xf32> to vector<4xf32>
    %9 = vector.shape_cast %8 : vector<4xf32> to vector<1x4xf32>
    %10 = tpu.concatenate %6, %9 in 0 : vector<1x4xf32>, vector<1x4xf32> -> vector<2x4xf32>
    %11 = arith.addf %4, %10 : vector<2x4xf32>
    %c0_5 = arith.constant 0 : index
    %c0_6 = arith.constant 0 : index
    %12 = vector.load %arg2[%c0_5, %c0_6] : memref<2x4xf32, #tpu.memory_space<vmem>>, vector<2x4xf32>
    tpu.vector_store %arg2[%c0_5, %c0_6], %11 {strides = array<i32>} : memref<2x4xf32, #tpu.memory_space<vmem>>, vector<2x4xf32>,
    return
  }
  func.func @transform_0(%arg0: i32) -> (i32, i32) {
    %c0_i32 = arith.constant 0 : i32
    %c0_i32_0 = arith.constant 0 : i32
    return %arg0, %c0_i32 : i32, i32
  }
  func.func @transform_1(%arg0: i32) -> (i32, i32) {
    %c0_i32 = arith.constant 0 : i32
    %c0_i32_0 = arith.constant 0 : i32
    %c0_i32_1 = arith.constant 0 : i32
    return %c0_i32, %c0_i32_0 : i32, i32
  }
}

module attributes {stable_mosaic.version = 11 : i64} {
  func.func @kernel(%arg0: i32, %arg1: memref<4x8x8x4xbf16, #tpu.memory_space<vmem>>, %arg2: memref<1x4xf32, #tpu.memory_space<vmem>>, %arg3: memref<1x4xf32, #tpu.memory_space<vmem>>, %arg4: memref<36x8xbf16, #tpu.memory_space<vmem>>, %arg5: memref<4x8xbf16, #tpu.memory_space<vmem>>, %arg6: memref<1x64x8xbf16, #tpu.memory_space<vmem>>, %arg7: memref<1x2x8xf32, #tpu.memory_space<vmem>>, %arg8: memref<1x64x8xbf16, #tpu.memory_space<vmem>>, %arg9: memref<1x2x8xf32, #tpu.memory_space<vmem>>, %arg10: memref<4x9x9x4xf32, #tpu.memory_space<vmem>>, %arg11: memref<64x36xbf16, #tpu.memory_space<vmem>>) attributes {dimension_semantics = [#tpu.dimension_semantics<arbitrary>], iteration_bounds = array<i64: 2>, scalar_prefetch = 0 : i64, scratch_operands = 2 : i64, tpu.core_type = #tpu.core_type<tc>, window_params = [{transform_indices = @transform_0, window_bounds = array<i64: 4, 8, 8, 4>}, {pipeline_mode = #tpu.pipeline_mode<synchronous>, transform_indices = @transform_1, window_bounds = array<i64: 1, 4>}, {pipeline_mode = #tpu.pipeline_mode<synchronous>, transform_indices = @transform_2, window_bounds = array<i64: 1, 4>}, {pipeline_mode = #tpu.pipeline_mode<synchronous>, transform_indices = @transform_3, window_bounds = array<i64: 36, 8>}, {pipeline_mode = #tpu.pipeline_mode<synchronous>, transform_indices = @transform_4, window_bounds = array<i64: 4, 8>}, {transform_indices = @transform_5, window_bounds = array<i64: 1, 64, 8>}, {transform_indices = @transform_6, window_bounds = array<i64: 1, 2, 8>}, {transform_indices = @transform_7, window_bounds = array<i64: 1, 64, 8>}, {transform_indices = @transform_8, window_bounds = array<i64: 1, 2, 8>}]} {
    %c0_i32 = arith.constant 0 : i32
    %0 = arith.cmpi eq, %arg0, %c0_i32 : i32
    %1 = arith.extui %0 : i1 to i32
    %c0_i32_0 = arith.constant 0 : i32
    %2 = arith.cmpi ne, %1, %c0_i32_0 : i32
    scf.if %2 {
      %cst_102 = arith.constant 0.000000e+00 : f32
      %119 = vector.broadcast %cst_102 : f32 to vector<4x9x9x4xf32>
      %c0_103 = arith.constant 0 : index
      %c0_104 = arith.constant 0 : index
      %c0_105 = arith.constant 0 : index
      %c0_106 = arith.constant 0 : index
      %120 = vector.load %arg10[%c0_103, %c0_104, %c0_105, %c0_106] : memref<4x9x9x4xf32, #tpu.memory_space<vmem>>, vector<4x9x9x4xf32>
      tpu.vector_store %arg10[%c0_103, %c0_104, %c0_105, %c0_106], %119 {strides = array<i32>} : memref<4x9x9x4xf32, #tpu.memory_space<vmem>>, vector<4x9x9x4xf32>,
    } else {
    }
    %c0 = arith.constant 0 : index
    %c0_1 = arith.constant 0 : index
    %3 = vector.load %arg2[%c0, %c0_1] : memref<1x4xf32, #tpu.memory_space<vmem>>, vector<1x4xf32>
    %c0_2 = arith.constant 0 : index
    %c0_3 = arith.constant 0 : index
    %4 = vector.load %arg3[%c0_2, %c0_3] : memref<1x4xf32, #tpu.memory_space<vmem>>, vector<1x4xf32>
    %c0_4 = arith.constant 0 : index
    %c0_5 = arith.constant 0 : index
    %c0_6 = arith.constant 0 : index
    %c0_7 = arith.constant 0 : index
    %5 = vector.load %arg1[%c0_4, %c0_5, %c0_6, %c0_7] : memref<4x8x8x4xbf16, #tpu.memory_space<vmem>>, vector<1x8x8x4xbf16>
    %6 = vector.shape_cast %5 : vector<1x8x8x4xbf16> to vector<8x8x4xbf16>
    %7 = arith.extf %6 : vector<8x8x4xbf16> to vector<8x8x4xf32>
    %8 = vector.shape_cast %3 : vector<1x4xf32> to vector<1x1x4xf32>
    %9 = vector.broadcast %8 : vector<1x1x4xf32> to vector<8x8x4xf32>
    %10 = arith.mulf %7, %9 : vector<8x8x4xf32>
    %11 = vector.shape_cast %4 : vector<1x4xf32> to vector<1x1x4xf32>
    %12 = vector.broadcast %11 : vector<1x1x4xf32> to vector<8x8x4xf32>
    %13 = arith.addf %10, %12 : vector<8x8x4xf32>
    %cst = arith.constant 0.000000e+00 : f32
    %14 = vector.broadcast %cst : f32 to vector<8x8x4xf32>
    %15 = arith.maximumf %13, %14 : vector<8x8x4xf32>
    %c3 = arith.constant 3 : index
    %c0_8 = arith.constant 0 : index
    %c0_9 = arith.constant 0 : index
    %c0_10 = arith.constant 0 : index
    %16 = vector.load %arg10[%c3, %c0_8, %c0_9, %c0_10] : memref<4x9x9x4xf32, #tpu.memory_space<vmem>>, vector<1x8x8x4xf32>
    %17 = vector.shape_cast %16 : vector<1x8x8x4xf32> to vector<8x8x4xf32>
    %18 = vector.shape_cast %15 : vector<8x8x4xf32> to vector<1x8x8x4xf32>
    tpu.vector_store %arg10[%c3, %c0_8, %c0_9, %c0_10], %18 {strides = array<i32>} : memref<4x9x9x4xf32, #tpu.memory_space<vmem>>, vector<1x8x8x4xf32>,
    %c1 = arith.constant 1 : index
    %c0_11 = arith.constant 0 : index
    %c0_12 = arith.constant 0 : index
    %c0_13 = arith.constant 0 : index
    %19 = vector.load %arg1[%c1, %c0_11, %c0_12, %c0_13] : memref<4x8x8x4xbf16, #tpu.memory_space<vmem>>, vector<1x8x8x4xbf16>
    %20 = vector.shape_cast %19 : vector<1x8x8x4xbf16> to vector<8x8x4xbf16>
    %21 = arith.extf %20 : vector<8x8x4xbf16> to vector<8x8x4xf32>
    %22 = vector.shape_cast %3 : vector<1x4xf32> to vector<1x1x4xf32>
    %23 = vector.broadcast %22 : vector<1x1x4xf32> to vector<8x8x4xf32>
    %24 = arith.mulf %21, %23 : vector<8x8x4xf32>
    %25 = vector.shape_cast %4 : vector<1x4xf32> to vector<1x1x4xf32>
    %26 = vector.broadcast %25 : vector<1x1x4xf32> to vector<8x8x4xf32>
    %27 = arith.addf %24, %26 : vector<8x8x4xf32>
    %cst_14 = arith.constant 0.000000e+00 : f32
    %28 = vector.broadcast %cst_14 : f32 to vector<8x8x4xf32>
    %29 = arith.maximumf %27, %28 : vector<8x8x4xf32>
    %c2 = arith.constant 2 : index
    %c0_15 = arith.constant 0 : index
    %c1_16 = arith.constant 1 : index
    %c0_17 = arith.constant 0 : index
    %30 = vector.load %arg10[%c2, %c0_15, %c1_16, %c0_17] : memref<4x9x9x4xf32, #tpu.memory_space<vmem>>, vector<1x8x8x4xf32>
    %31 = vector.shape_cast %30 : vector<1x8x8x4xf32> to vector<8x8x4xf32>
    %32 = vector.shape_cast %29 : vector<8x8x4xf32> to vector<1x8x8x4xf32>
    tpu.vector_store %arg10[%c2, %c0_15, %c1_16, %c0_17], %32 {strides = array<i32>} : memref<4x9x9x4xf32, #tpu.memory_space<vmem>>, vector<1x8x8x4xf32>,
    %c2_18 = arith.constant 2 : index
    %c0_19 = arith.constant 0 : index
    %c0_20 = arith.constant 0 : index
    %c0_21 = arith.constant 0 : index
    %33 = vector.load %arg1[%c2_18, %c0_19, %c0_20, %c0_21] : memref<4x8x8x4xbf16, #tpu.memory_space<vmem>>, vector<1x8x8x4xbf16>
    %34 = vector.shape_cast %33 : vector<1x8x8x4xbf16> to vector<8x8x4xbf16>
    %35 = arith.extf %34 : vector<8x8x4xbf16> to vector<8x8x4xf32>
    %36 = vector.shape_cast %3 : vector<1x4xf32> to vector<1x1x4xf32>
    %37 = vector.broadcast %36 : vector<1x1x4xf32> to vector<8x8x4xf32>
    %38 = arith.mulf %35, %37 : vector<8x8x4xf32>
    %39 = vector.shape_cast %4 : vector<1x4xf32> to vector<1x1x4xf32>
    %40 = vector.broadcast %39 : vector<1x1x4xf32> to vector<8x8x4xf32>
    %41 = arith.addf %38, %40 : vector<8x8x4xf32>
    %cst_22 = arith.constant 0.000000e+00 : f32
    %42 = vector.broadcast %cst_22 : f32 to vector<8x8x4xf32>
    %43 = arith.maximumf %41, %42 : vector<8x8x4xf32>
    %c1_23 = arith.constant 1 : index
    %c1_24 = arith.constant 1 : index
    %c0_25 = arith.constant 0 : index
    %c0_26 = arith.constant 0 : index
    %44 = vector.load %arg10[%c1_23, %c1_24, %c0_25, %c0_26] : memref<4x9x9x4xf32, #tpu.memory_space<vmem>>, vector<1x8x8x4xf32>
    %45 = vector.shape_cast %44 : vector<1x8x8x4xf32> to vector<8x8x4xf32>
    %46 = vector.shape_cast %43 : vector<8x8x4xf32> to vector<1x8x8x4xf32>
    tpu.vector_store %arg10[%c1_23, %c1_24, %c0_25, %c0_26], %46 {strides = array<i32>} : memref<4x9x9x4xf32, #tpu.memory_space<vmem>>, vector<1x8x8x4xf32>,
    %c3_27 = arith.constant 3 : index
    %c0_28 = arith.constant 0 : index
    %c0_29 = arith.constant 0 : index
    %c0_30 = arith.constant 0 : index
    %47 = vector.load %arg1[%c3_27, %c0_28, %c0_29, %c0_30] : memref<4x8x8x4xbf16, #tpu.memory_space<vmem>>, vector<1x8x8x4xbf16>
    %48 = vector.shape_cast %47 : vector<1x8x8x4xbf16> to vector<8x8x4xbf16>
    %49 = arith.extf %48 : vector<8x8x4xbf16> to vector<8x8x4xf32>
    %50 = vector.shape_cast %3 : vector<1x4xf32> to vector<1x1x4xf32>
    %51 = vector.broadcast %50 : vector<1x1x4xf32> to vector<8x8x4xf32>
    %52 = arith.mulf %49, %51 : vector<8x8x4xf32>
    %53 = vector.shape_cast %4 : vector<1x4xf32> to vector<1x1x4xf32>
    %54 = vector.broadcast %53 : vector<1x1x4xf32> to vector<8x8x4xf32>
    %55 = arith.addf %52, %54 : vector<8x8x4xf32>
    %cst_31 = arith.constant 0.000000e+00 : f32
    %56 = vector.broadcast %cst_31 : f32 to vector<8x8x4xf32>
    %57 = arith.maximumf %55, %56 : vector<8x8x4xf32>
    %c0_32 = arith.constant 0 : index
    %c1_33 = arith.constant 1 : index
    %c1_34 = arith.constant 1 : index
    %c0_35 = arith.constant 0 : index
    %58 = vector.load %arg10[%c0_32, %c1_33, %c1_34, %c0_35] : memref<4x9x9x4xf32, #tpu.memory_space<vmem>>, vector<1x8x8x4xf32>
    %59 = vector.shape_cast %58 : vector<1x8x8x4xf32> to vector<8x8x4xf32>
    %60 = vector.shape_cast %57 : vector<8x8x4xf32> to vector<1x8x8x4xf32>
    tpu.vector_store %arg10[%c0_32, %c1_33, %c1_34, %c0_35], %60 {strides = array<i32>} : memref<4x9x9x4xf32, #tpu.memory_space<vmem>>, vector<1x8x8x4xf32>,
    %c0_36 = arith.constant 0 : index
    %c0_37 = arith.constant 0 : index
    %c0_38 = arith.constant 0 : index
    %c0_39 = arith.constant 0 : index
    %61 = vector.load %arg10[%c0_36, %c0_37, %c0_38, %c0_39] : memref<4x9x9x4xf32, #tpu.memory_space<vmem>>, vector<1x8x8x4xf32>
    %62 = vector.shape_cast %61 : vector<1x8x8x4xf32> to vector<8x8x4xf32>
    %c1_40 = arith.constant 1 : index
    %c0_41 = arith.constant 0 : index
    %c0_42 = arith.constant 0 : index
    %c0_43 = arith.constant 0 : index
    %63 = vector.load %arg10[%c1_40, %c0_41, %c0_42, %c0_43] : memref<4x9x9x4xf32, #tpu.memory_space<vmem>>, vector<1x8x8x4xf32>
    %64 = vector.shape_cast %63 : vector<1x8x8x4xf32> to vector<8x8x4xf32>
    %c0_44 = arith.constant 0 : index
    %c0_45 = arith.constant 0 : index
    %c1_46 = arith.constant 1 : index
    %c0_47 = arith.constant 0 : index
    %65 = vector.load %arg10[%c0_44, %c0_45, %c1_46, %c0_47] : memref<4x9x9x4xf32, #tpu.memory_space<vmem>>, vector<1x8x8x4xf32>
    %66 = vector.shape_cast %65 : vector<1x8x8x4xf32> to vector<8x8x4xf32>
    %c2_48 = arith.constant 2 : index
    %c0_49 = arith.constant 0 : index
    %c0_50 = arith.constant 0 : index
    %c0_51 = arith.constant 0 : index
    %67 = vector.load %arg10[%c2_48, %c0_49, %c0_50, %c0_51] : memref<4x9x9x4xf32, #tpu.memory_space<vmem>>, vector<1x8x8x4xf32>
    %68 = vector.shape_cast %67 : vector<1x8x8x4xf32> to vector<8x8x4xf32>
    %c3_52 = arith.constant 3 : index
    %c0_53 = arith.constant 0 : index
    %c0_54 = arith.constant 0 : index
    %c0_55 = arith.constant 0 : index
    %69 = vector.load %arg10[%c3_52, %c0_53, %c0_54, %c0_55] : memref<4x9x9x4xf32, #tpu.memory_space<vmem>>, vector<1x8x8x4xf32>
    %70 = vector.shape_cast %69 : vector<1x8x8x4xf32> to vector<8x8x4xf32>
    %c2_56 = arith.constant 2 : index
    %c0_57 = arith.constant 0 : index
    %c1_58 = arith.constant 1 : index
    %c0_59 = arith.constant 0 : index
    %71 = vector.load %arg10[%c2_56, %c0_57, %c1_58, %c0_59] : memref<4x9x9x4xf32, #tpu.memory_space<vmem>>, vector<1x8x8x4xf32>
    %72 = vector.shape_cast %71 : vector<1x8x8x4xf32> to vector<8x8x4xf32>
    %c0_60 = arith.constant 0 : index
    %c1_61 = arith.constant 1 : index
    %c0_62 = arith.constant 0 : index
    %c0_63 = arith.constant 0 : index
    %73 = vector.load %arg10[%c0_60, %c1_61, %c0_62, %c0_63] : memref<4x9x9x4xf32, #tpu.memory_space<vmem>>, vector<1x8x8x4xf32>
    %74 = vector.shape_cast %73 : vector<1x8x8x4xf32> to vector<8x8x4xf32>
    %c1_64 = arith.constant 1 : index
    %c1_65 = arith.constant 1 : index
    %c0_66 = arith.constant 0 : index
    %c0_67 = arith.constant 0 : index
    %75 = vector.load %arg10[%c1_64, %c1_65, %c0_66, %c0_67] : memref<4x9x9x4xf32, #tpu.memory_space<vmem>>, vector<1x8x8x4xf32>
    %76 = vector.shape_cast %75 : vector<1x8x8x4xf32> to vector<8x8x4xf32>
    %c0_68 = arith.constant 0 : index
    %c1_69 = arith.constant 1 : index
    %c1_70 = arith.constant 1 : index
    %c0_71 = arith.constant 0 : index
    %77 = vector.load %arg10[%c0_68, %c1_69, %c1_70, %c0_71] : memref<4x9x9x4xf32, #tpu.memory_space<vmem>>, vector<1x8x8x4xf32>
    %78 = vector.shape_cast %77 : vector<1x8x8x4xf32> to vector<8x8x4xf32>
    %79 = tpu.concatenate %62, %64, %66, %68, %70, %72, %74, %76, %78 in 2 : vector<8x8x4xf32>, vector<8x8x4xf32>, vector<8x8x4xf32>, vector<8x8x4xf32>, vector<8x8x4xf32>, vector<8x8x4xf32>, vector<8x8x4xf32>, vector<8x8x4xf32>, vector<8x8x4xf32> -> vector<8x8x36xf32>
    %80 = vector.shape_cast %79 : vector<8x8x36xf32> to vector<64x36xf32>
    %81 = arith.truncf %80 : vector<64x36xf32> to vector<64x36xbf16>
    %c0_72 = arith.constant 0 : index
    %c0_73 = arith.constant 0 : index
    %82 = vector.load %arg11[%c0_72, %c0_73] : memref<64x36xbf16, #tpu.memory_space<vmem>>, vector<64x36xbf16>
    tpu.vector_store %arg11[%c0_72, %c0_73], %81 {strides = array<i32>} : memref<64x36xbf16, #tpu.memory_space<vmem>>, vector<64x36xbf16>,
    %c0_74 = arith.constant 0 : index
    %c0_75 = arith.constant 0 : index
    %83 = vector.load %arg11[%c0_74, %c0_75] : memref<64x36xbf16, #tpu.memory_space<vmem>>, vector<64x36xbf16>
    %c0_76 = arith.constant 0 : index
    %c0_77 = arith.constant 0 : index
    %84 = vector.load %arg4[%c0_76, %c0_77] : memref<36x8xbf16, #tpu.memory_space<vmem>>, vector<36x8xbf16>
    %cst_78 = arith.constant dense<0.000000e+00> : vector<64x8xf32>
    %85 = tpu.matmul %83, %84, %cst_78 {dimension_numbers = #tpu.dot_dimension_numbers<[1], [0], [0], [1], [0, 0, 1, 1], [], []>} : vector<64x36xbf16>, vector<36x8xbf16>, vector<64x8xf32> -> vector<64x8xf32>
    %86 = arith.truncf %85 : vector<64x8xf32> to vector<64x8xbf16>
    %c0_79 = arith.constant 0 : index
    %c0_80 = arith.constant 0 : index
    %c0_81 = arith.constant 0 : index
    %87 = vector.load %arg6[%c0_79, %c0_80, %c0_81] : memref<1x64x8xbf16, #tpu.memory_space<vmem>>, vector<1x64x8xbf16>
    %88 = vector.shape_cast %87 : vector<1x64x8xbf16> to vector<64x8xbf16>
    %89 = vector.shape_cast %86 : vector<64x8xbf16> to vector<1x64x8xbf16>
    tpu.vector_store %arg6[%c0_79, %c0_80, %c0_81], %89 {strides = array<i32>} : memref<1x64x8xbf16, #tpu.memory_space<vmem>>, vector<1x64x8xbf16>,
    %cst_82 = arith.constant dense<0.000000e+00> : vector<8xf32>
    %90 = vector.multi_reduction <add>, %85, %cst_82 [0] : vector<64x8xf32> to vector<8xf32>
    %91 = vector.shape_cast %90 : vector<8xf32> to vector<1x8xf32>
    %92 = arith.mulf %85, %85 : vector<64x8xf32>
    %cst_83 = arith.constant dense<0.000000e+00> : vector<8xf32>
    %93 = vector.multi_reduction <add>, %92, %cst_83 [0] : vector<64x8xf32> to vector<8xf32>
    %94 = vector.shape_cast %93 : vector<8xf32> to vector<1x8xf32>
    %95 = tpu.concatenate %91, %94 in 0 : vector<1x8xf32>, vector<1x8xf32> -> vector<2x8xf32>
    %c0_84 = arith.constant 0 : index
    %c0_85 = arith.constant 0 : index
    %c0_86 = arith.constant 0 : index
    %96 = vector.load %arg7[%c0_84, %c0_85, %c0_86] : memref<1x2x8xf32, #tpu.memory_space<vmem>>, vector<1x2x8xf32>
    %97 = vector.shape_cast %96 : vector<1x2x8xf32> to vector<2x8xf32>
    %98 = vector.shape_cast %95 : vector<2x8xf32> to vector<1x2x8xf32>
    tpu.vector_store %arg7[%c0_84, %c0_85, %c0_86], %98 {strides = array<i32>} : memref<1x2x8xf32, #tpu.memory_space<vmem>>, vector<1x2x8xf32>,
    %c0_87 = arith.constant 0 : index
    %c0_88 = arith.constant 0 : index
    %c0_89 = arith.constant 0 : index
    %c0_90 = arith.constant 0 : index
    %99 = vector.load %arg1[%c0_87, %c0_88, %c0_89, %c0_90] : memref<4x8x8x4xbf16, #tpu.memory_space<vmem>>, vector<1x8x8x4xbf16>
    %100 = vector.shape_cast %99 : vector<1x8x8x4xbf16> to vector<8x8x4xbf16>
    %101 = arith.extf %100 : vector<8x8x4xbf16> to vector<8x8x4xf32>
    %102 = vector.shape_cast %101 : vector<8x8x4xf32> to vector<64x4xf32>
    %103 = arith.truncf %102 : vector<64x4xf32> to vector<64x4xbf16>
    %c0_91 = arith.constant 0 : index
    %c0_92 = arith.constant 0 : index
    %104 = vector.load %arg5[%c0_91, %c0_92] : memref<4x8xbf16, #tpu.memory_space<vmem>>, vector<4x8xbf16>
    %cst_93 = arith.constant dense<0.000000e+00> : vector<64x8xf32>
    %105 = tpu.matmul %103, %104, %cst_93 {dimension_numbers = #tpu.dot_dimension_numbers<[1], [0], [0], [1], [0, 0, 1, 1], [], []>} : vector<64x4xbf16>, vector<4x8xbf16>, vector<64x8xf32> -> vector<64x8xf32>
    %106 = arith.truncf %105 : vector<64x8xf32> to vector<64x8xbf16>
    %c0_94 = arith.constant 0 : index
    %c0_95 = arith.constant 0 : index
    %c0_96 = arith.constant 0 : index
    %107 = vector.load %arg8[%c0_94, %c0_95, %c0_96] : memref<1x64x8xbf16, #tpu.memory_space<vmem>>, vector<1x64x8xbf16>
    %108 = vector.shape_cast %107 : vector<1x64x8xbf16> to vector<64x8xbf16>
    %109 = vector.shape_cast %106 : vector<64x8xbf16> to vector<1x64x8xbf16>
    tpu.vector_store %arg8[%c0_94, %c0_95, %c0_96], %109 {strides = array<i32>} : memref<1x64x8xbf16, #tpu.memory_space<vmem>>, vector<1x64x8xbf16>,
    %cst_97 = arith.constant dense<0.000000e+00> : vector<8xf32>
    %110 = vector.multi_reduction <add>, %105, %cst_97 [0] : vector<64x8xf32> to vector<8xf32>
    %111 = vector.shape_cast %110 : vector<8xf32> to vector<1x8xf32>
    %112 = arith.mulf %105, %105 : vector<64x8xf32>
    %cst_98 = arith.constant dense<0.000000e+00> : vector<8xf32>
    %113 = vector.multi_reduction <add>, %112, %cst_98 [0] : vector<64x8xf32> to vector<8xf32>
    %114 = vector.shape_cast %113 : vector<8xf32> to vector<1x8xf32>
    %115 = tpu.concatenate %111, %114 in 0 : vector<1x8xf32>, vector<1x8xf32> -> vector<2x8xf32>
    %c0_99 = arith.constant 0 : index
    %c0_100 = arith.constant 0 : index
    %c0_101 = arith.constant 0 : index
    %116 = vector.load %arg9[%c0_99, %c0_100, %c0_101] : memref<1x2x8xf32, #tpu.memory_space<vmem>>, vector<1x2x8xf32>
    %117 = vector.shape_cast %116 : vector<1x2x8xf32> to vector<2x8xf32>
    %118 = vector.shape_cast %115 : vector<2x8xf32> to vector<1x2x8xf32>
    tpu.vector_store %arg9[%c0_99, %c0_100, %c0_101], %118 {strides = array<i32>} : memref<1x2x8xf32, #tpu.memory_space<vmem>>, vector<1x2x8xf32>,
    return
  }
  func.func @transform_0(%arg0: i32) -> (i32, i32, i32, i32) {
    %c0_i32 = arith.constant 0 : i32
    %c0_i32_0 = arith.constant 0 : i32
    %c0_i32_1 = arith.constant 0 : i32
    %c0_i32_2 = arith.constant 0 : i32
    return %arg0, %c0_i32, %c0_i32_0, %c0_i32_1 : i32, i32, i32, i32
  }
  func.func @transform_1(%arg0: i32) -> (i32, i32) {
    %c0_i32 = arith.constant 0 : i32
    %c0_i32_0 = arith.constant 0 : i32
    %c0_i32_1 = arith.constant 0 : i32
    return %c0_i32, %c0_i32_0 : i32, i32
  }
  func.func @transform_2(%arg0: i32) -> (i32, i32) {
    %c0_i32 = arith.constant 0 : i32
    %c0_i32_0 = arith.constant 0 : i32
    %c0_i32_1 = arith.constant 0 : i32
    return %c0_i32, %c0_i32_0 : i32, i32
  }
  func.func @transform_3(%arg0: i32) -> (i32, i32) {
    %c0_i32 = arith.constant 0 : i32
    %c0_i32_0 = arith.constant 0 : i32
    %c0_i32_1 = arith.constant 0 : i32
    return %c0_i32, %c0_i32_0 : i32, i32
  }
  func.func @transform_4(%arg0: i32) -> (i32, i32) {
    %c0_i32 = arith.constant 0 : i32
    %c0_i32_0 = arith.constant 0 : i32
    %c0_i32_1 = arith.constant 0 : i32
    return %c0_i32, %c0_i32_0 : i32, i32
  }
  func.func @transform_5(%arg0: i32) -> (i32, i32, i32) {
    %c0_i32 = arith.constant 0 : i32
    %c0_i32_0 = arith.constant 0 : i32
    %c0_i32_1 = arith.constant 0 : i32
    return %arg0, %c0_i32, %c0_i32_0 : i32, i32, i32
  }
  func.func @transform_6(%arg0: i32) -> (i32, i32, i32) {
    %c0_i32 = arith.constant 0 : i32
    %c0_i32_0 = arith.constant 0 : i32
    %c0_i32_1 = arith.constant 0 : i32
    return %arg0, %c0_i32, %c0_i32_0 : i32, i32, i32
  }
  func.func @transform_7(%arg0: i32) -> (i32, i32, i32) {
    %c0_i32 = arith.constant 0 : i32
    %c0_i32_0 = arith.constant 0 : i32
    %c0_i32_1 = arith.constant 0 : i32
    return %arg0, %c0_i32, %c0_i32_0 : i32, i32, i32
  }
  func.func @transform_8(%arg0: i32) -> (i32, i32, i32) {
    %c0_i32 = arith.constant 0 : i32
    %c0_i32_0 = arith.constant 0 : i32
    %c0_i32_1 = arith.constant 0 : i32
    return %arg0, %c0_i32, %c0_i32_0 : i32, i32, i32
  }
}

module attributes {stable_mosaic.version = 11 : i64} {
  func.func @kernel(%arg0: i32, %arg1: memref<128x8xbf16, #tpu.memory_space<vmem>>, %arg2: memref<1x8xf32, #tpu.memory_space<vmem>>, %arg3: memref<1x8xf32, #tpu.memory_space<vmem>>, %arg4: memref<8x8xbf16, #tpu.memory_space<vmem>>, %arg5: memref<128x8xf32, #tpu.memory_space<vmem>>, %arg6: memref<2x8xf32, #tpu.memory_space<vmem>>) attributes {dimension_semantics = [#tpu.dimension_semantics<arbitrary>], iteration_bounds = array<i64: 1>, scalar_prefetch = 0 : i64, scratch_operands = 0 : i64, tpu.core_type = #tpu.core_type<tc>, window_params = [{transform_indices = @transform_0, window_bounds = array<i64: 128, 8>}, {pipeline_mode = #tpu.pipeline_mode<synchronous>, transform_indices = @transform_1, window_bounds = array<i64: 1, 8>}, {pipeline_mode = #tpu.pipeline_mode<synchronous>, transform_indices = @transform_2, window_bounds = array<i64: 1, 8>}, {pipeline_mode = #tpu.pipeline_mode<synchronous>, transform_indices = @transform_3, window_bounds = array<i64: 8, 8>}, {transform_indices = @transform_4, window_bounds = array<i64: 128, 8>}, {pipeline_mode = #tpu.pipeline_mode<synchronous>, transform_indices = @transform_5, window_bounds = array<i64: 2, 8>}]} {
    %c0_i32 = arith.constant 0 : i32
    %0 = arith.cmpi eq, %arg0, %c0_i32 : i32
    %1 = arith.extui %0 : i1 to i32
    %c0_i32_0 = arith.constant 0 : i32
    %2 = arith.cmpi ne, %1, %c0_i32_0 : i32
    scf.if %2 {
      %cst_17 = arith.constant 0.000000e+00 : f32
      %26 = vector.broadcast %cst_17 : f32 to vector<2x8xf32>
      %c0_18 = arith.constant 0 : index
      %c0_19 = arith.constant 0 : index
      %27 = vector.load %arg6[%c0_18, %c0_19] : memref<2x8xf32, #tpu.memory_space<vmem>>, vector<2x8xf32>
      tpu.vector_store %arg6[%c0_18, %c0_19], %26 {strides = array<i32>} : memref<2x8xf32, #tpu.memory_space<vmem>>, vector<2x8xf32>,
    } else {
    }
    %c0 = arith.constant 0 : index
    %c0_1 = arith.constant 0 : index
    %3 = vector.load %arg1[%c0, %c0_1] : memref<128x8xbf16, #tpu.memory_space<vmem>>, vector<128x8xbf16>
    %4 = arith.extf %3 : vector<128x8xbf16> to vector<128x8xf32>
    %c0_2 = arith.constant 0 : index
    %c0_3 = arith.constant 0 : index
    %5 = vector.load %arg2[%c0_2, %c0_3] : memref<1x8xf32, #tpu.memory_space<vmem>>, vector<1x8xf32>
    %6 = vector.broadcast %5 : vector<1x8xf32> to vector<128x8xf32>
    %7 = arith.mulf %4, %6 : vector<128x8xf32>
    %c0_4 = arith.constant 0 : index
    %c0_5 = arith.constant 0 : index
    %8 = vector.load %arg3[%c0_4, %c0_5] : memref<1x8xf32, #tpu.memory_space<vmem>>, vector<1x8xf32>
    %9 = vector.broadcast %8 : vector<1x8xf32> to vector<128x8xf32>
    %10 = arith.addf %7, %9 : vector<128x8xf32>
    %cst = arith.constant 0.000000e+00 : f32
    %11 = vector.broadcast %cst : f32 to vector<128x8xf32>
    %12 = arith.maximumf %10, %11 : vector<128x8xf32>
    %13 = arith.truncf %12 : vector<128x8xf32> to vector<128x8xbf16>
    %c0_6 = arith.constant 0 : index
    %c0_7 = arith.constant 0 : index
    %14 = vector.load %arg4[%c0_6, %c0_7] : memref<8x8xbf16, #tpu.memory_space<vmem>>, vector<8x8xbf16>
    %cst_8 = arith.constant dense<0.000000e+00> : vector<128x8xf32>
    %15 = tpu.matmul %13, %14, %cst_8 {dimension_numbers = #tpu.dot_dimension_numbers<[1], [0], [0], [1], [0, 0, 1, 1], [], []>} : vector<128x8xbf16>, vector<8x8xbf16>, vector<128x8xf32> -> vector<128x8xf32>
    %c0_9 = arith.constant 0 : index
    %c0_10 = arith.constant 0 : index
    %16 = vector.load %arg5[%c0_9, %c0_10] : memref<128x8xf32, #tpu.memory_space<vmem>>, vector<128x8xf32>
    tpu.vector_store %arg5[%c0_9, %c0_10], %15 {strides = array<i32>} : memref<128x8xf32, #tpu.memory_space<vmem>>, vector<128x8xf32>,
    %c0_11 = arith.constant 0 : index
    %c0_12 = arith.constant 0 : index
    %17 = vector.load %arg6[%c0_11, %c0_12] : memref<2x8xf32, #tpu.memory_space<vmem>>, vector<2x8xf32>
    %cst_13 = arith.constant dense<0.000000e+00> : vector<8xf32>
    %18 = vector.multi_reduction <add>, %15, %cst_13 [0] : vector<128x8xf32> to vector<8xf32>
    %19 = vector.shape_cast %18 : vector<8xf32> to vector<1x8xf32>
    %20 = arith.mulf %15, %15 : vector<128x8xf32>
    %cst_14 = arith.constant dense<0.000000e+00> : vector<8xf32>
    %21 = vector.multi_reduction <add>, %20, %cst_14 [0] : vector<128x8xf32> to vector<8xf32>
    %22 = vector.shape_cast %21 : vector<8xf32> to vector<1x8xf32>
    %23 = tpu.concatenate %19, %22 in 0 : vector<1x8xf32>, vector<1x8xf32> -> vector<2x8xf32>
    %24 = arith.addf %17, %23 : vector<2x8xf32>
    %c0_15 = arith.constant 0 : index
    %c0_16 = arith.constant 0 : index
    %25 = vector.load %arg6[%c0_15, %c0_16] : memref<2x8xf32, #tpu.memory_space<vmem>>, vector<2x8xf32>
    tpu.vector_store %arg6[%c0_15, %c0_16], %24 {strides = array<i32>} : memref<2x8xf32, #tpu.memory_space<vmem>>, vector<2x8xf32>,
    return
  }
  func.func @transform_0(%arg0: i32) -> (i32, i32) {
    %c0_i32 = arith.constant 0 : i32
    %c0_i32_0 = arith.constant 0 : i32
    return %arg0, %c0_i32 : i32, i32
  }
  func.func @transform_1(%arg0: i32) -> (i32, i32) {
    %c0_i32 = arith.constant 0 : i32
    %c0_i32_0 = arith.constant 0 : i32
    %c0_i32_1 = arith.constant 0 : i32
    return %c0_i32, %c0_i32_0 : i32, i32
  }
  func.func @transform_2(%arg0: i32) -> (i32, i32) {
    %c0_i32 = arith.constant 0 : i32
    %c0_i32_0 = arith.constant 0 : i32
    %c0_i32_1 = arith.constant 0 : i32
    return %c0_i32, %c0_i32_0 : i32, i32
  }
  func.func @transform_3(%arg0: i32) -> (i32, i32) {
    %c0_i32 = arith.constant 0 : i32
    %c0_i32_0 = arith.constant 0 : i32
    %c0_i32_1 = arith.constant 0 : i32
    return %c0_i32, %c0_i32_0 : i32, i32
  }
  func.func @transform_4(%arg0: i32) -> (i32, i32) {
    %c0_i32 = arith.constant 0 : i32
    %c0_i32_0 = arith.constant 0 : i32
    return %arg0, %c0_i32 : i32, i32
  }
  func.func @transform_5(%arg0: i32) -> (i32, i32) {
    %c0_i32 = arith.constant 0 : i32
    %c0_i32_0 = arith.constant 0 : i32
    %c0_i32_1 = arith.constant 0 : i32
    return %c0_i32, %c0_i32_0 : i32, i32
  }
}

module attributes {stable_mosaic.version = 11 : i64} {
  func.func @kernel(%arg0: i32, %arg1: memref<128x8xf32, #tpu.memory_space<vmem>>, %arg2: memref<1x8xf32, #tpu.memory_space<vmem>>, %arg3: memref<1x8xf32, #tpu.memory_space<vmem>>, %arg4: memref<128x8xbf16, #tpu.memory_space<vmem>>, %arg5: memref<1x8xf32, #tpu.memory_space<vmem>>, %arg6: memref<1x8xf32, #tpu.memory_space<vmem>>, %arg7: memref<128x8xf32, #tpu.memory_space<vmem>>) attributes {dimension_semantics = [#tpu.dimension_semantics<parallel>], iteration_bounds = array<i64: 1>, scalar_prefetch = 0 : i64, scratch_operands = 0 : i64, tpu.core_type = #tpu.core_type<tc>, window_params = [{transform_indices = @transform_0, window_bounds = array<i64: 128, 8>}, {pipeline_mode = #tpu.pipeline_mode<synchronous>, transform_indices = @transform_1, window_bounds = array<i64: 1, 8>}, {pipeline_mode = #tpu.pipeline_mode<synchronous>, transform_indices = @transform_2, window_bounds = array<i64: 1, 8>}, {transform_indices = @transform_3, window_bounds = array<i64: 128, 8>}, {pipeline_mode = #tpu.pipeline_mode<synchronous>, transform_indices = @transform_4, window_bounds = array<i64: 1, 8>}, {pipeline_mode = #tpu.pipeline_mode<synchronous>, transform_indices = @transform_5, window_bounds = array<i64: 1, 8>}, {transform_indices = @transform_6, window_bounds = array<i64: 128, 8>}]} {
    %c0 = arith.constant 0 : index
    %c0_0 = arith.constant 0 : index
    %0 = vector.load %arg4[%c0, %c0_0] : memref<128x8xbf16, #tpu.memory_space<vmem>>, vector<128x8xbf16>
    %1 = arith.extf %0 : vector<128x8xbf16> to vector<128x8xf32>
    %c0_1 = arith.constant 0 : index
    %c0_2 = arith.constant 0 : index
    %2 = vector.load %arg5[%c0_1, %c0_2] : memref<1x8xf32, #tpu.memory_space<vmem>>, vector<1x8xf32>
    %3 = vector.broadcast %2 : vector<1x8xf32> to vector<128x8xf32>
    %4 = arith.mulf %1, %3 : vector<128x8xf32>
    %c0_3 = arith.constant 0 : index
    %c0_4 = arith.constant 0 : index
    %5 = vector.load %arg6[%c0_3, %c0_4] : memref<1x8xf32, #tpu.memory_space<vmem>>, vector<1x8xf32>
    %6 = vector.broadcast %5 : vector<1x8xf32> to vector<128x8xf32>
    %7 = arith.addf %4, %6 : vector<128x8xf32>
    %c0_5 = arith.constant 0 : index
    %c0_6 = arith.constant 0 : index
    %8 = vector.load %arg1[%c0_5, %c0_6] : memref<128x8xf32, #tpu.memory_space<vmem>>, vector<128x8xf32>
    %c0_7 = arith.constant 0 : index
    %c0_8 = arith.constant 0 : index
    %9 = vector.load %arg2[%c0_7, %c0_8] : memref<1x8xf32, #tpu.memory_space<vmem>>, vector<1x8xf32>
    %10 = vector.broadcast %9 : vector<1x8xf32> to vector<128x8xf32>
    %11 = arith.mulf %8, %10 : vector<128x8xf32>
    %c0_9 = arith.constant 0 : index
    %c0_10 = arith.constant 0 : index
    %12 = vector.load %arg3[%c0_9, %c0_10] : memref<1x8xf32, #tpu.memory_space<vmem>>, vector<1x8xf32>
    %13 = vector.broadcast %12 : vector<1x8xf32> to vector<128x8xf32>
    %14 = arith.addf %11, %13 : vector<128x8xf32>
    %15 = arith.addf %14, %7 : vector<128x8xf32>
    %c0_11 = arith.constant 0 : index
    %c0_12 = arith.constant 0 : index
    %16 = vector.load %arg7[%c0_11, %c0_12] : memref<128x8xf32, #tpu.memory_space<vmem>>, vector<128x8xf32>
    tpu.vector_store %arg7[%c0_11, %c0_12], %15 {strides = array<i32>} : memref<128x8xf32, #tpu.memory_space<vmem>>, vector<128x8xf32>,
    return
  }
  func.func @transform_0(%arg0: i32) -> (i32, i32) {
    %c0_i32 = arith.constant 0 : i32
    %c0_i32_0 = arith.constant 0 : i32
    return %arg0, %c0_i32 : i32, i32
  }
  func.func @transform_1(%arg0: i32) -> (i32, i32) {
    %c0_i32 = arith.constant 0 : i32
    %c0_i32_0 = arith.constant 0 : i32
    %c0_i32_1 = arith.constant 0 : i32
    return %c0_i32, %c0_i32_0 : i32, i32
  }
  func.func @transform_2(%arg0: i32) -> (i32, i32) {
    %c0_i32 = arith.constant 0 : i32
    %c0_i32_0 = arith.constant 0 : i32
    %c0_i32_1 = arith.constant 0 : i32
    return %c0_i32, %c0_i32_0 : i32, i32
  }
  func.func @transform_3(%arg0: i32) -> (i32, i32) {
    %c0_i32 = arith.constant 0 : i32
    %c0_i32_0 = arith.constant 0 : i32
    return %arg0, %c0_i32 : i32, i32
  }
  func.func @transform_4(%arg0: i32) -> (i32, i32) {
    %c0_i32 = arith.constant 0 : i32
    %c0_i32_0 = arith.constant 0 : i32
    %c0_i32_1 = arith.constant 0 : i32
    return %c0_i32, %c0_i32_0 : i32, i32
  }
  func.func @transform_5(%arg0: i32) -> (i32, i32) {
    %c0_i32 = arith.constant 0 : i32
    %c0_i32_0 = arith.constant 0 : i32
    %c0_i32_1 = arith.constant 0 : i32
    return %c0_i32, %c0_i32_0 : i32, i32
  }
  func.func @transform_6(%arg0: i32) -> (i32, i32) {
    %c0_i32 = arith.constant 0 : i32
    %c0_i32_0 = arith.constant 0 : i32
    return %arg0, %c0_i32 : i32, i32
  }
}

</mosaic_0001>

<llo_original>
// kernel: resblock_forward.4
$region0: #{resblock_forward.4}
  #allocation0 [shape = 'u32[]', space=smem, size = 0x4, offset = 0x4, fixed_abs, tag = 'smem constant byte address 0x4 - core index']
  #allocation1 [shape = 'u32[144,128]{1,0:T(1,128)}', space=vmem, size = 0x12000, scoped, tag = 'internal scratch']
  %s0 = inlined_call_operand.vmem [shape: f32[512,4], index: 0, kind: input, shape index: {}]
  %s1 = inlined_call_operand.vmem [shape: f32[2,4], index: 1, kind: output, shape index: {}]
  %s2 = sld [smem:[#allocation0]]
  $region18: #{resblock_forward.4} parent=0
    _
  %s4 = ssub.s32 1, %s2
  %s5 = scalar_select 0, %s4, %s2
  // Predicated region
  $region2: #{resblock_forward.4} parent=0 // pred_check
    _
  $region3: #{resblock_forward.4} parent=0 // pred_check_branch
    %7 = sbr.rel (0) target = $region5
  $region4: #{resblock_forward.4} parent=0 // pred_region
    _
  $region5: #{resblock_forward.4} parent=0 // pred_fallthru
    _
  %p8 = scmp.eq.s32.totalorder 0, 0
  // Predicated region
  $region6: #{resblock_forward.4} parent=0 // pred_check
    %p9 = pneg %p8
  $region7: #{resblock_forward.4} parent=0 // pred_check_branch
    %11 = sbr.rel (%p9) target = $region9
  $region8: #{resblock_forward.4} parent=0 // pred_region
    %vm12 = vcmask 25600
    %13 = vst.msk [vmem:[%s1] sm:$0x3] %vm12, 0.0
  $region9: #{resblock_forward.4} parent=0 // pred_fallthru
    _
  %v14 = vld [vmem:[%s0] sm:$0xff]
  %v15 = vld [vmem:[%s0 + $0x8] sm:$0xff]
  %v16 = vld [vmem:[%s0 + $0x10] sm:$0xff]
  %v17 = vld [vmem:[%s0 + $0x18] sm:$0xff]
  %v18 = vld [vmem:[%s0 + $0x20] sm:$0xff]
  %v19 = vld [vmem:[%s0 + $0x28] sm:$0xff]
  %v20 = vld [vmem:[%s0 + $0x30] sm:$0xff]
  %v21 = vld [vmem:[%s0 + $0x38] sm:$0xff]
  %v22 = vld [vmem:[%s0 + $0x40] sm:$0xff]
  %v23 = vld [vmem:[%s0 + $0x48] sm:$0xff]
  %v24 = vld [vmem:[%s0 + $0x50] sm:$0xff]
  %v25 = vld [vmem:[%s0 + $0x58] sm:$0xff]
  %v26 = vld [vmem:[%s0 + $0x60] sm:$0xff]
  %v27 = vld [vmem:[%s0 + $0x68] sm:$0xff]
  %v28 = vld [vmem:[%s0 + $0x70] sm:$0xff]
  %v29 = vld [vmem:[%s0 + $0x78] sm:$0xff]
  %v30 = vld [vmem:[%s0 + $0x80] sm:$0xff]
  %v31 = vld [vmem:[%s0 + $0x88] sm:$0xff]
  %v32 = vld [vmem:[%s0 + $0x90] sm:$0xff]
  %v33 = vld [vmem:[%s0 + $0x98] sm:$0xff]
  %v34 = vld [vmem:[%s0 + $0xa0] sm:$0xff]
  %v35 = vld [vmem:[%s0 + $0xa8] sm:$0xff]
  %v36 = vld [vmem:[%s0 + $0xb0] sm:$0xff]
  %v37 = vld [vmem:[%s0 + $0xb8] sm:$0xff]
  %v38 = vld [vmem:[%s0 + $0xc0] sm:$0xff]
  %v39 = vld [vmem:[%s0 + $0xc8] sm:$0xff]
  %v40 = vld [vmem:[%s0 + $0xd0] sm:$0xff]
  %v41 = vld [vmem:[%s0 + $0xd8] sm:$0xff]
  %v42 = vld [vmem:[%s0 + $0xe0] sm:$0xff]
  %v43 = vld [vmem:[%s0 + $0xe8] sm:$0xff]
  %v44 = vld [vmem:[%s0 + $0xf0] sm:$0xff]
  %v45 = vld [vmem:[%s0 + $0xf8] sm:$0xff]
  %v46 = vld [vmem:[%s0 + $0x100] sm:$0xff]
  %v47 = vld [vmem:[%s0 + $0x108] sm:$0xff]
  %v48 = vld [vmem:[%s0 + $0x110] sm:$0xff]
  %v49 = vld [vmem:[%s0 + $0x118] sm:$0xff]
  %v50 = vld [vmem:[%s0 + $0x120] sm:$0xff]
  %v51 = vld [vmem:[%s0 + $0x128] sm:$0xff]
  %v52 = vld [vmem:[%s0 + $0x130] sm:$0xff]
  %v53 = vld [vmem:[%s0 + $0x138] sm:$0xff]
  %v54 = vld [vmem:[%s0 + $0x140] sm:$0xff]
  %v55 = vld [vmem:[%s0 + $0x148] sm:$0xff]
  %v56 = vld [vmem:[%s0 + $0x150] sm:$0xff]
  %v57 = vld [vmem:[%s0 + $0x158] sm:$0xff]
  %v58 = vld [vmem:[%s0 + $0x160] sm:$0xff]
  %v59 = vld [vmem:[%s0 + $0x168] sm:$0xff]
  %v60 = vld [vmem:[%s0 + $0x170] sm:$0xff]
  %v61 = vld [vmem:[%s0 + $0x178] sm:$0xff]
  %v62 = vld [vmem:[%s0 + $0x180] sm:$0xff]
  %v63 = vld [vmem:[%s0 + $0x188] sm:$0xff]
  %v64 = vld [vmem:[%s0 + $0x190] sm:$0xff]
  %v65 = vld [vmem:[%s0 + $0x198] sm:$0xff]
  %v66 = vld [vmem:[%s0 + $0x1a0] sm:$0xff]
  %v67 = vld [vmem:[%s0 + $0x1a8] sm:$0xff]
  %v68 = vld [vmem:[%s0 + $0x1b0] sm:$0xff]
  %v69 = vld [vmem:[%s0 + $0x1b8] sm:$0xff]
  %v70 = vld [vmem:[%s0 + $0x1c0] sm:$0xff]
  %v71 = vld [vmem:[%s0 + $0x1c8] sm:$0xff]
  %v72 = vld [vmem:[%s0 + $0x1d0] sm:$0xff]
  %v73 = vld [vmem:[%s0 + $0x1d8] sm:$0xff]
  %v74 = vld [vmem:[%s0 + $0x1e0] sm:$0xff]
  %v75 = vld [vmem:[%s0 + $0x1e8] sm:$0xff]
  %v76 = vld [vmem:[%s0 + $0x1f0] sm:$0xff]
  %v77 = vld [vmem:[%s0 + $0x1f8] sm:$0xff]
  %v78 = vld [vmem:[%s1] sm:$0x3]
  %vm79 = vcmask 31744
  %v80 = vsel %vm79, %v14, 0.0
  %v81 = vsel %vm79, %v15, 0.0
  %v82 = vadd.f32 %v80, %v81
  %v83 = vsel %vm79, %v16, 0.0
  %v84 = vadd.f32 %v82, %v83
  %v85 = vsel %vm79, %v17, 0.0
  %v86 = vadd.f32 %v84, %v85
  %v87 = vsel %vm79, %v18, 0.0
  %v88 = vadd.f32 %v86, %v87
  %v89 = vsel %vm79, %v19, 0.0
  %v90 = vadd.f32 %v88, %v89
  %v91 = vsel %vm79, %v20, 0.0
  %v92 = vadd.f32 %v90, %v91
  %v93 = vsel %vm79, %v21, 0.0
  %v94 = vadd.f32 %v92, %v93
  %v95 = vsel %vm79, %v22, 0.0
  %v96 = vadd.f32 %v94, %v95
  %v97 = vsel %vm79, %v23, 0.0
  %v98 = vadd.f32 %v96, %v97
  %v99 = vsel %vm79, %v24, 0.0
  %v100 = vadd.f32 %v98, %v99
  %v101 = vsel %vm79, %v25, 0.0
  %v102 = vadd.f32 %v100, %v101
  %v103 = vsel %vm79, %v26, 0.0
  %v104 = vadd.f32 %v102, %v103
  %v105 = vsel %vm79, %v27, 0.0
  %v106 = vadd.f32 %v104, %v105
  %v107 = vsel %vm79, %v28, 0.0
  %v108 = vadd.f32 %v106, %v107
  %v109 = vsel %vm79, %v29, 0.0
  %v110 = vadd.f32 %v108, %v109
  %v111 = vsel %vm79, %v30, 0.0
  %v112 = vadd.f32 %v110, %v111
  %v113 = vsel %vm79, %v31, 0.0
  %v114 = vadd.f32 %v112, %v113
  %v115 = vsel %vm79, %v32, 0.0
  %v116 = vadd.f32 %v114, %v115
  %v117 = vsel %vm79, %v33, 0.0
  %v118 = vadd.f32 %v116, %v117
  %v119 = vsel %vm79, %v34, 0.0
  %v120 = vadd.f32 %v118, %v119
  %v121 = vsel %vm79, %v35, 0.0
  %v122 = vadd.f32 %v120, %v121
  %v123 = vsel %vm79, %v36, 0.0
  %v124 = vadd.f32 %v122, %v123
  %v125 = vsel %vm79, %v37, 0.0
  %v126 = vadd.f32 %v124, %v125
  %v127 = vsel %vm79, %v38, 0.0
  %v128 = vadd.f32 %v126, %v127
  %v129 = vsel %vm79, %v39, 0.0
  %v130 = vadd.f32 %v128, %v129
  %v131 = vsel %vm79, %v40, 0.0
  %v132 = vadd.f32 %v130, %v131
  %v133 = vsel %vm79, %v41, 0.0
  %v134 = vadd.f32 %v132, %v133
  %v135 = vsel %vm79, %v42, 0.0
  %v136 = vadd.f32 %v134, %v135
  %v137 = vsel %vm79, %v43, 0.0
  %v138 = vadd.f32 %v136, %v137
  %v139 = vsel %vm79, %v44, 0.0
  %v140 = vadd.f32 %v138, %v139
  %v141 = vsel %vm79, %v45, 0.0
  %v142 = vadd.f32 %v140, %v141
  %v143 = vsel %vm79, %v46, 0.0
  %v144 = vadd.f32 %v142, %v143
  %v145 = vsel %vm79, %v47, 0.0
  %v146 = vadd.f32 %v144, %v145
  %v147 = vsel %vm79, %v48, 0.0
  %v148 = vadd.f32 %v146, %v147
  %v149 = vsel %vm79, %v49, 0.0
  %v150 = vadd.f32 %v148, %v149
  %v151 = vsel %vm79, %v50, 0.0
  %v152 = vadd.f32 %v150, %v151
  %v153 = vsel %vm79, %v51, 0.0
  %v154 = vadd.f32 %v152, %v153
  %v155 = vsel %vm79, %v52, 0.0
  %v156 = vadd.f32 %v154, %v155
  %v157 = vsel %vm79, %v53, 0.0
  %v158 = vadd.f32 %v156, %v157
  %v159 = vsel %vm79, %v54, 0.0
  %v160 = vadd.f32 %v158, %v159
  %v161 = vsel %vm79, %v55, 0.0
  %v162 = vadd.f32 %v160, %v161
  %v163 = vsel %vm79, %v56, 0.0
  %v164 = vadd.f32 %v162, %v163
  %v165 = vsel %vm79, %v57, 0.0
  %v166 = vadd.f32 %v164, %v165
  %v167 = vsel %vm79, %v58, 0.0
  %v168 = vadd.f32 %v166, %v167
  %v169 = vsel %vm79, %v59, 0.0
  %v170 = vadd.f32 %v168, %v169
  %v171 = vsel %vm79, %v60, 0.0
  %v172 = vadd.f32 %v170, %v171
  %v173 = vsel %vm79, %v61, 0.0
  %v174 = vadd.f32 %v172, %v173
  %v175 = vsel %vm79, %v62, 0.0
  %v176 = vadd.f32 %v174, %v175
  %v177 = vsel %vm79, %v63, 0.0
  %v178 = vadd.f32 %v176, %v177
  %v179 = vsel %vm79, %v64, 0.0
  %v180 = vadd.f32 %v178, %v179
  %v181 = vsel %vm79, %v65, 0.0
  %v182 = vadd.f32 %v180, %v181
  %v183 = vsel %vm79, %v66, 0.0
  %v184 = vadd.f32 %v182, %v183
  %v185 = vsel %vm79, %v67, 0.0
  %v186 = vadd.f32 %v184, %v185
  %v187 = vsel %vm79, %v68, 0.0
  %v188 = vadd.f32 %v186, %v187
  %v189 = vsel %vm79, %v69, 0.0
  %v190 = vadd.f32 %v188, %v189
  %v191 = vsel %vm79, %v70, 0.0
  %v192 = vadd.f32 %v190, %v191
  %v193 = vsel %vm79, %v71, 0.0
  %v194 = vadd.f32 %v192, %v193
  %v195 = vsel %vm79, %v72, 0.0
  %v196 = vadd.f32 %v194, %v195
  %v197 = vsel %vm79, %v73, 0.0
  %v198 = vadd.f32 %v196, %v197
  %v199 = vsel %vm79, %v74, 0.0
  %v200 = vadd.f32 %v198, %v199
  %v201 = vsel %vm79, %v75, 0.0
  %v202 = vadd.f32 %v200, %v201
  %v203 = vsel %vm79, %v76, 0.0
  %v204 = vadd.f32 %v202, %v203
  %v205 = vsel %vm79, %v77, 0.0
  %v206 = vadd.f32 %v204, %v205
  %v207 = vrot.slane %v206, 4
  %v208 = vadd.f32 %v206, %v207
  %v209 = vrot.slane %v208, 2
  %v210 = vadd.f32 %v208, %v209
  %v211 = vrot.slane %v210, 1
  %v212 = vadd.f32 %v210, %v211
  %v213 = vmul.f32 %v14, %v14
  %v214 = vmul.f32 %v15, %v15
  %v215 = vmul.f32 %v16, %v16
  %v216 = vmul.f32 %v17, %v17
  %v217 = vmul.f32 %v18, %v18
  %v218 = vmul.f32 %v19, %v19
  %v219 = vmul.f32 %v20, %v20
  %v220 = vmul.f32 %v21, %v21
  %v221 = vmul.f32 %v22, %v22
  %v222 = vmul.f32 %v23, %v23
  %v223 = vmul.f32 %v24, %v24
  %v224 = vmul.f32 %v25, %v25
  %v225 = vmul.f32 %v26, %v26
  %v226 = vmul.f32 %v27, %v27
  %v227 = vmul.f32 %v28, %v28
  %v228 = vmul.f32 %v29, %v29
  %v229 = vmul.f32 %v30, %v30
  %v230 = vmul.f32 %v31, %v31
  %v231 = vmul.f32 %v32, %v32
  %v232 = vmul.f32 %v33, %v33
  %v233 = vmul.f32 %v34, %v34
  %v234 = vmul.f32 %v35, %v35
  %v235 = vmul.f32 %v36, %v36
  %v236 = vmul.f32 %v37, %v37
  %v237 = vmul.f32 %v38, %v38
  %v238 = vmul.f32 %v39, %v39
  %v239 = vmul.f32 %v40, %v40
  %v240 = vmul.f32 %v41, %v41
  %v241 = vmul.f32 %v42, %v42
  %v242 = vmul.f32 %v43, %v43
  %v243 = vmul.f32 %v44, %v44
  %v244 = vmul.f32 %v45, %v45
  %v245 = vmul.f32 %v46, %v46
  %v246 = vmul.f32 %v47, %v47
  %v247 = vmul.f32 %v48, %v48
  %v248 = vmul.f32 %v49, %v49
  %v249 = vmul.f32 %v50, %v50
  %v250 = vmul.f32 %v51, %v51
  %v251 = vmul.f32 %v52, %v52
  %v252 = vmul.f32 %v53, %v53
  %v253 = vmul.f32 %v54, %v54
  %v254 = vmul.f32 %v55, %v55
  %v255 = vmul.f32 %v56, %v56
  %v256 = vmul.f32 %v57, %v57
  %v257 = vmul.f32 %v58, %v58
  %v258 = vmul.f32 %v59, %v59
  %v259 = vmul.f32 %v60, %v60
  %v260 = vmul.f32 %v61, %v61
  %v261 = vmul.f32 %v62, %v62
  %v262 = vmul.f32 %v63, %v63
  %v263 = vmul.f32 %v64, %v64
  %v264 = vmul.f32 %v65, %v65
  %v265 = vmul.f32 %v66, %v66
  %v266 = vmul.f32 %v67, %v67
  %v267 = vmul.f32 %v68, %v68
  %v268 = vmul.f32 %v69, %v69
  %v269 = vmul.f32 %v70, %v70
  %v270 = vmul.f32 %v71, %v71
  %v271 = vmul.f32 %v72, %v72
  %v272 = vmul.f32 %v73, %v73
  %v273 = vmul.f32 %v74, %v74
  %v274 = vmul.f32 %v75, %v75
  %v275 = vmul.f32 %v76, %v76
  %v276 = vmul.f32 %v77, %v77
  %v277 = vsel %vm79, %v213, 0.0
  %v278 = vsel %vm79, %v214, 0.0
  %v279 = vadd.f32 %v277, %v278
  %v280 = vsel %vm79, %v215, 0.0
  %v281 = vadd.f32 %v279, %v280
  %v282 = vsel %vm79, %v216, 0.0
  %v283 = vadd.f32 %v281, %v282
  %v284 = vsel %vm79, %v217, 0.0
  %v285 = vadd.f32 %v283, %v284
  %v286 = vsel %vm79, %v218, 0.0
  %v287 = vadd.f32 %v285, %v286
  %v288 = vsel %vm79, %v219, 0.0
  %v289 = vadd.f32 %v287, %v288
  %v290 = vsel %vm79, %v220, 0.0
  %v291 = vadd.f32 %v289, %v290
  %v292 = vsel %vm79, %v221, 0.0
  %v293 = vadd.f32 %v291, %v292
  %v294 = vsel %vm79, %v222, 0.0
  %v295 = vadd.f32 %v293, %v294
  %v296 = vsel %vm79, %v223, 0.0
  %v297 = vadd.f32 %v295, %v296
  %v298 = vsel %vm79, %v224, 0.0
  %v299 = vadd.f32 %v297, %v298
  %v300 = vsel %vm79, %v225, 0.0
  %v301 = vadd.f32 %v299, %v300
  %v302 = vsel %vm79, %v226, 0.0
  %v303 = vadd.f32 %v301, %v302
  %v304 = vsel %vm79, %v227, 0.0
  %v305 = vadd.f32 %v303, %v304
  %v306 = vsel %vm79, %v228, 0.0
  %v307 = vadd.f32 %v305, %v306
  %v308 = vsel %vm79, %v229, 0.0
  %v309 = vadd.f32 %v307, %v308
  %v310 = vsel %vm79, %v230, 0.0
  %v311 = vadd.f32 %v309, %v310
  %v312 = vsel %vm79, %v231, 0.0
  %v313 = vadd.f32 %v311, %v312
  %v314 = vsel %vm79, %v232, 0.0
  %v315 = vadd.f32 %v313, %v314
  %v316 = vsel %vm79, %v233, 0.0
  %v317 = vadd.f32 %v315, %v316
  %v318 = vsel %vm79, %v234, 0.0
  %v319 = vadd.f32 %v317, %v318
  %v320 = vsel %vm79, %v235, 0.0
  %v321 = vadd.f32 %v319, %v320
  %v322 = vsel %vm79, %v236, 0.0
  %v323 = vadd.f32 %v321, %v322
  %v324 = vsel %vm79, %v237, 0.0
  %v325 = vadd.f32 %v323, %v324
  %v326 = vsel %vm79, %v238, 0.0
  %v327 = vadd.f32 %v325, %v326
  %v328 = vsel %vm79, %v239, 0.0
  %v329 = vadd.f32 %v327, %v328
  %v330 = vsel %vm79, %v240, 0.0
  %v331 = vadd.f32 %v329, %v330
  %v332 = vsel %vm79, %v241, 0.0
  %v333 = vadd.f32 %v331, %v332
  %v334 = vsel %vm79, %v242, 0.0
  %v335 = vadd.f32 %v333, %v334
  %v336 = vsel %vm79, %v243, 0.0
  %v337 = vadd.f32 %v335, %v336
  %v338 = vsel %vm79, %v244, 0.0
  %v339 = vadd.f32 %v337, %v338
  %v340 = vsel %vm79, %v245, 0.0
  %v341 = vadd.f32 %v339, %v340
  %v342 = vsel %vm79, %v246, 0.0
  %v343 = vadd.f32 %v341, %v342
  %v344 = vsel %vm79, %v247, 0.0
  %v345 = vadd.f32 %v343, %v344
  %v346 = vsel %vm79, %v248, 0.0
  %v347 = vadd.f32 %v345, %v346
  %v348 = vsel %vm79, %v249, 0.0
  %v349 = vadd.f32 %v347, %v348
  %v350 = vsel %vm79, %v250, 0.0
  %v351 = vadd.f32 %v349, %v350
  %v352 = vsel %vm79, %v251, 0.0
  %v353 = vadd.f32 %v351, %v352
  %v354 = vsel %vm79, %v252, 0.0
  %v355 = vadd.f32 %v353, %v354
  %v356 = vsel %vm79, %v253, 0.0
  %v357 = vadd.f32 %v355, %v356
  %v358 = vsel %vm79, %v254, 0.0
  %v359 = vadd.f32 %v357, %v358
  %v360 = vsel %vm79, %v255, 0.0
  %v361 = vadd.f32 %v359, %v360
  %v362 = vsel %vm79, %v256, 0.0
  %v363 = vadd.f32 %v361, %v362
  %v364 = vsel %vm79, %v257, 0.0
  %v365 = vadd.f32 %v363, %v364
  %v366 = vsel %vm79, %v258, 0.0
  %v367 = vadd.f32 %v365, %v366
  %v368 = vsel %vm79, %v259, 0.0
  %v369 = vadd.f32 %v367, %v368
  %v370 = vsel %vm79, %v260, 0.0
  %v371 = vadd.f32 %v369, %v370
  %v372 = vsel %vm79, %v261, 0.0
  %v373 = vadd.f32 %v371, %v372
  %v374 = vsel %vm79, %v262, 0.0
  %v375 = vadd.f32 %v373, %v374
  %v376 = vsel %vm79, %v263, 0.0
  %v377 = vadd.f32 %v375, %v376
  %v378 = vsel %vm79, %v264, 0.0
  %v379 = vadd.f32 %v377, %v378
  %v380 = vsel %vm79, %v265, 0.0
  %v381 = vadd.f32 %v379, %v380
  %v382 = vsel %vm79, %v266, 0.0
  %v383 = vadd.f32 %v381, %v382
  %v384 = vsel %vm79, %v267, 0.0
  %v385 = vadd.f32 %v383, %v384
  %v386 = vsel %vm79, %v268, 0.0
  %v387 = vadd.f32 %v385, %v386
  %v388 = vsel %vm79, %v269, 0.0
  %v389 = vadd.f32 %v387, %v388
  %v390 = vsel %vm79, %v270, 0.0
  %v391 = vadd.f32 %v389, %v390
  %v392 = vsel %vm79, %v271, 0.0
  %v393 = vadd.f32 %v391, %v392
  %v394 = vsel %vm79, %v272, 0.0
  %v395 = vadd.f32 %v393, %v394
  %v396 = vsel %vm79, %v273, 0.0
  %v397 = vadd.f32 %v395, %v396
  %v398 = vsel %vm79, %v274, 0.0
  %v399 = vadd.f32 %v397, %v398
  %v400 = vsel %vm79, %v275, 0.0
  %v401 = vadd.f32 %v399, %v400
  %v402 = vsel %vm79, %v276, 0.0
  %v403 = vadd.f32 %v401, %v402
  %v404 = vrot.slane %v403, 4
  %v405 = vadd.f32 %v403, %v404
  %v406 = vrot.slane %v405, 2
  %v407 = vadd.f32 %v405, %v406
  %v408 = vrot.slane %v407, 1
  %v409 = vadd.f32 %v407, %v408
  %vm410 = vcmask 1040384
  %v411 = vsel %vm410, %v212, %v409
  %v412 = vadd.f32 %v78, %v411
  %vm413 = vcmask 25600
  %414 = vst.msk [vmem:[%s1] sm:$0x3] %vm413, %v412
  // Predicated region
  $region10: #{resblock_forward.4} parent=0 // pred_check
    _
  $region11: #{resblock_forward.4} parent=0 // pred_check_branch
    %416 = sbr.rel (0) target = $region13
  $region12: #{resblock_forward.4} parent=0 // pred_region
    _
  $region13: #{resblock_forward.4} parent=0 // pred_fallthru
    _
  // Predicated region
  $region14: #{resblock_forward.4} parent=0 // pred_check
    _
  $region15: #{resblock_forward.4} parent=0 // pred_check_branch
    %418 = sbr.rel (0) target = $region17
  $region16: #{resblock_forward.4} parent=0 // pred_region
    _
  $region17: #{resblock_forward.4} parent=0 // pred_fallthru
    _

// kernel: resblock_forward.6
$region0: #{resblock_forward.6}
  #allocation0 [shape = 'u32[]', space=smem, size = 0x4, offset = 0x4, fixed_abs, tag = 'smem constant byte address 0x4 - core index']
  #allocation1 [shape = 'u32[144,128]{1,0:T(1,128)}', space=vmem, size = 0x12000, scoped, tag = 'internal scratch']
  %s0 = inlined_call_operand.vmem [shape: bf16[128,8], index: 0, kind: input, shape index: {}]
  %s1 = inlined_call_operand.vmem [shape: f32[1,8], index: 1, kind: input, shape index: {}]
  %s2 = inlined_call_operand.vmem [shape: f32[1,8], index: 2, kind: input, shape index: {}]
  %s3 = inlined_call_operand.vmem [shape: bf16[8,8], index: 3, kind: input, shape index: {}]
  %s4 = inlined_call_operand.vmem [shape: f32[128,8], index: 4, kind: output, shape index: {0}]
  %s5 = inlined_call_operand.vmem [shape: f32[2,8], index: 5, kind: output, shape index: {1}]
  %6 = xla_tuple %s4, %s5
  %s7 = sld [smem:[#allocation0]]
  $region38: #{resblock_forward.6} parent=0
    _
  %s9 = ssub.s32 1, %s7
  %s10 = scalar_select 0, %s9, %s7
  // Predicated region
  $region2: #{resblock_forward.6} parent=0 // pred_check
    _
  $region3: #{resblock_forward.6} parent=0 // pred_check_branch
    %12 = sbr.rel (0) target = $region5
  $region4: #{resblock_forward.6} parent=0 // pred_region
    _
  $region5: #{resblock_forward.6} parent=0 // pred_fallthru
    _
  // Predicated region
  $region6: #{resblock_forward.6} parent=0 // pred_check
    _
  $region7: #{resblock_forward.6} parent=0 // pred_check_branch
    %14 = sbr.rel (0) target = $region9
  $region8: #{resblock_forward.6} parent=0 // pred_region
    _
  $region9: #{resblock_forward.6} parent=0 // pred_fallthru
    _
  // Predicated region
  $region10: #{resblock_forward.6} parent=0 // pred_check
    _
  $region11: #{resblock_forward.6} parent=0 // pred_check_branch
    %16 = sbr.rel (0) target = $region13
  $region12: #{resblock_forward.6} parent=0 // pred_region
    _
  $region13: #{resblock_forward.6} parent=0 // pred_fallthru
    _
  // Predicated region
  $region14: #{resblock_forward.6} parent=0 // pred_check
    _
  $region15: #{resblock_forward.6} parent=0 // pred_check_branch
    %18 = sbr.rel (0) target = $region17
  $region16: #{resblock_forward.6} parent=0 // pred_region
    _
  $region17: #{resblock_forward.6} parent=0 // pred_fallthru
    _
  %p20 = scmp.eq.s32.totalorder 0, 0
  // Predicated region
  $region18: #{resblock_forward.6} parent=0 // pred_check
    %p21 = pneg %p20
  $region19: #{resblock_forward.6} parent=0 // pred_check_branch
    %23 = sbr.rel (%p21) target = $region21
  $region20: #{resblock_forward.6} parent=0 // pred_region
    %vm24 = vcmask 58368
    %25 = vst.msk [vmem:[%s5] sm:$0x3] %vm24, 0.0
  $region21: #{resblock_forward.6} parent=0 // pred_fallthru
    _
  %v26 = vld [vmem:[%s0] sm:$0xf]
  %v27 = vld [vmem:[%s0 + $0x4] sm:$0xf]
  %v28 = vld [vmem:[%s0 + $0x8] sm:$0xf]
  %v29 = vld [vmem:[%s0 + $0xc] sm:$0xf]
  %v30 = vld [vmem:[%s0 + $0x10] sm:$0xf]
  %v31 = vld [vmem:[%s0 + $0x14] sm:$0xf]
  %v32 = vld [vmem:[%s0 + $0x18] sm:$0xf]
  %v33 = vld [vmem:[%s0 + $0x1c] sm:$0xf]
  %v34 = vld [vmem:[%s0 + $0x20] sm:$0xf]
  %v35 = vld [vmem:[%s0 + $0x24] sm:$0xf]
  %v36 = vld [vmem:[%s0 + $0x28] sm:$0xf]
  %v37 = vld [vmem:[%s0 + $0x2c] sm:$0xf]
  %v38 = vld [vmem:[%s0 + $0x30] sm:$0xf]
  %v39 = vld [vmem:[%s0 + $0x34] sm:$0xf]
  %v40 = vld [vmem:[%s0 + $0x38] sm:$0xf]
  %v41 = vld [vmem:[%s0 + $0x3c] sm:$0xf]
  %v42 = vunpack.c.l.bf16 %v26
  %v43 = vunpack.c.l.bf16 %v27
  %v44 = vunpack.c.l.bf16 %v28
  %v45 = vunpack.c.l.bf16 %v29
  %v46 = vunpack.c.l.bf16 %v30
  %v47 = vunpack.c.l.bf16 %v31
  %v48 = vunpack.c.l.bf16 %v32
  %v49 = vunpack.c.l.bf16 %v33
  %v50 = vunpack.c.l.bf16 %v34
  %v51 = vunpack.c.l.bf16 %v35
  %v52 = vunpack.c.l.bf16 %v36
  %v53 = vunpack.c.l.bf16 %v37
  %v54 = vunpack.c.l.bf16 %v38
  %v55 = vunpack.c.l.bf16 %v39
  %v56 = vunpack.c.l.bf16 %v40
  %v57 = vunpack.c.l.bf16 %v41
  %v58 = vld [vmem:[%s1] sm:$0x1]
  %v60 = vlaneseq
  %v61 = vshrl.u32 %v60, 7
  %v62 = vsub.s32 0, %v61
  %v63 = vrot.slane %v58, %v62
  %v65 = vmul.f32 %v42, %v63
  %v66 = vmul.f32 %v43, %v63
  %v67 = vmul.f32 %v44, %v63
  %v68 = vmul.f32 %v45, %v63
  %v69 = vmul.f32 %v46, %v63
  %v70 = vmul.f32 %v47, %v63
  %v71 = vmul.f32 %v48, %v63
  %v72 = vmul.f32 %v49, %v63
  %v73 = vmul.f32 %v50, %v63
  %v74 = vmul.f32 %v51, %v63
  %v75 = vmul.f32 %v52, %v63
  %v76 = vmul.f32 %v53, %v63
  %v77 = vmul.f32 %v54, %v63
  %v78 = vmul.f32 %v55, %v63
  %v79 = vmul.f32 %v56, %v63
  %v80 = vmul.f32 %v57, %v63
  %v81 = vld [vmem:[%s2] sm:$0x1]
  %v83 = vlaneseq
  %v84 = vshrl.u32 %v83, 7
  %v85 = vsub.s32 0, %v84
  %v86 = vrot.slane %v81, %v85
  %v88 = vadd.f32 %v65, %v86
  %v89 = vadd.f32 %v66, %v86
  %v90 = vadd.f32 %v67, %v86
  %v91 = vadd.f32 %v68, %v86
  %v92 = vadd.f32 %v69, %v86
  %v93 = vadd.f32 %v70, %v86
  %v94 = vadd.f32 %v71, %v86
  %v95 = vadd.f32 %v72, %v86
  %v96 = vadd.f32 %v73, %v86
  %v97 = vadd.f32 %v74, %v86
  %v98 = vadd.f32 %v75, %v86
  %v99 = vadd.f32 %v76, %v86
  %v100 = vadd.f32 %v77, %v86
  %v101 = vadd.f32 %v78, %v86
  %v102 = vadd.f32 %v79, %v86
  %v103 = vadd.f32 %v80, %v86
  %v104 = vmax.f32 %v88, 0.0
  %v105 = vmax.f32 %v89, 0.0
  %v106 = vmax.f32 %v90, 0.0
  %v107 = vmax.f32 %v91, 0.0
  %v108 = vmax.f32 %v92, 0.0
  %v109 = vmax.f32 %v93, 0.0
  %v110 = vmax.f32 %v94, 0.0
  %v111 = vmax.f32 %v95, 0.0
  %v112 = vmax.f32 %v96, 0.0
  %v113 = vmax.f32 %v97, 0.0
  %v114 = vmax.f32 %v98, 0.0
  %v115 = vmax.f32 %v99, 0.0
  %v116 = vmax.f32 %v100, 0.0
  %v117 = vmax.f32 %v101, 0.0
  %v118 = vmax.f32 %v102, 0.0
  %v119 = vmax.f32 %v103, 0.0
  %v120 = vpack.c.bf16 %v105, %v104
  %v121 = vpack.c.bf16 %v107, %v106
  %v122 = vpack.c.bf16 %v109, %v108
  %v123 = vpack.c.bf16 %v111, %v110
  %v124 = vpack.c.bf16 %v113, %v112
  %v125 = vpack.c.bf16 %v115, %v114
  %v126 = vpack.c.bf16 %v117, %v116
  %v127 = vpack.c.bf16 %v119, %v118
  %v128 = vld [vmem:[%s3] sm:$0xf]
  %vm129 = vcmask 64512
  %v131 = vsel %vm129, %v120, 0
  %v134 = vsel %vm129, %v121, 0
  %v137 = vsel %vm129, %v122, 0
  %v140 = vsel %vm129, %v123, 0
  %v143 = vsel %vm129, %v124, 0
  %v146 = vsel %vm129, %v125, 0
  %v149 = vsel %vm129, %v126, 0
  %v152 = vsel %vm129, %v127, 0
  %vm154 = vcmask 1043456
  %v156 = vsel %vm154, %v128, 0
  %158 = vmatprep.subr.bf16.mxu0 0
  %159 = vmatpush1.bf16.msra.mxu0 %v156
  %160 = vmatprep.subr.bf16.mxu0 0
  %161 = vmatpush1.bf16.msra.mxu0 0
  %162 = vmatprep.subr.bf16.mxu0 0
  %163 = vmatpush1.bf16.msra.mxu0 0
  %164 = vmatprep.subr.bf16.mxu0 0
  %165 = vmatpush1.bf16.msra.mxu0 0
  %166 = vmatprep.subr.bf16.mxu0 0
  %167 = vmatpush1.bf16.msra.mxu0 0
  %168 = vmatprep.subr.bf16.mxu0 0
  %169 = vmatpush1.bf16.msra.mxu0 0
  %170 = vmatprep.subr.bf16.mxu0 0
  %171 = vmatpush1.bf16.msra.mxu0 0
  %172 = vmatprep.subr.bf16.mxu0 0
  %173 = vmatpush1.bf16.msra.mxu0 0
  %174 = vmatprep.subr.bf16.mxu0 0
  %175 = vmatpush1.bf16.msra.mxu0 0
  %176 = vmatprep.subr.bf16.mxu0 0
  %177 = vmatpush1.bf16.msra.mxu0 0
  %178 = vmatprep.subr.bf16.mxu0 0
  %179 = vmatpush1.bf16.msra.mxu0 0
  %180 = vmatprep.subr.bf16.mxu0 0
  %181 = vmatpush1.bf16.msra.mxu0 0
  %182 = vmatprep.subr.bf16.mxu0 0
  %183 = vmatpush1.bf16.msra.mxu0 0
  %184 = vmatprep.subr.bf16.mxu0 0
  %185 = vmatpush1.bf16.msra.mxu0 0
  %186 = vmatprep.subr.bf16.mxu0 0
  %187 = vmatpush1.bf16.msra.mxu0 0
  %188 = vmatprep.subr.bf16.mxu0 0
  %189 = vmatpush1.bf16.msra.mxu0 0
  %190 = vmatprep.mubr.bf16.mxu0 0
  %191 = vmatmul.mubr.bf16.gmra.mrb[0].mxu0 %v131
  %v192 = vpop.f32.mrb[0].mxu0
  %v193 = vadd.f32 0.0, %v192
  %v194 = vpop.f32.mrb[0].mxu0
  %v195 = vpop.f32.mrb[0].mxu0
  %v196 = vadd.f32 0.0, %v195
  %v197 = vpop.f32.mrb[0].mxu0
  %198 = vmatprep.mubr.bf16.mxu0 0
  %199 = vmatmul.mubr.bf16.gmra.mrb[0].mxu0 %v134
  %v200 = vpop.f32.mrb[0].mxu0
  %v201 = vadd.f32 0.0, %v200
  %v202 = vpop.f32.mrb[0].mxu0
  %v203 = vpop.f32.mrb[0].mxu0
  %v204 = vadd.f32 0.0, %v203
  %v205 = vpop.f32.mrb[0].mxu0
  %206 = vmatprep.mubr.bf16.mxu0 0
  %207 = vmatmul.mubr.bf16.gmra.mrb[0].mxu0 %v137
  %v208 = vpop.f32.mrb[0].mxu0
  %v209 = vadd.f32 0.0, %v208
  %v210 = vpop.f32.mrb[0].mxu0
  %v211 = vpop.f32.mrb[0].mxu0
  %v212 = vadd.f32 0.0, %v211
  %v213 = vpop.f32.mrb[0].mxu0
  %214 = vmatprep.mubr.bf16.mxu0 0
  %215 = vmatmul.mubr.bf16.gmra.mrb[0].mxu0 %v140
  %v216 = vpop.f32.mrb[0].mxu0
  %v217 = vadd.f32 0.0, %v216
  %v218 = vpop.f32.mrb[0].mxu0
  %v219 = vpop.f32.mrb[0].mxu0
  %v220 = vadd.f32 0.0, %v219
  %v221 = vpop.f32.mrb[0].mxu0
  %222 = vmatprep.mubr.bf16.mxu0 0
  %223 = vmatmul.mubr.bf16.gmra.mrb[0].mxu0 %v143
  %v224 = vpop.f32.mrb[0].mxu0
  %v225 = vadd.f32 0.0, %v224
  %v226 = vpop.f32.mrb[0].mxu0
  %v227 = vpop.f32.mrb[0].mxu0
  %v228 = vadd.f32 0.0, %v227
  %v229 = vpop.f32.mrb[0].mxu0
  %230 = vmatprep.mubr.bf16.mxu0 0
  %231 = vmatmul.mubr.bf16.gmra.mrb[0].mxu0 %v146
  %v232 = vpop.f32.mrb[0].mxu0
  %v233 = vadd.f32 0.0, %v232
  %v234 = vpop.f32.mrb[0].mxu0
  %v235 = vpop.f32.mrb[0].mxu0
  %v236 = vadd.f32 0.0, %v235
  %v237 = vpop.f32.mrb[0].mxu0
  %238 = vmatprep.mubr.bf16.mxu0 0
  %239 = vmatmul.mubr.bf16.gmra.mrb[0].mxu0 %v149
  %v240 = vpop.f32.mrb[0].mxu0
  %v241 = vadd.f32 0.0, %v240
  %v242 = vpop.f32.mrb[0].mxu0
  %v243 = vpop.f32.mrb[0].mxu0
  %v244 = vadd.f32 0.0, %v243
  %v245 = vpop.f32.mrb[0].mxu0
  %246 = vmatprep.mubr.bf16.mxu0 0
  %247 = vmatmul.mubr.bf16.gmra.mrb[0].mxu0 %v152
  %v248 = vpop.f32.mrb[0].mxu0
  %v249 = vadd.f32 0.0, %v248
  %v250 = vpop.f32.mrb[0].mxu0
  %v251 = vpop.f32.mrb[0].mxu0
  %v252 = vadd.f32 0.0, %v251
  %v253 = vpop.f32.mrb[0].mxu0
  %254 = vdwg.mxu0
  %255 = vst.msk [vmem:[%s4] sm:$0xff] %vm129, %v193
  %256 = vst.msk [vmem:[%s4 + $0x8] sm:$0xff] %vm129, %v196
  %257 = vst.msk [vmem:[%s4 + $0x10] sm:$0xff] %vm129, %v201
  %258 = vst.msk [vmem:[%s4 + $0x18] sm:$0xff] %vm129, %v204
  %259 = vst.msk [vmem:[%s4 + $0x20] sm:$0xff] %vm129, %v209
  %260 = vst.msk [vmem:[%s4 + $0x28] sm:$0xff] %vm129, %v212
  %261 = vst.msk [vmem:[%s4 + $0x30] sm:$0xff] %vm129, %v217
  %262 = vst.msk [vmem:[%s4 + $0x38] sm:$0xff] %vm129, %v220
  %263 = vst.msk [vmem:[%s4 + $0x40] sm:$0xff] %vm129, %v225
  %264 = vst.msk [vmem:[%s4 + $0x48] sm:$0xff] %vm129, %v228
  %265 = vst.msk [vmem:[%s4 + $0x50] sm:$0xff] %vm129, %v233
  %266 = vst.msk [vmem:[%s4 + $0x58] sm:$0xff] %vm129, %v236
  %267 = vst.msk [vmem:[%s4 + $0x60] sm:$0xff] %vm129, %v241
  %268 = vst.msk [vmem:[%s4 + $0x68] sm:$0xff] %vm129, %v244
  %269 = vst.msk [vmem:[%s4 + $0x70] sm:$0xff] %vm129, %v249
  %270 = vst.msk [vmem:[%s4 + $0x78] sm:$0xff] %vm129, %v252
  %v271 = vld [vmem:[%s5] sm:$0x3]
  %v272 = vsel %vm129, %v193, 0.0
  %v273 = vsel %vm129, %v196, 0.0
  %v274 = vadd.f32 %v272, %v273
  %v275 = vsel %vm129, %v201, 0.0
  %v276 = vadd.f32 %v274, %v275
  %v277 = vsel %vm129, %v204, 0.0
  %v278 = vadd.f32 %v276, %v277
  %v279 = vsel %vm129, %v209, 0.0
  %v280 = vadd.f32 %v278, %v279
  %v281 = vsel %vm129, %v212, 0.0
  %v282 = vadd.f32 %v280, %v281
  %v283 = vsel %vm129, %v217, 0.0
  %v284 = vadd.f32 %v282, %v283
  %v285 = vsel %vm129, %v220, 0.0
  %v286 = vadd.f32 %v284, %v285
  %v287 = vsel %vm129, %v225, 0.0
  %v288 = vadd.f32 %v286, %v287
  %v289 = vsel %vm129, %v228, 0.0
  %v290 = vadd.f32 %v288, %v289
  %v291 = vsel %vm129, %v233, 0.0
  %v292 = vadd.f32 %v290, %v291
  %v293 = vsel %vm129, %v236, 0.0
  %v294 = vadd.f32 %v292, %v293
  %v295 = vsel %vm129, %v241, 0.0
  %v296 = vadd.f32 %v294, %v295
  %v297 = vsel %vm129, %v244, 0.0
  %v298 = vadd.f32 %v296, %v297
  %v299 = vsel %vm129, %v249, 0.0
  %v300 = vadd.f32 %v298, %v299
  %v301 = vsel %vm129, %v252, 0.0
  %v302 = vadd.f32 %v300, %v301
  %v303 = vrot.slane %v302, 4
  %v304 = vadd.f32 %v302, %v303
  %v305 = vrot.slane %v304, 2
  %v306 = vadd.f32 %v304, %v305
  %v307 = vrot.slane %v306, 1
  %v308 = vadd.f32 %v306, %v307
  %v309 = vmul.f32 %v193, %v193
  %v310 = vmul.f32 %v196, %v196
  %v311 = vmul.f32 %v201, %v201
  %v312 = vmul.f32 %v204, %v204
  %v313 = vmul.f32 %v209, %v209
  %v314 = vmul.f32 %v212, %v212
  %v315 = vmul.f32 %v217, %v217
  %v316 = vmul.f32 %v220, %v220
  %v317 = vmul.f32 %v225, %v225
  %v318 = vmul.f32 %v228, %v228
  %v319 = vmul.f32 %v233, %v233
  %v320 = vmul.f32 %v236, %v236
  %v321 = vmul.f32 %v241, %v241
  %v322 = vmul.f32 %v244, %v244
  %v323 = vmul.f32 %v249, %v249
  %v324 = vmul.f32 %v252, %v252
  %v325 = vsel %vm129, %v309, 0.0
  %v326 = vsel %vm129, %v310, 0.0
  %v327 = vadd.f32 %v325, %v326
  %v328 = vsel %vm129, %v311, 0.0
  %v329 = vadd.f32 %v327, %v328
  %v330 = vsel %vm129, %v312, 0.0
  %v331 = vadd.f32 %v329, %v330
  %v332 = vsel %vm129, %v313, 0.0
  %v333 = vadd.f32 %v331, %v332
  %v334 = vsel %vm129, %v314, 0.0
  %v335 = vadd.f32 %v333, %v334
  %v336 = vsel %vm129, %v315, 0.0
  %v337 = vadd.f32 %v335, %v336
  %v338 = vsel %vm129, %v316, 0.0
  %v339 = vadd.f32 %v337, %v338
  %v340 = vsel %vm129, %v317, 0.0
  %v341 = vadd.f32 %v339, %v340
  %v342 = vsel %vm129, %v318, 0.0
  %v343 = vadd.f32 %v341, %v342
  %v344 = vsel %vm129, %v319, 0.0
  %v345 = vadd.f32 %v343, %v344
  %v346 = vsel %vm129, %v320, 0.0
  %v347 = vadd.f32 %v345, %v346
  %v348 = vsel %vm129, %v321, 0.0
  %v349 = vadd.f32 %v347, %v348
  %v350 = vsel %vm129, %v322, 0.0
  %v351 = vadd.f32 %v349, %v350
  %v352 = vsel %vm129, %v323, 0.0
  %v353 = vadd.f32 %v351, %v352
  %v354 = vsel %vm129, %v324, 0.0
  %v355 = vadd.f32 %v353, %v354
  %v356 = vrot.slane %v355, 4
  %v357 = vadd.f32 %v355, %v356
  %v358 = vrot.slane %v357, 2
  %v359 = vadd.f32 %v357, %v358
  %v360 = vrot.slane %v359, 1
  %v361 = vadd.f32 %v359, %v360
  %vm362 = vcmask 1040384
  %v363 = vsel %vm362, %v308, %v361
  %v364 = vadd.f32 %v271, %v363
  %vm365 = vcmask 58368
  %366 = vst.msk [vmem:[%s5] sm:$0x3] %vm365, %v364
  // Predicated region
  $region22: #{resblock_forward.6} parent=0 // pred_check
    _
  $region23: #{resblock_forward.6} parent=0 // pred_check_branch
    %368 = sbr.rel (0) target = $region25
  $region24: #{resblock_forward.6} parent=0 // pred_region
    _
  $region25: #{resblock_forward.6} parent=0 // pred_fallthru
    _
  // Predicated region
  $region26: #{resblock_forward.6} parent=0 // pred_check
    _
  $region27: #{resblock_forward.6} parent=0 // pred_check_branch
    %370 = sbr.rel (0) target = $region29
  $region28: #{resblock_forward.6} parent=0 // pred_region
    _
  $region29: #{resblock_forward.6} parent=0 // pred_fallthru
    _
  // Predicated region
  $region30: #{resblock_forward.6} parent=0 // pred_check
    _
  $region31: #{resblock_forward.6} parent=0 // pred_check_branch
    %372 = sbr.rel (0) target = $region33
  $region32: #{resblock_forward.6} parent=0 // pred_region
    _
  $region33: #{resblock_forward.6} parent=0 // pred_fallthru
    _
  // Predicated region
  $region34: #{resblock_forward.6} parent=0 // pred_check
    _
  $region35: #{resblock_forward.6} parent=0 // pred_check_branch
    %374 = sbr.rel (0) target = $region37
  $region36: #{resblock_forward.6} parent=0 // pred_region
    _
  $region37: #{resblock_forward.6} parent=0 // pred_fallthru
    _

// kernel: resblock_forward.7
$region0: #{resblock_forward.7}
  #allocation0 [shape = 'u32[]', space=smem, size = 0x4, offset = 0x4, fixed_abs, tag = 'smem constant byte address 0x4 - core index']
  #allocation1 [shape = 'u32[144,128]{1,0:T(1,128)}', space=vmem, size = 0x12000, scoped, tag = 'internal scratch']
  %s0 = inlined_call_operand.vmem [shape: f32[128,8], index: 0, kind: input, shape index: {}]
  %s1 = inlined_call_operand.vmem [shape: f32[1,8], index: 1, kind: input, shape index: {}]
  %s2 = inlined_call_operand.vmem [shape: f32[1,8], index: 2, kind: input, shape index: {}]
  %s3 = inlined_call_operand.vmem [shape: bf16[128,8], index: 3, kind: input, shape index: {}]
  %s4 = inlined_call_operand.vmem [shape: f32[1,8], index: 4, kind: input, shape index: {}]
  %s5 = inlined_call_operand.vmem [shape: f32[1,8], index: 5, kind: input, shape index: {}]
  %s6 = inlined_call_operand.vmem [shape: f32[128,8], index: 6, kind: output, shape index: {}]
  %s7 = sld [smem:[#allocation0]]
  $region34: #{resblock_forward.7} parent=0
    _
  %s9 = ssub.s32 1, %s7
  %s10 = scalar_select 0, %s9, %s7
  // Predicated region
  $region2: #{resblock_forward.7} parent=0 // pred_check
    _
  $region3: #{resblock_forward.7} parent=0 // pred_check_branch
    %12 = sbr.rel (0) target = $region5
  $region4: #{resblock_forward.7} parent=0 // pred_region
    _
  $region5: #{resblock_forward.7} parent=0 // pred_fallthru
    _
  // Predicated region
  $region6: #{resblock_forward.7} parent=0 // pred_check
    _
  $region7: #{resblock_forward.7} parent=0 // pred_check_branch
    %14 = sbr.rel (0) target = $region9
  $region8: #{resblock_forward.7} parent=0 // pred_region
    _
  $region9: #{resblock_forward.7} parent=0 // pred_fallthru
    _
  // Predicated region
  $region10: #{resblock_forward.7} parent=0 // pred_check
    _
  $region11: #{resblock_forward.7} parent=0 // pred_check_branch
    %16 = sbr.rel (0) target = $region13
  $region12: #{resblock_forward.7} parent=0 // pred_region
    _
  $region13: #{resblock_forward.7} parent=0 // pred_fallthru
    _
  // Predicated region
  $region14: #{resblock_forward.7} parent=0 // pred_check
    _
  $region15: #{resblock_forward.7} parent=0 // pred_check_branch
    %18 = sbr.rel (0) target = $region17
  $region16: #{resblock_forward.7} parent=0 // pred_region
    _
  $region17: #{resblock_forward.7} parent=0 // pred_fallthru
    _
  // Predicated region
  $region18: #{resblock_forward.7} parent=0 // pred_check
    _
  $region19: #{resblock_forward.7} parent=0 // pred_check_branch
    %20 = sbr.rel (0) target = $region21
  $region20: #{resblock_forward.7} parent=0 // pred_region
    _
  $region21: #{resblock_forward.7} parent=0 // pred_fallthru
    _
  // Predicated region
  $region22: #{resblock_forward.7} parent=0 // pred_check
    _
  $region23: #{resblock_forward.7} parent=0 // pred_check_branch
    %22 = sbr.rel (0) target = $region25
  $region24: #{resblock_forward.7} parent=0 // pred_region
    _
  $region25: #{resblock_forward.7} parent=0 // pred_fallthru
    _
  %v23 = vld [vmem:[%s3] sm:$0xf]
  %v24 = vld [vmem:[%s3 + $0x4] sm:$0xf]
  %v25 = vld [vmem:[%s3 + $0x8] sm:$0xf]
  %v26 = vld [vmem:[%s3 + $0xc] sm:$0xf]
  %v27 = vld [vmem:[%s3 + $0x10] sm:$0xf]
  %v28 = vld [vmem:[%s3 + $0x14] sm:$0xf]
  %v29 = vld [vmem:[%s3 + $0x18] sm:$0xf]
  %v30 = vld [vmem:[%s3 + $0x1c] sm:$0xf]
  %v31 = vld [vmem:[%s3 + $0x20] sm:$0xf]
  %v32 = vld [vmem:[%s3 + $0x24] sm:$0xf]
  %v33 = vld [vmem:[%s3 + $0x28] sm:$0xf]
  %v34 = vld [vmem:[%s3 + $0x2c] sm:$0xf]
  %v35 = vld [vmem:[%s3 + $0x30] sm:$0xf]
  %v36 = vld [vmem:[%s3 + $0x34] sm:$0xf]
  %v37 = vld [vmem:[%s3 + $0x38] sm:$0xf]
  %v38 = vld [vmem:[%s3 + $0x3c] sm:$0xf]
  %v39 = vunpack.c.l.bf16 %v23
  %v40 = vunpack.c.l.bf16 %v24
  %v41 = vunpack.c.l.bf16 %v25
  %v42 = vunpack.c.l.bf16 %v26
  %v43 = vunpack.c.l.bf16 %v27
  %v44 = vunpack.c.l.bf16 %v28
  %v45 = vunpack.c.l.bf16 %v29
  %v46 = vunpack.c.l.bf16 %v30
  %v47 = vunpack.c.l.bf16 %v31
  %v48 = vunpack.c.l.bf16 %v32
  %v49 = vunpack.c.l.bf16 %v33
  %v50 = vunpack.c.l.bf16 %v34
  %v51 = vunpack.c.l.bf16 %v35
  %v52 = vunpack.c.l.bf16 %v36
  %v53 = vunpack.c.l.bf16 %v37
  %v54 = vunpack.c.l.bf16 %v38
  %v55 = vld [vmem:[%s4] sm:$0x1]
  %v57 = vlaneseq
  %v58 = vshrl.u32 %v57, 7
  %v59 = vsub.s32 0, %v58
  %v60 = vrot.slane %v55, %v59
  %v62 = vmul.f32 %v39, %v60
  %v63 = vmul.f32 %v40, %v60
  %v64 = vmul.f32 %v41, %v60
  %v65 = vmul.f32 %v42, %v60
  %v66 = vmul.f32 %v43, %v60
  %v67 = vmul.f32 %v44, %v60
  %v68 = vmul.f32 %v45, %v60
  %v69 = vmul.f32 %v46, %v60
  %v70 = vmul.f32 %v47, %v60
  %v71 = vmul.f32 %v48, %v60
  %v72 = vmul.f32 %v49, %v60
  %v73 = vmul.f32 %v50, %v60
  %v74 = vmul.f32 %v51, %v60
  %v75 = vmul.f32 %v52, %v60
  %v76 = vmul.f32 %v53, %v60
  %v77 = vmul.f32 %v54, %v60
  %v78 = vld [vmem:[%s5] sm:$0x1]
  %v80 = vlaneseq
  %v81 = vshrl.u32 %v80, 7
  %v82 = vsub.s32 0, %v81
  %v83 = vrot.slane %v78, %v82
  %v85 = vadd.f32 %v62, %v83
  %v86 = vadd.f32 %v63, %v83
  %v87 = vadd.f32 %v64, %v83
  %v88 = vadd.f32 %v65, %v83
  %v89 = vadd.f32 %v66, %v83
  %v90 = vadd.f32 %v67, %v83
  %v91 = vadd.f32 %v68, %v83
  %v92 = vadd.f32 %v69, %v83
  %v93 = vadd.f32 %v70, %v83
  %v94 = vadd.f32 %v71, %v83
  %v95 = vadd.f32 %v72, %v83
  %v96 = vadd.f32 %v73, %v83
  %v97 = vadd.f32 %v74, %v83
  %v98 = vadd.f32 %v75, %v83
  %v99 = vadd.f32 %v76, %v83
  %v100 = vadd.f32 %v77, %v83
  %v101 = vld [vmem:[%s0] sm:$0xff]
  %v102 = vld [vmem:[%s0 + $0x8] sm:$0xff]
  %v103 = vld [vmem:[%s0 + $0x10] sm:$0xff]
  %v104 = vld [vmem:[%s0 + $0x18] sm:$0xff]
  %v105 = vld [vmem:[%s0 + $0x20] sm:$0xff]
  %v106 = vld [vmem:[%s0 + $0x28] sm:$0xff]
  %v107 = vld [vmem:[%s0 + $0x30] sm:$0xff]
  %v108 = vld [vmem:[%s0 + $0x38] sm:$0xff]
  %v109 = vld [vmem:[%s0 + $0x40] sm:$0xff]
  %v110 = vld [vmem:[%s0 + $0x48] sm:$0xff]
  %v111 = vld [vmem:[%s0 + $0x50] sm:$0xff]
  %v112 = vld [vmem:[%s0 + $0x58] sm:$0xff]
  %v113 = vld [vmem:[%s0 + $0x60] sm:$0xff]
  %v114 = vld [vmem:[%s0 + $0x68] sm:$0xff]
  %v115 = vld [vmem:[%s0 + $0x70] sm:$0xff]
  %v116 = vld [vmem:[%s0 + $0x78] sm:$0xff]
  %v117 = vld [vmem:[%s1] sm:$0x1]
  %v119 = vlaneseq
  %v120 = vshrl.u32 %v119, 7
  %v121 = vsub.s32 0, %v120
  %v122 = vrot.slane %v117, %v121
  %v124 = vmul.f32 %v101, %v122
  %v125 = vmul.f32 %v102, %v122
  %v126 = vmul.f32 %v103, %v122
  %v127 = vmul.f32 %v104, %v122
  %v128 = vmul.f32 %v105, %v122
  %v129 = vmul.f32 %v106, %v122
  %v130 = vmul.f32 %v107, %v122
  %v131 = vmul.f32 %v108, %v122
  %v132 = vmul.f32 %v109, %v122
  %v133 = vmul.f32 %v110, %v122
  %v134 = vmul.f32 %v111, %v122
  %v135 = vmul.f32 %v112, %v122
  %v136 = vmul.f32 %v113, %v122
  %v137 = vmul.f32 %v114, %v122
  %v138 = vmul.f32 %v115, %v122
  %v139 = vmul.f32 %v116, %v122
  %v140 = vld [vmem:[%s2] sm:$0x1]
  %v142 = vlaneseq
  %v143 = vshrl.u32 %v142, 7
  %v144 = vsub.s32 0, %v143
  %v145 = vrot.slane %v140, %v144
  %v147 = vadd.f32 %v124, %v145
  %v148 = vadd.f32 %v125, %v145
  %v149 = vadd.f32 %v126, %v145
  %v150 = vadd.f32 %v127, %v145
  %v151 = vadd.f32 %v128, %v145
  %v152 = vadd.f32 %v129, %v145
  %v153 = vadd.f32 %v130, %v145
  %v154 = vadd.f32 %v131, %v145
  %v155 = vadd.f32 %v132, %v145
  %v156 = vadd.f32 %v133, %v145
  %v157 = vadd.f32 %v134, %v145
  %v158 = vadd.f32 %v135, %v145
  %v159 = vadd.f32 %v136, %v145
  %v160 = vadd.f32 %v137, %v145
  %v161 = vadd.f32 %v138, %v145
  %v162 = vadd.f32 %v139, %v145
  %v163 = vadd.f32 %v147, %v85
  %v164 = vadd.f32 %v148, %v86
  %v165 = vadd.f32 %v149, %v87
  %v166 = vadd.f32 %v150, %v88
  %v167 = vadd.f32 %v151, %v89
  %v168 = vadd.f32 %v152, %v90
  %v169 = vadd.f32 %v153, %v91
  %v170 = vadd.f32 %v154, %v92
  %v171 = vadd.f32 %v155, %v93
  %v172 = vadd.f32 %v156, %v94
  %v173 = vadd.f32 %v157, %v95
  %v174 = vadd.f32 %v158, %v96
  %v175 = vadd.f32 %v159, %v97
  %v176 = vadd.f32 %v160, %v98
  %v177 = vadd.f32 %v161, %v99
  %v178 = vadd.f32 %v162, %v100
  %vm179 = vcmask 64512
  %180 = vst.msk [vmem:[%s6] sm:$0xff] %vm179, %v163
  %181 = vst.msk [vmem:[%s6 + $0x8] sm:$0xff] %vm179, %v164
  %182 = vst.msk [vmem:[%s6 + $0x10] sm:$0xff] %vm179, %v165
  %183 = vst.msk [vmem:[%s6 + $0x18] sm:$0xff] %vm179, %v166
  %184 = vst.msk [vmem:[%s6 + $0x20] sm:$0xff] %vm179, %v167
  %185 = vst.msk [vmem:[%s6 + $0x28] sm:$0xff] %vm179, %v168
  %186 = vst.msk [vmem:[%s6 + $0x30] sm:$0xff] %vm179, %v169
  %187 = vst.msk [vmem:[%s6 + $0x38] sm:$0xff] %vm179, %v170
  %188 = vst.msk [vmem:[%s6 + $0x40] sm:$0xff] %vm179, %v171
  %189 = vst.msk [vmem:[%s6 + $0x48] sm:$0xff] %vm179, %v172
  %190 = vst.msk [vmem:[%s6 + $0x50] sm:$0xff] %vm179, %v173
  %191 = vst.msk [vmem:[%s6 + $0x58] sm:$0xff] %vm179, %v174
  %192 = vst.msk [vmem:[%s6 + $0x60] sm:$0xff] %vm179, %v175
  %193 = vst.msk [vmem:[%s6 + $0x68] sm:$0xff] %vm179, %v176
  %194 = vst.msk [vmem:[%s6 + $0x70] sm:$0xff] %vm179, %v177
  %195 = vst.msk [vmem:[%s6 + $0x78] sm:$0xff] %vm179, %v178
  // Predicated region
  $region26: #{resblock_forward.7} parent=0 // pred_check
    _
  $region27: #{resblock_forward.7} parent=0 // pred_check_branch
    %197 = sbr.rel (0) target = $region29
  $region28: #{resblock_forward.7} parent=0 // pred_region
    _
  $region29: #{resblock_forward.7} parent=0 // pred_fallthru
    _
  // Predicated region
  $region30: #{resblock_forward.7} parent=0 // pred_check
    _
  $region31: #{resblock_forward.7} parent=0 // pred_check_branch
    %199 = sbr.rel (0) target = $region33
  $region32: #{resblock_forward.7} parent=0 // pred_region
    _
  $region33: #{resblock_forward.7} parent=0 // pred_fallthru
    _

// kernel: resblock_forward.5
$region0: #{resblock_forward.5}
  #allocation0 [shape = 'u32[]', space=smem, size = 0x4, offset = 0x4, fixed_abs, tag = 'smem constant byte address 0x4 - core index']
  #allocation1 [shape = 'u32[144,128]{1,0:T(1,128)}', space=vmem, size = 0x12000, scoped, tag = 'internal scratch']
  #allocation2 [shape = 'f32[4,9,9,4]{3,2,1,0:T(8,128)}', space=vmem, size = 0x48000, scoped, tag = 'scratch operand']
  #allocation3 [shape = 'bf16[64,36]{1,0:T(16,128)(2,1)}', space=vmem, size = 0x4000, scoped, tag = 'scratch operand']
  %s0 = inlined_call_operand.vmem [shape: bf16[8,8,8,4], index: 0, kind: input, shape index: {}]
  %s1 = inlined_call_operand.vmem [shape: f32[1,4], index: 1, kind: input, shape index: {}]
  %s2 = inlined_call_operand.vmem [shape: f32[1,4], index: 2, kind: input, shape index: {}]
  %s3 = inlined_call_operand.vmem [shape: bf16[36,8], index: 3, kind: input, shape index: {}]
  %s4 = inlined_call_operand.vmem [shape: bf16[4,8], index: 4, kind: input, shape index: {}]
  %s5 = inlined_call_operand.vmem [shape: bf16[2,64,8], index: 5, kind: output, shape index: {0}]
  %s6 = inlined_call_operand.vmem [shape: f32[2,2,8], index: 6, kind: output, shape index: {1}]
  %s7 = inlined_call_operand.vmem [shape: bf16[2,64,8], index: 7, kind: output, shape index: {2}]
  %s8 = inlined_call_operand.vmem [shape: f32[2,2,8], index: 8, kind: output, shape index: {3}]
  %9 = xla_tuple %s5, %s6, %s7, %s8
  %s10 = sld [smem:[#allocation0]]
  $region81: #{resblock_forward.5} parent=0
    _
  %s12 = ssub.s32 1, %s10
  %s13 = scalar_select 0, %s12, %s10
  loop: start=0, step=1, limit=4
  $region2: #{resblock_forward.5} parent=0 // loop_pre_header
    _
  $region3: #{resblock_forward.5} parent=0 // loop_header
    %s15 = sphi 0, %s19
    %p16 = scmp.ge.s32.totalorder %s15, 4
    %s25 = sphi 0, %s27
    %s28 = sphi 0, %s25
    %s29 = sphi 0, %s28
    %s45 = sphi 0, %s29
    %s49 = sphi 0, %s49
    %s51 = sphi 0, %s49
    %s52 = sphi 0, %s51
    %s66 = sphi 0, %s52
    %s70 = sphi 0, %s70
    %s72 = sphi 0, %s70
    %s73 = sphi 0, %s72
    %s87 = sphi 0, %s73
    %s91 = sphi 0, %s91
    %s93 = sphi 0, %s91
    %s94 = sphi 0, %s93
    %s108 = sphi 0, %s94
    %s112 = sphi 0, %s112
    %s114 = sphi 0, %s112
    %s115 = sphi 0, %s114
    %s129 = sphi 0, %s115
    %s135 = sphi 0, %s137
    %s138 = sphi 0, %s135
    %s139 = sphi 0, %s138
    %s155 = sphi 0, %s139
    %s161 = sphi 0, %s163
    %s164 = sphi 0, %s161
    %s165 = sphi 0, %s164
    %s181 = sphi 0, %s165
    %s187 = sphi 0, %s189
    %s190 = sphi 0, %s187
    %s191 = sphi 0, %s190
    %s207 = sphi 0, %s191
    %s213 = sphi 0, %s215
    %s216 = sphi 0, %s213
    %s217 = sphi 0, %s216
    %s233 = sphi 0, %s217
  $region4: #{resblock_forward.5} parent=0 // loop_header_branch
    %18 = sbr.rel (%p16) target = $region8
  $region5: #{resblock_forward.5} parent=0 // loop_body
    %s20 = ssub.s32 %s15, 1
    %s21 = ssub.s32 %s15, 2
    %s22 = sadd.s32 %s15, 1
    %s23 = ssub.s32 %s15, %s22
    %p24 = scmp.eq.s32.totalorder %s23, 0
    %s26 = sadd.s32 %s25, 1
    %s27 = scalar_select %p24, %s25, %s26
    %p30 = pneg %p24
    %p31 = scmp.eq.s32.totalorder %s15, 1
    %p32 = por %p30, %p31
    %p33 = scmp.ne.s32.totalorder %s25, %s28
    %p34 = scmp.eq.s32.totalorder %s15, 0
    %p35 = por %p33, %p34
    %p36 = scmp.ne.s32.totalorder %s25, %s28
    %p37 = scmp.eq.s32.totalorder %s20, 1
    %p38 = por %p36, %p37
    %p39 = scmp.ne.s32.totalorder %s28, %s29
    %p40 = scmp.eq.s32.totalorder %s20, 0
    %p41 = por %p39, %p40
    %p42 = scmp.ne.s32.totalorder %s28, %s29
    %p43 = scmp.eq.s32.totalorder %s21, 1
    %p44 = por %p42, %p43
    %p46 = scmp.ne.s32.totalorder %s29, %s45
    %p47 = scmp.eq.s32.totalorder %s21, 0
    %p48 = por %p46, %p47
    %s50 = sadd.s32 %s49, 1
    %p53 = scmp.eq.s32.totalorder %s15, 1
    %p54 = scmp.ne.s32.totalorder %s49, %s51
    %p55 = scmp.eq.s32.totalorder %s15, 0
    %p56 = por %p54, %p55
    %p57 = scmp.ne.s32.totalorder %s49, %s51
    %p58 = scmp.eq.s32.totalorder %s20, 1
    %p59 = por %p57, %p58
    %p60 = scmp.ne.s32.totalorder %s51, %s52
    %p61 = scmp.eq.s32.totalorder %s20, 0
    %p62 = por %p60, %p61
    %p63 = scmp.ne.s32.totalorder %s51, %s52
    %p64 = scmp.eq.s32.totalorder %s21, 1
    %p65 = por %p63, %p64
    %p67 = scmp.ne.s32.totalorder %s52, %s66
    %p68 = scmp.eq.s32.totalorder %s21, 0
    %p69 = por %p67, %p68
    %s71 = sadd.s32 %s70, 1
    %p74 = scmp.eq.s32.totalorder %s15, 1
    %p75 = scmp.ne.s32.totalorder %s70, %s72
    %p76 = scmp.eq.s32.totalorder %s15, 0
    %p77 = por %p75, %p76
    %p78 = scmp.ne.s32.totalorder %s70, %s72
    %p79 = scmp.eq.s32.totalorder %s20, 1
    %p80 = por %p78, %p79
    %p81 = scmp.ne.s32.totalorder %s72, %s73
    %p82 = scmp.eq.s32.totalorder %s20, 0
    %p83 = por %p81, %p82
    %p84 = scmp.ne.s32.totalorder %s72, %s73
    %p85 = scmp.eq.s32.totalorder %s21, 1
    %p86 = por %p84, %p85
    %p88 = scmp.ne.s32.totalorder %s73, %s87
    %p89 = scmp.eq.s32.totalorder %s21, 0
    %p90 = por %p88, %p89
    %s92 = sadd.s32 %s91, 1
    %p95 = scmp.eq.s32.totalorder %s15, 1
    %p96 = scmp.ne.s32.totalorder %s91, %s93
    %p97 = scmp.eq.s32.totalorder %s15, 0
    %p98 = por %p96, %p97
    %p99 = scmp.ne.s32.totalorder %s91, %s93
    %p100 = scmp.eq.s32.totalorder %s20, 1
    %p101 = por %p99, %p100
    %p102 = scmp.ne.s32.totalorder %s93, %s94
    %p103 = scmp.eq.s32.totalorder %s20, 0
    %p104 = por %p102, %p103
    %p105 = scmp.ne.s32.totalorder %s93, %s94
    %p106 = scmp.eq.s32.totalorder %s21, 1
    %p107 = por %p105, %p106
    %p109 = scmp.ne.s32.totalorder %s94, %s108
    %p110 = scmp.eq.s32.totalorder %s21, 0
    %p111 = por %p109, %p110
    %s113 = sadd.s32 %s112, 1
    %p116 = scmp.eq.s32.totalorder %s15, 1
    %p117 = scmp.ne.s32.totalorder %s112, %s114
    %p118 = scmp.eq.s32.totalorder %s15, 0
    %p119 = por %p117, %p118
    %p120 = scmp.ne.s32.totalorder %s112, %s114
    %p121 = scmp.eq.s32.totalorder %s20, 1
    %p122 = por %p120, %p121
    %p123 = scmp.ne.s32.totalorder %s114, %s115
    %p124 = scmp.eq.s32.totalorder %s20, 0
    %p125 = por %p123, %p124
    %p126 = scmp.ne.s32.totalorder %s114, %s115
    %p127 = scmp.eq.s32.totalorder %s21, 1
    %p128 = por %p126, %p127
    %p130 = scmp.ne.s32.totalorder %s115, %s129
    %p131 = scmp.eq.s32.totalorder %s21, 0
    %p132 = por %p130, %p131
    %s133 = ssub.s32 %s15, %s22
    %p134 = scmp.eq.s32.totalorder %s133, 0
    %s136 = sadd.s32 %s135, 1
    %s137 = scalar_select %p134, %s135, %s136
    %p140 = pneg %p134
    %p141 = scmp.eq.s32.totalorder %s15, 1
    %p142 = por %p140, %p141
    %p143 = scmp.ne.s32.totalorder %s135, %s138
    %p144 = scmp.eq.s32.totalorder %s15, 0
    %p145 = por %p143, %p144
    %p146 = scmp.ne.s32.totalorder %s135, %s138
    %p147 = scmp.eq.s32.totalorder %s20, 1
    %p148 = por %p146, %p147
    %p149 = scmp.ne.s32.totalorder %s138, %s139
    %p150 = scmp.eq.s32.totalorder %s20, 0
    %p151 = por %p149, %p150
    %p152 = scmp.ne.s32.totalorder %s138, %s139
    %p153 = scmp.eq.s32.totalorder %s21, 1
    %p154 = por %p152, %p153
    %p156 = scmp.ne.s32.totalorder %s139, %s155
    %p157 = scmp.eq.s32.totalorder %s21, 0
    %p158 = por %p156, %p157
    %s159 = ssub.s32 %s15, %s22
    %p160 = scmp.eq.s32.totalorder %s159, 0
    %s162 = sadd.s32 %s161, 1
    %s163 = scalar_select %p160, %s161, %s162
    %p166 = pneg %p160
    %p167 = scmp.eq.s32.totalorder %s15, 1
    %p168 = por %p166, %p167
    %p169 = scmp.ne.s32.totalorder %s161, %s164
    %p170 = scmp.eq.s32.totalorder %s15, 0
    %p171 = por %p169, %p170
    %p172 = scmp.ne.s32.totalorder %s161, %s164
    %p173 = scmp.eq.s32.totalorder %s20, 1
    %p174 = por %p172, %p173
    %p175 = scmp.ne.s32.totalorder %s164, %s165
    %p176 = scmp.eq.s32.totalorder %s20, 0
    %p177 = por %p175, %p176
    %p178 = scmp.ne.s32.totalorder %s164, %s165
    %p179 = scmp.eq.s32.totalorder %s21, 1
    %p180 = por %p178, %p179
    %p182 = scmp.ne.s32.totalorder %s165, %s181
    %p183 = scmp.eq.s32.totalorder %s21, 0
    %p184 = por %p182, %p183
    %s185 = ssub.s32 %s15, %s22
    %p186 = scmp.eq.s32.totalorder %s185, 0
    %s188 = sadd.s32 %s187, 1
    %s189 = scalar_select %p186, %s187, %s188
    %p192 = pneg %p186
    %p193 = scmp.eq.s32.totalorder %s15, 1
    %p194 = por %p192, %p193
    %p195 = scmp.ne.s32.totalorder %s187, %s190
    %p196 = scmp.eq.s32.totalorder %s15, 0
    %p197 = por %p195, %p196
    %p198 = scmp.ne.s32.totalorder %s187, %s190
    %p199 = scmp.eq.s32.totalorder %s20, 1
    %p200 = por %p198, %p199
    %p201 = scmp.ne.s32.totalorder %s190, %s191
    %p202 = scmp.eq.s32.totalorder %s20, 0
    %p203 = por %p201, %p202
    %p204 = scmp.ne.s32.totalorder %s190, %s191
    %p205 = scmp.eq.s32.totalorder %s21, 1
    %p206 = por %p204, %p205
    %p208 = scmp.ne.s32.totalorder %s191, %s207
    %p209 = scmp.eq.s32.totalorder %s21, 0
    %p210 = por %p208, %p209
    %s211 = ssub.s32 %s15, %s22
    %p212 = scmp.eq.s32.totalorder %s211, 0
    %s214 = sadd.s32 %s213, 1
    %s215 = scalar_select %p212, %s213, %s214
    %p218 = pneg %p212
    %p219 = scmp.eq.s32.totalorder %s15, 1
    %p220 = por %p218, %p219
    %p221 = scmp.ne.s32.totalorder %s213, %s216
    %p222 = scmp.eq.s32.totalorder %s15, 0
    %p223 = por %p221, %p222
    %p224 = scmp.ne.s32.totalorder %s213, %s216
    %p225 = scmp.eq.s32.totalorder %s20, 1
    %p226 = por %p224, %p225
    %p227 = scmp.ne.s32.totalorder %s216, %s217
    %p228 = scmp.eq.s32.totalorder %s20, 0
    %p229 = por %p227, %p228
    %p230 = scmp.ne.s32.totalorder %s216, %s217
    %p231 = scmp.eq.s32.totalorder %s21, 1
    %p232 = por %p230, %p231
    %p234 = scmp.ne.s32.totalorder %s217, %s233
    %p235 = scmp.eq.s32.totalorder %s21, 0
    %p236 = por %p234, %p235
    %p237 = scmp.le.s32.totalorder 1, %s15
    %p238 = scmp.lt.s32.totalorder %s15, 3
    %p239 = pnand %p237, %p238
    %p240 = pneg %p239
    // Predicated region
    $region9: #{resblock_forward.5} parent=5 // pred_check
      _
    $region10: #{resblock_forward.5} parent=5 // pred_check_branch
      %242 = sbr.rel (%p239) target = $region12
    $region11: #{resblock_forward.5} parent=5 // pred_region
      %s243 = ssub.s32 %s15, 1
      // Predicated region
      $region13: #{resblock_forward.5} parent=11 // pred_check
        %p244 = pneg %p62
      $region14: #{resblock_forward.5} parent=11 // pred_check_branch
        %246 = sbr.rel (%p244) target = $region16
      $region15: #{resblock_forward.5} parent=11 // pred_region
        _
      $region16: #{resblock_forward.5} parent=11 // pred_fallthru
        _
      // Predicated region
      $region17: #{resblock_forward.5} parent=11 // pred_check
        %p247 = pneg %p83
      $region18: #{resblock_forward.5} parent=11 // pred_check_branch
        %249 = sbr.rel (%p247) target = $region20
      $region19: #{resblock_forward.5} parent=11 // pred_region
        _
      $region20: #{resblock_forward.5} parent=11 // pred_fallthru
        _
      // Predicated region
      $region21: #{resblock_forward.5} parent=11 // pred_check
        %p250 = pneg %p104
      $region22: #{resblock_forward.5} parent=11 // pred_check_branch
        %252 = sbr.rel (%p250) target = $region24
      $region23: #{resblock_forward.5} parent=11 // pred_region
        _
      $region24: #{resblock_forward.5} parent=11 // pred_fallthru
        _
      // Predicated region
      $region25: #{resblock_forward.5} parent=11 // pred_check
        %p253 = pneg %p125
      $region26: #{resblock_forward.5} parent=11 // pred_check_branch
        %255 = sbr.rel (%p253) target = $region28
      $region27: #{resblock_forward.5} parent=11 // pred_region
        _
      $region28: #{resblock_forward.5} parent=11 // pred_fallthru
        _
    $region12: #{resblock_forward.5} parent=5 // pred_fallthru
      _
    %p256 = scmp.lt.s32.totalorder %s15, 2
    // Predicated region
    $region29: #{resblock_forward.5} parent=5 // pred_check
      %p257 = pneg %p256
    $region30: #{resblock_forward.5} parent=5 // pred_check_branch
      %259 = sbr.rel (%p257) target = $region32
    $region31: #{resblock_forward.5} parent=5 // pred_region
      // Predicated region
      $region33: #{resblock_forward.5} parent=31 // pred_check
        %p260 = pneg %p35
      $region34: #{resblock_forward.5} parent=31 // pred_check_branch
        %262 = sbr.rel (%p260) target = $region36
      $region35: #{resblock_forward.5} parent=31 // pred_region
        %s263 = smul.u32 4, %s15
        %p264 = scmp.lt.s32.totalorder %s263, 7
        %s265 = scalar_select %p264, %s263, 7
        %s266 = smul.addr %s265, 8
        %s267 = smul.addr %s266, 4
        %s268 = scalar_lea.vmem %s0, %s267
        %s269 = smul.u32 4, %s15
      $region36: #{resblock_forward.5} parent=31 // pred_fallthru
        _
    $region32: #{resblock_forward.5} parent=5 // pred_fallthru
      _
    %p270 = scmp.le.s32.totalorder 1, %s15
    %p271 = scmp.lt.s32.totalorder %s15, 3
    %p272 = pnand %p270, %p271
    %p273 = pneg %p272
    // Predicated region
    $region37: #{resblock_forward.5} parent=5 // pred_check
      _
    $region38: #{resblock_forward.5} parent=5 // pred_check_branch
      %275 = sbr.rel (%p272) target = $region40
    $region39: #{resblock_forward.5} parent=5 // pred_region
      %s276 = ssub.s32 %s15, 1
      %s277 = smul.u32 4, %s20
      %p278 = scmp.lt.s32.totalorder %s277, 7
      %s279 = scalar_select %p278, %s277, 7
      %s280 = smul.addr %s279, 8
      %s281 = smul.addr %s280, 4
      %s282 = scalar_lea.vmem %s0, %s281
      %p283 = pneg %p41
      %p284 = pneg %p38
      %p285 = pneg %p62
      %p286 = pneg %p59
      %p287 = pneg %p83
      %p288 = pneg %p80
      %p289 = pneg %p104
      %p290 = pneg %p101
      %p291 = pneg %p125
      %p292 = pneg %p122
      %p293 = pneg %p151
      %p294 = pneg %p148
      %p295 = scmp.lt.s32.totalorder %s20, 1
      %s296 = scalar_select %p295, %s20, 1
      %s297 = smul.addr %s296, 8
      %s298 = smul.addr %s297, 4
      %s299 = scalar_lea.vmem %s5, %s298
      %p300 = pneg %p177
      %p301 = pneg %p174
      %p302 = scmp.lt.s32.totalorder %s20, 1
      %s303 = scalar_select %p302, %s20, 1
      %s304 = smul.addr %s303, 2
      %s305 = scalar_lea.vmem %s6, %s304
      %p306 = pneg %p203
      %p307 = pneg %p200
      %p308 = scmp.lt.s32.totalorder %s20, 1
      %s309 = scalar_select %p308, %s20, 1
      %s310 = smul.addr %s309, 8
      %s311 = smul.addr %s310, 4
      %s312 = scalar_lea.vmem %s7, %s311
      %p313 = pneg %p229
      %p314 = pneg %p226
      %p315 = scmp.lt.s32.totalorder %s20, 1
      %s316 = scalar_select %p315, %s20, 1
      %s317 = smul.addr %s316, 2
      %s318 = scalar_lea.vmem %s8, %s317
      %s319 = smul.u32 4, %s20
      %p320 = scmp.lt.s32.totalorder %s319, 7
      %s321 = scalar_select %p320, %s319, 7
      %s322 = smul.addr %s321, 8
      %s323 = smul.addr %s322, 4
      %s324 = scalar_lea.vmem %s0, %s323
      %s325 = smul.u32 4, %s20
      %p326 = scmp.lt.s32.totalorder %s20, 1
      %s327 = scalar_select %p326, %s20, 1
      %s328 = smul.addr %s327, 8
      %s329 = smul.addr %s328, 4
      %s330 = scalar_lea.vmem %s5, %s329
      %p331 = scmp.lt.s32.totalorder %s20, 1
      %s332 = scalar_select %p331, %s20, 1
      %s333 = smul.addr %s332, 2
      %s334 = scalar_lea.vmem %s6, %s333
      %p335 = scmp.lt.s32.totalorder %s20, 1
      %s336 = scalar_select %p335, %s20, 1
      %s337 = smul.addr %s336, 8
      %s338 = smul.addr %s337, 4
      %s339 = scalar_lea.vmem %s7, %s338
      %p340 = scmp.lt.s32.totalorder %s20, 1
      %s341 = scalar_select %p340, %s20, 1
      %s342 = smul.addr %s341, 2
      %s343 = scalar_lea.vmem %s8, %s342
      %p345 = scmp.eq.s32.totalorder %s20, 0
      // Predicated region
      $region41: #{resblock_forward.5} parent=39 // pred_check
        %p346 = pneg %p345
      $region42: #{resblock_forward.5} parent=39 // pred_check_branch
        %348 = sbr.rel (%p346) target = $region44
      $region43: #{resblock_forward.5} parent=39 // pred_region
        %vm349 = vcmask 31744
        %350 = vst.msk [vmem:[#allocation2] sm:$0xff] %vm349, 0.0
        %vm351 = vcmask 24576
        %352 = vst.msk [vmem:[#allocation2 + $0x8] sm:$0x1] %vm351, 0.0
        %353 = vst.msk [vmem:[#allocation2 + $0x10] sm:$0xff] %vm349, 0.0
        %354 = vst.msk [vmem:[#allocation2 + $0x18] sm:$0x1] %vm351, 0.0
        %355 = vst.msk [vmem:[#allocation2 + $0x20] sm:$0xff] %vm349, 0.0
        %356 = vst.msk [vmem:[#allocation2 + $0x28] sm:$0x1] %vm351, 0.0
        %357 = vst.msk [vmem:[#allocation2 + $0x30] sm:$0xff] %vm349, 0.0
        %358 = vst.msk [vmem:[#allocation2 + $0x38] sm:$0x1] %vm351, 0.0
        %359 = vst.msk [vmem:[#allocation2 + $0x40] sm:$0xff] %vm349, 0.0
        %360 = vst.msk [vmem:[#allocation2 + $0x48] sm:$0x1] %vm351, 0.0
        %361 = vst.msk [vmem:[#allocation2 + $0x50] sm:$0xff] %vm349, 0.0
        %362 = vst.msk [vmem:[#allocation2 + $0x58] sm:$0x1] %vm351, 0.0
        %363 = vst.msk [vmem:[#allocation2 + $0x60] sm:$0xff] %vm349, 0.0
        %364 = vst.msk [vmem:[#allocation2 + $0x68] sm:$0x1] %vm351, 0.0
        %365 = vst.msk [vmem:[#allocation2 + $0x70] sm:$0xff] %vm349, 0.0
        %366 = vst.msk [vmem:[#allocation2 + $0x78] sm:$0x1] %vm351, 0.0
        %367 = vst.msk [vmem:[#allocation2 + $0x80] sm:$0xff] %vm349, 0.0
        %368 = vst.msk [vmem:[#allocation2 + $0x88] sm:$0x1] %vm351, 0.0
        %369 = vst.msk [vmem:[#allocation2 + $0x90] sm:$0xff] %vm349, 0.0
        %370 = vst.msk [vmem:[#allocation2 + $0x98] sm:$0x1] %vm351, 0.0
        %371 = vst.msk [vmem:[#allocation2 + $0xa0] sm:$0xff] %vm349, 0.0
        %372 = vst.msk [vmem:[#allocation2 + $0xa8] sm:$0x1] %vm351, 0.0
        %373 = vst.msk [vmem:[#allocation2 + $0xb0] sm:$0xff] %vm349, 0.0
        %374 = vst.msk [vmem:[#allocation2 + $0xb8] sm:$0x1] %vm351, 0.0
        %375 = vst.msk [vmem:[#allocation2 + $0xc0] sm:$0xff] %vm349, 0.0
        %376 = vst.msk [vmem:[#allocation2 + $0xc8] sm:$0x1] %vm351, 0.0
        %377 = vst.msk [vmem:[#allocation2 + $0xd0] sm:$0xff] %vm349, 0.0
        %378 = vst.msk [vmem:[#allocation2 + $0xd8] sm:$0x1] %vm351, 0.0
        %379 = vst.msk [vmem:[#allocation2 + $0xe0] sm:$0xff] %vm349, 0.0
        %380 = vst.msk [vmem:[#allocation2 + $0xe8] sm:$0x1] %vm351, 0.0
        %381 = vst.msk [vmem:[#allocation2 + $0xf0] sm:$0xff] %vm349, 0.0
        %382 = vst.msk [vmem:[#allocation2 + $0xf8] sm:$0x1] %vm351, 0.0
        %383 = vst.msk [vmem:[#allocation2 + $0x100] sm:$0xff] %vm349, 0.0
        %384 = vst.msk [vmem:[#allocation2 + $0x108] sm:$0x1] %vm351, 0.0
        %385 = vst.msk [vmem:[#allocation2 + $0x110] sm:$0xff] %vm349, 0.0
        %386 = vst.msk [vmem:[#allocation2 + $0x118] sm:$0x1] %vm351, 0.0
        %387 = vst.msk [vmem:[#allocation2 + $0x120] sm:$0xff] %vm349, 0.0
        %388 = vst.msk [vmem:[#allocation2 + $0x128] sm:$0x1] %vm351, 0.0
        %389 = vst.msk [vmem:[#allocation2 + $0x130] sm:$0xff] %vm349, 0.0
        %390 = vst.msk [vmem:[#allocation2 + $0x138] sm:$0x1] %vm351, 0.0
        %391 = vst.msk [vmem:[#allocation2 + $0x140] sm:$0xff] %vm349, 0.0
        %392 = vst.msk [vmem:[#allocation2 + $0x148] sm:$0x1] %vm351, 0.0
        %393 = vst.msk [vmem:[#allocation2 + $0x150] sm:$0xff] %vm349, 0.0
        %394 = vst.msk [vmem:[#allocation2 + $0x158] sm:$0x1] %vm351, 0.0
        %395 = vst.msk [vmem:[#allocation2 + $0x160] sm:$0xff] %vm349, 0.0
        %396 = vst.msk [vmem:[#allocation2 + $0x168] sm:$0x1] %vm351, 0.0
        %397 = vst.msk [vmem:[#allocation2 + $0x170] sm:$0xff] %vm349, 0.0
        %398 = vst.msk [vmem:[#allocation2 + $0x178] sm:$0x1] %vm351, 0.0
        %399 = vst.msk [vmem:[#allocation2 + $0x180] sm:$0xff] %vm349, 0.0
        %400 = vst.msk [vmem:[#allocation2 + $0x188] sm:$0x1] %vm351, 0.0
        %401 = vst.msk [vmem:[#allocation2 + $0x190] sm:$0xff] %vm349, 0.0
        %402 = vst.msk [vmem:[#allocation2 + $0x198] sm:$0x1] %vm351, 0.0
        %403 = vst.msk [vmem:[#allocation2 + $0x1a0] sm:$0xff] %vm349, 0.0
        %404 = vst.msk [vmem:[#allocation2 + $0x1a8] sm:$0x1] %vm351, 0.0
        %405 = vst.msk [vmem:[#allocation2 + $0x1b0] sm:$0xff] %vm349, 0.0
        %406 = vst.msk [vmem:[#allocation2 + $0x1b8] sm:$0x1] %vm351, 0.0
        %407 = vst.msk [vmem:[#allocation2 + $0x1c0] sm:$0xff] %vm349, 0.0
        %408 = vst.msk [vmem:[#allocation2 + $0x1c8] sm:$0x1] %vm351, 0.0
        %409 = vst.msk [vmem:[#allocation2 + $0x1d0] sm:$0xff] %vm349, 0.0
        %410 = vst.msk [vmem:[#allocation2 + $0x1d8] sm:$0x1] %vm351, 0.0
        %411 = vst.msk [vmem:[#allocation2 + $0x1e0] sm:$0xff] %vm349, 0.0
        %412 = vst.msk [vmem:[#allocation2 + $0x1e8] sm:$0x1] %vm351, 0.0
        %413 = vst.msk [vmem:[#allocation2 + $0x1f0] sm:$0xff] %vm349, 0.0
        %414 = vst.msk [vmem:[#allocation2 + $0x1f8] sm:$0x1] %vm351, 0.0
        %415 = vst.msk [vmem:[#allocation2 + $0x200] sm:$0xff] %vm349, 0.0
        %416 = vst.msk [vmem:[#allocation2 + $0x208] sm:$0x1] %vm351, 0.0
        %417 = vst.msk [vmem:[#allocation2 + $0x210] sm:$0xff] %vm349, 0.0
        %418 = vst.msk [vmem:[#allocation2 + $0x218] sm:$0x1] %vm351, 0.0
        %419 = vst.msk [vmem:[#allocation2 + $0x220] sm:$0xff] %vm349, 0.0
        %420 = vst.msk [vmem:[#allocation2 + $0x228] sm:$0x1] %vm351, 0.0
        %421 = vst.msk [vmem:[#allocation2 + $0x230] sm:$0xff] %vm349, 0.0
        %422 = vst.msk [vmem:[#allocation2 + $0x238] sm:$0x1] %vm351, 0.0
      $region44: #{resblock_forward.5} parent=39 // pred_fallthru
        _
      %v423 = vld [vmem:[%s1] sm:$0x1]
      %v424 = vld [vmem:[%s2] sm:$0x1]
      %v425 = vld [vmem:[%s324] sm:$0xf]
      %v426 = vld [vmem:[%s324 + $0x4] sm:$0xf]
      %v427 = vld [vmem:[%s324 + $0x8] sm:$0xf]
      %v428 = vld [vmem:[%s324 + $0xc] sm:$0xf]
      %v429 = vld [vmem:[%s324 + $0x10] sm:$0xf]
      %v430 = vld [vmem:[%s324 + $0x14] sm:$0xf]
      %v431 = vld [vmem:[%s324 + $0x18] sm:$0xf]
      %v432 = vld [vmem:[%s324 + $0x1c] sm:$0xf]
      %v433 = vunpack.c.l.bf16 %v425
      %v434 = vunpack.c.l.bf16 %v426
      %v435 = vunpack.c.l.bf16 %v427
      %v436 = vunpack.c.l.bf16 %v428
      %v437 = vunpack.c.l.bf16 %v429
      %v438 = vunpack.c.l.bf16 %v430
      %v439 = vunpack.c.l.bf16 %v431
      %v440 = vunpack.c.l.bf16 %v432
      %v442 = vlaneseq
      %v443 = vshrl.u32 %v442, 7
      %v444 = vsub.s32 0, %v443
      %v445 = vrot.slane %v423, %v444
      %v447 = vmul.f32 %v433, %v445
      %v448 = vmul.f32 %v434, %v445
      %v449 = vmul.f32 %v435, %v445
      %v450 = vmul.f32 %v436, %v445
      %v451 = vmul.f32 %v437, %v445
      %v452 = vmul.f32 %v438, %v445
      %v453 = vmul.f32 %v439, %v445
      %v454 = vmul.f32 %v440, %v445
      %v456 = vlaneseq
      %v457 = vshrl.u32 %v456, 7
      %v458 = vsub.s32 0, %v457
      %v459 = vrot.slane %v424, %v458
      %v461 = vadd.f32 %v447, %v459
      %v462 = vadd.f32 %v448, %v459
      %v463 = vadd.f32 %v449, %v459
      %v464 = vadd.f32 %v450, %v459
      %v465 = vadd.f32 %v451, %v459
      %v466 = vadd.f32 %v452, %v459
      %v467 = vadd.f32 %v453, %v459
      %v468 = vadd.f32 %v454, %v459
      %v469 = vmax.f32 %v461, 0.0
      %v470 = vmax.f32 %v462, 0.0
      %v471 = vmax.f32 %v463, 0.0
      %v472 = vmax.f32 %v464, 0.0
      %v473 = vmax.f32 %v465, 0.0
      %v474 = vmax.f32 %v466, 0.0
      %v475 = vmax.f32 %v467, 0.0
      %v476 = vmax.f32 %v468, 0.0
      %s477 = scalar_lea.vmem [#allocation2], 432
      %vm478 = vcmask 31744
      %479 = vst.msk [vmem:[%s477] sm:$0xff] %vm478, %v469
      %480 = vst.msk [vmem:[%s477 + $0x10] sm:$0xff] %vm478, %v470
      %481 = vst.msk [vmem:[%s477 + $0x20] sm:$0xff] %vm478, %v471
      %482 = vst.msk [vmem:[%s477 + $0x30] sm:$0xff] %vm478, %v472
      %483 = vst.msk [vmem:[%s477 + $0x40] sm:$0xff] %vm478, %v473
      %484 = vst.msk [vmem:[%s477 + $0x50] sm:$0xff] %vm478, %v474
      %485 = vst.msk [vmem:[%s477 + $0x60] sm:$0xff] %vm478, %v475
      %486 = vst.msk [vmem:[%s477 + $0x70] sm:$0xff] %vm478, %v476
      %s487 = scalar_lea.vmem %s324, 32
      %v488 = vld [vmem:[%s487] sm:$0xf]
      %v489 = vld [vmem:[%s487 + $0x4] sm:$0xf]
      %v490 = vld [vmem:[%s487 + $0x8] sm:$0xf]
      %v491 = vld [vmem:[%s487 + $0xc] sm:$0xf]
      %v492 = vld [vmem:[%s487 + $0x10] sm:$0xf]
      %v493 = vld [vmem:[%s487 + $0x14] sm:$0xf]
      %v494 = vld [vmem:[%s487 + $0x18] sm:$0xf]
      %v495 = vld [vmem:[%s487 + $0x1c] sm:$0xf]
      %v496 = vunpack.c.l.bf16 %v488
      %v497 = vunpack.c.l.bf16 %v489
      %v498 = vunpack.c.l.bf16 %v490
      %v499 = vunpack.c.l.bf16 %v491
      %v500 = vunpack.c.l.bf16 %v492
      %v501 = vunpack.c.l.bf16 %v493
      %v502 = vunpack.c.l.bf16 %v494
      %v503 = vunpack.c.l.bf16 %v495
      %v504 = vmul.f32 %v496, %v445
      %v505 = vmul.f32 %v497, %v445
      %v506 = vmul.f32 %v498, %v445
      %v507 = vmul.f32 %v499, %v445
      %v508 = vmul.f32 %v500, %v445
      %v509 = vmul.f32 %v501, %v445
      %v510 = vmul.f32 %v502, %v445
      %v511 = vmul.f32 %v503, %v445
      %v512 = vadd.f32 %v504, %v459
      %v513 = vadd.f32 %v505, %v459
      %v514 = vadd.f32 %v506, %v459
      %v515 = vadd.f32 %v507, %v459
      %v516 = vadd.f32 %v508, %v459
      %v517 = vadd.f32 %v509, %v459
      %v518 = vadd.f32 %v510, %v459
      %v519 = vadd.f32 %v511, %v459
      %v520 = vmax.f32 %v512, 0.0
      %v521 = vmax.f32 %v513, 0.0
      %v522 = vmax.f32 %v514, 0.0
      %v523 = vmax.f32 %v515, 0.0
      %v524 = vmax.f32 %v516, 0.0
      %v525 = vmax.f32 %v517, 0.0
      %v526 = vmax.f32 %v518, 0.0
      %v527 = vmax.f32 %v519, 0.0
      %s528 = scalar_lea.vmem [#allocation2], 288
      %529 = vst.msk [vmem:[%s528 + $0x1] sm:$0xff] %vm478, %v520
      %530 = vst.msk [vmem:[%s528 + $0x11] sm:$0xff] %vm478, %v521
      %531 = vst.msk [vmem:[%s528 + $0x21] sm:$0xff] %vm478, %v522
      %532 = vst.msk [vmem:[%s528 + $0x31] sm:$0xff] %vm478, %v523
      %533 = vst.msk [vmem:[%s528 + $0x41] sm:$0xff] %vm478, %v524
      %534 = vst.msk [vmem:[%s528 + $0x51] sm:$0xff] %vm478, %v525
      %535 = vst.msk [vmem:[%s528 + $0x61] sm:$0xff] %vm478, %v526
      %536 = vst.msk [vmem:[%s528 + $0x71] sm:$0xff] %vm478, %v527
      %s537 = scalar_lea.vmem %s324, 64
      %v538 = vld [vmem:[%s537] sm:$0xf]
      %v539 = vld [vmem:[%s537 + $0x4] sm:$0xf]
      %v540 = vld [vmem:[%s537 + $0x8] sm:$0xf]
      %v541 = vld [vmem:[%s537 + $0xc] sm:$0xf]
      %v542 = vld [vmem:[%s537 + $0x10] sm:$0xf]
      %v543 = vld [vmem:[%s537 + $0x14] sm:$0xf]
      %v544 = vld [vmem:[%s537 + $0x18] sm:$0xf]
      %v545 = vld [vmem:[%s537 + $0x1c] sm:$0xf]
      %v546 = vunpack.c.l.bf16 %v538
      %v547 = vunpack.c.l.bf16 %v539
      %v548 = vunpack.c.l.bf16 %v540
      %v549 = vunpack.c.l.bf16 %v541
      %v550 = vunpack.c.l.bf16 %v542
      %v551 = vunpack.c.l.bf16 %v543
      %v552 = vunpack.c.l.bf16 %v544
      %v553 = vunpack.c.l.bf16 %v545
      %v554 = vmul.f32 %v546, %v445
      %v555 = vmul.f32 %v547, %v445
      %v556 = vmul.f32 %v548, %v445
      %v557 = vmul.f32 %v549, %v445
      %v558 = vmul.f32 %v550, %v445
      %v559 = vmul.f32 %v551, %v445
      %v560 = vmul.f32 %v552, %v445
      %v561 = vmul.f32 %v553, %v445
      %v562 = vadd.f32 %v554, %v459
      %v563 = vadd.f32 %v555, %v459
      %v564 = vadd.f32 %v556, %v459
      %v565 = vadd.f32 %v557, %v459
      %v566 = vadd.f32 %v558, %v459
      %v567 = vadd.f32 %v559, %v459
      %v568 = vadd.f32 %v560, %v459
      %v569 = vadd.f32 %v561, %v459
      %v570 = vmax.f32 %v562, 0.0
      %v571 = vmax.f32 %v563, 0.0
      %v572 = vmax.f32 %v564, 0.0
      %v573 = vmax.f32 %v565, 0.0
      %v574 = vmax.f32 %v566, 0.0
      %v575 = vmax.f32 %v567, 0.0
      %v576 = vmax.f32 %v568, 0.0
      %v577 = vmax.f32 %v569, 0.0
      %s578 = scalar_lea.vmem [#allocation2], 160
      %579 = vst.msk [vmem:[%s578] sm:$0xff] %vm478, %v570
      %580 = vst.msk [vmem:[%s578 + $0x10] sm:$0xff] %vm478, %v571
      %581 = vst.msk [vmem:[%s578 + $0x20] sm:$0xff] %vm478, %v572
      %582 = vst.msk [vmem:[%s578 + $0x30] sm:$0xff] %vm478, %v573
      %583 = vst.msk [vmem:[%s578 + $0x40] sm:$0xff] %vm478, %v574
      %584 = vst.msk [vmem:[%s578 + $0x50] sm:$0xff] %vm478, %v575
      %585 = vst.msk [vmem:[%s578 + $0x60] sm:$0xff] %vm478, %v576
      %586 = vst.msk [vmem:[%s578 + $0x70] sm:$0xff] %vm478, %v577
      %s587 = scalar_lea.vmem %s324, 96
      %v588 = vld [vmem:[%s587] sm:$0xf]
      %v589 = vld [vmem:[%s587 + $0x4] sm:$0xf]
      %v590 = vld [vmem:[%s587 + $0x8] sm:$0xf]
      %v591 = vld [vmem:[%s587 + $0xc] sm:$0xf]
      %v592 = vld [vmem:[%s587 + $0x10] sm:$0xf]
      %v593 = vld [vmem:[%s587 + $0x14] sm:$0xf]
      %v594 = vld [vmem:[%s587 + $0x18] sm:$0xf]
      %v595 = vld [vmem:[%s587 + $0x1c] sm:$0xf]
      %v596 = vunpack.c.l.bf16 %v588
      %v597 = vunpack.c.l.bf16 %v589
      %v598 = vunpack.c.l.bf16 %v590
      %v599 = vunpack.c.l.bf16 %v591
      %v600 = vunpack.c.l.bf16 %v592
      %v601 = vunpack.c.l.bf16 %v593
      %v602 = vunpack.c.l.bf16 %v594
      %v603 = vunpack.c.l.bf16 %v595
      %v604 = vmul.f32 %v596, %v445
      %v605 = vmul.f32 %v597, %v445
      %v606 = vmul.f32 %v598, %v445
      %v607 = vmul.f32 %v599, %v445
      %v608 = vmul.f32 %v600, %v445
      %v609 = vmul.f32 %v601, %v445
      %v610 = vmul.f32 %v602, %v445
      %v611 = vmul.f32 %v603, %v445
      %v612 = vadd.f32 %v604, %v459
      %v613 = vadd.f32 %v605, %v459
      %v614 = vadd.f32 %v606, %v459
      %v615 = vadd.f32 %v607, %v459
      %v616 = vadd.f32 %v608, %v459
      %v617 = vadd.f32 %v609, %v459
      %v618 = vadd.f32 %v610, %v459
      %v619 = vadd.f32 %v611, %v459
      %v620 = vmax.f32 %v612, 0.0
      %v621 = vmax.f32 %v613, 0.0
      %v622 = vmax.f32 %v614, 0.0
      %v623 = vmax.f32 %v615, 0.0
      %v624 = vmax.f32 %v616, 0.0
      %v625 = vmax.f32 %v617, 0.0
      %v626 = vmax.f32 %v618, 0.0
      %v627 = vmax.f32 %v619, 0.0
      %s628 = scalar_lea.vmem [#allocation2], 16
      %629 = vst.msk [vmem:[%s628 + $0x1] sm:$0xff] %vm478, %v620
      %630 = vst.msk [vmem:[%s628 + $0x11] sm:$0xff] %vm478, %v621
      %631 = vst.msk [vmem:[%s628 + $0x21] sm:$0xff] %vm478, %v622
      %632 = vst.msk [vmem:[%s628 + $0x31] sm:$0xff] %vm478, %v623
      %633 = vst.msk [vmem:[%s628 + $0x41] sm:$0xff] %vm478, %v624
      %634 = vst.msk [vmem:[%s628 + $0x51] sm:$0xff] %vm478, %v625
      %635 = vst.msk [vmem:[%s628 + $0x61] sm:$0xff] %vm478, %v626
      %636 = vst.msk [vmem:[%s628 + $0x71] sm:$0xff] %vm478, %v627
      %v637 = vld [vmem:[#allocation2] sm:$0xff]
      %v638 = vld [vmem:[#allocation2 + $0x10] sm:$0xff]
      %v639 = vld [vmem:[#allocation2 + $0x20] sm:$0xff]
      %v640 = vld [vmem:[#allocation2 + $0x30] sm:$0xff]
      %v641 = vld [vmem:[#allocation2 + $0x40] sm:$0xff]
      %v642 = vld [vmem:[#allocation2 + $0x50] sm:$0xff]
      %v643 = vld [vmem:[#allocation2 + $0x60] sm:$0xff]
      %v644 = vld [vmem:[#allocation2 + $0x70] sm:$0xff]
      %s645 = scalar_lea.vmem [#allocation2], 144
      %v646 = vld [vmem:[%s645] sm:$0xff]
      %v647 = vld [vmem:[%s645 + $0x10] sm:$0xff]
      %v648 = vld [vmem:[%s645 + $0x20] sm:$0xff]
      %v649 = vld [vmem:[%s645 + $0x30] sm:$0xff]
      %v650 = vld [vmem:[%s645 + $0x40] sm:$0xff]
      %v651 = vld [vmem:[%s645 + $0x50] sm:$0xff]
      %v652 = vld [vmem:[%s645 + $0x60] sm:$0xff]
      %v653 = vld [vmem:[%s645 + $0x70] sm:$0xff]
      %v654 = vld [vmem:[#allocation2 + $0x1] sm:$0xff]
      %v655 = vld [vmem:[#allocation2 + $0x11] sm:$0xff]
      %v656 = vld [vmem:[#allocation2 + $0x21] sm:$0xff]
      %v657 = vld [vmem:[#allocation2 + $0x31] sm:$0xff]
      %v658 = vld [vmem:[#allocation2 + $0x41] sm:$0xff]
      %v659 = vld [vmem:[#allocation2 + $0x51] sm:$0xff]
      %v660 = vld [vmem:[#allocation2 + $0x61] sm:$0xff]
      %v661 = vld [vmem:[#allocation2 + $0x71] sm:$0xff]
      %v662 = vld [vmem:[%s528] sm:$0xff]
      %v663 = vld [vmem:[%s528 + $0x10] sm:$0xff]
      %v664 = vld [vmem:[%s528 + $0x20] sm:$0xff]
      %v665 = vld [vmem:[%s528 + $0x30] sm:$0xff]
      %v666 = vld [vmem:[%s528 + $0x40] sm:$0xff]
      %v667 = vld [vmem:[%s528 + $0x50] sm:$0xff]
      %v668 = vld [vmem:[%s528 + $0x60] sm:$0xff]
      %v669 = vld [vmem:[%s528 + $0x70] sm:$0xff]
      %v670 = vld [vmem:[%s477] sm:$0xff]
      %v671 = vld [vmem:[%s477 + $0x10] sm:$0xff]
      %v672 = vld [vmem:[%s477 + $0x20] sm:$0xff]
      %v673 = vld [vmem:[%s477 + $0x30] sm:$0xff]
      %v674 = vld [vmem:[%s477 + $0x40] sm:$0xff]
      %v675 = vld [vmem:[%s477 + $0x50] sm:$0xff]
      %v676 = vld [vmem:[%s477 + $0x60] sm:$0xff]
      %v677 = vld [vmem:[%s477 + $0x70] sm:$0xff]
      %v678 = vld [vmem:[%s528 + $0x1] sm:$0xff]
      %v679 = vld [vmem:[%s528 + $0x11] sm:$0xff]
      %v680 = vld [vmem:[%s528 + $0x21] sm:$0xff]
      %v681 = vld [vmem:[%s528 + $0x31] sm:$0xff]
      %v682 = vld [vmem:[%s528 + $0x41] sm:$0xff]
      %v683 = vld [vmem:[%s528 + $0x51] sm:$0xff]
      %v684 = vld [vmem:[%s528 + $0x61] sm:$0xff]
      %v685 = vld [vmem:[%s528 + $0x71] sm:$0xff]
      %v686 = vld [vmem:[%s628] sm:$0xff]
      %v687 = vld [vmem:[%s628 + $0x10] sm:$0xff]
      %v688 = vld [vmem:[%s628 + $0x20] sm:$0xff]
      %v689 = vld [vmem:[%s628 + $0x30] sm:$0xff]
      %v690 = vld [vmem:[%s628 + $0x40] sm:$0xff]
      %v691 = vld [vmem:[%s628 + $0x50] sm:$0xff]
      %v692 = vld [vmem:[%s628 + $0x60] sm:$0xff]
      %v693 = vld [vmem:[%s628 + $0x70] sm:$0xff]
      %v694 = vld [vmem:[%s578] sm:$0xff]
      %v695 = vld [vmem:[%s578 + $0x10] sm:$0xff]
      %v696 = vld [vmem:[%s578 + $0x20] sm:$0xff]
      %v697 = vld [vmem:[%s578 + $0x30] sm:$0xff]
      %v698 = vld [vmem:[%s578 + $0x40] sm:$0xff]
      %v699 = vld [vmem:[%s578 + $0x50] sm:$0xff]
      %v700 = vld [vmem:[%s578 + $0x60] sm:$0xff]
      %v701 = vld [vmem:[%s578 + $0x70] sm:$0xff]
      %v702 = vld [vmem:[%s628 + $0x1] sm:$0xff]
      %v703 = vld [vmem:[%s628 + $0x11] sm:$0xff]
      %v704 = vld [vmem:[%s628 + $0x21] sm:$0xff]
      %v705 = vld [vmem:[%s628 + $0x31] sm:$0xff]
      %v706 = vld [vmem:[%s628 + $0x41] sm:$0xff]
      %v707 = vld [vmem:[%s628 + $0x51] sm:$0xff]
      %v708 = vld [vmem:[%s628 + $0x61] sm:$0xff]
      %v709 = vld [vmem:[%s628 + $0x71] sm:$0xff]
      %718 = vrot.lane.b32.xlu0 %v646, 4
      %v719 = vpop.permute.xlu0 %718
      %720 = vrot.lane.b32.xlu0 %v647, 4
      %v721 = vpop.permute.xlu0 %720
      %722 = vrot.lane.b32.xlu0 %v648, 4
      %v723 = vpop.permute.xlu0 %722
      %724 = vrot.lane.b32.xlu0 %v649, 4
      %v725 = vpop.permute.xlu0 %724
      %726 = vrot.lane.b32.xlu0 %v650, 4
      %v727 = vpop.permute.xlu0 %726
      %728 = vrot.lane.b32.xlu0 %v651, 4
      %v729 = vpop.permute.xlu0 %728
      %730 = vrot.lane.b32.xlu0 %v652, 4
      %v731 = vpop.permute.xlu0 %730
      %732 = vrot.lane.b32.xlu0 %v653, 4
      %v733 = vpop.permute.xlu0 %732
      %750 = vrot.lane.b32.xlu0 %v654, 8
      %v751 = vpop.permute.xlu0 %750
      %752 = vrot.lane.b32.xlu0 %v655, 8
      %v753 = vpop.permute.xlu0 %752
      %754 = vrot.lane.b32.xlu0 %v656, 8
      %v755 = vpop.permute.xlu0 %754
      %756 = vrot.lane.b32.xlu0 %v657, 8
      %v757 = vpop.permute.xlu0 %756
      %758 = vrot.lane.b32.xlu0 %v658, 8
      %v759 = vpop.permute.xlu0 %758
      %760 = vrot.lane.b32.xlu0 %v659, 8
      %v761 = vpop.permute.xlu0 %760
      %762 = vrot.lane.b32.xlu0 %v660, 8
      %v763 = vpop.permute.xlu0 %762
      %764 = vrot.lane.b32.xlu0 %v661, 8
      %v765 = vpop.permute.xlu0 %764
      %782 = vrot.lane.b32.xlu0 %v662, 12
      %v783 = vpop.permute.xlu0 %782
      %784 = vrot.lane.b32.xlu0 %v663, 12
      %v785 = vpop.permute.xlu0 %784
      %786 = vrot.lane.b32.xlu0 %v664, 12
      %v787 = vpop.permute.xlu0 %786
      %788 = vrot.lane.b32.xlu0 %v665, 12
      %v789 = vpop.permute.xlu0 %788
      %790 = vrot.lane.b32.xlu0 %v666, 12
      %v791 = vpop.permute.xlu0 %790
      %792 = vrot.lane.b32.xlu0 %v667, 12
      %v793 = vpop.permute.xlu0 %792
      %794 = vrot.lane.b32.xlu0 %v668, 12
      %v795 = vpop.permute.xlu0 %794
      %796 = vrot.lane.b32.xlu0 %v669, 12
      %v797 = vpop.permute.xlu0 %796
      %814 = vrot.lane.b32.xlu0 %v670, 16
      %v815 = vpop.permute.xlu0 %814
      %816 = vrot.lane.b32.xlu0 %v671, 16
      %v817 = vpop.permute.xlu0 %816
      %818 = vrot.lane.b32.xlu0 %v672, 16
      %v819 = vpop.permute.xlu0 %818
      %820 = vrot.lane.b32.xlu0 %v673, 16
      %v821 = vpop.permute.xlu0 %820
      %822 = vrot.lane.b32.xlu0 %v674, 16
      %v823 = vpop.permute.xlu0 %822
      %824 = vrot.lane.b32.xlu0 %v675, 16
      %v825 = vpop.permute.xlu0 %824
      %826 = vrot.lane.b32.xlu0 %v676, 16
      %v827 = vpop.permute.xlu0 %826
      %828 = vrot.lane.b32.xlu0 %v677, 16
      %v829 = vpop.permute.xlu0 %828
      %846 = vrot.lane.b32.xlu0 %v678, 20
      %v847 = vpop.permute.xlu0 %846
      %848 = vrot.lane.b32.xlu0 %v679, 20
      %v849 = vpop.permute.xlu0 %848
      %850 = vrot.lane.b32.xlu0 %v680, 20
      %v851 = vpop.permute.xlu0 %850
      %852 = vrot.lane.b32.xlu0 %v681, 20
      %v853 = vpop.permute.xlu0 %852
      %854 = vrot.lane.b32.xlu0 %v682, 20
      %v855 = vpop.permute.xlu0 %854
      %856 = vrot.lane.b32.xlu0 %v683, 20
      %v857 = vpop.permute.xlu0 %856
      %858 = vrot.lane.b32.xlu0 %v684, 20
      %v859 = vpop.permute.xlu0 %858
      %860 = vrot.lane.b32.xlu0 %v685, 20
      %v861 = vpop.permute.xlu0 %860
      %878 = vrot.lane.b32.xlu0 %v686, 24
      %v879 = vpop.permute.xlu0 %878
      %880 = vrot.lane.b32.xlu0 %v687, 24
      %v881 = vpop.permute.xlu0 %880
      %882 = vrot.lane.b32.xlu0 %v688, 24
      %v883 = vpop.permute.xlu0 %882
      %884 = vrot.lane.b32.xlu0 %v689, 24
      %v885 = vpop.permute.xlu0 %884
      %886 = vrot.lane.b32.xlu0 %v690, 24
      %v887 = vpop.permute.xlu0 %886
      %888 = vrot.lane.b32.xlu0 %v691, 24
      %v889 = vpop.permute.xlu0 %888
      %890 = vrot.lane.b32.xlu0 %v692, 24
      %v891 = vpop.permute.xlu0 %890
      %892 = vrot.lane.b32.xlu0 %v693, 24
      %v893 = vpop.permute.xlu0 %892
      %910 = vrot.lane.b32.xlu0 %v694, 28
      %v911 = vpop.permute.xlu0 %910
      %912 = vrot.lane.b32.xlu0 %v695, 28
      %v913 = vpop.permute.xlu0 %912
      %914 = vrot.lane.b32.xlu0 %v696, 28
      %v915 = vpop.permute.xlu0 %914
      %916 = vrot.lane.b32.xlu0 %v697, 28
      %v917 = vpop.permute.xlu0 %916
      %918 = vrot.lane.b32.xlu0 %v698, 28
      %v919 = vpop.permute.xlu0 %918
      %920 = vrot.lane.b32.xlu0 %v699, 28
      %v921 = vpop.permute.xlu0 %920
      %922 = vrot.lane.b32.xlu0 %v700, 28
      %v923 = vpop.permute.xlu0 %922
      %924 = vrot.lane.b32.xlu0 %v701, 28
      %v925 = vpop.permute.xlu0 %924
      %942 = vrot.lane.b32.xlu0 %v702, 32
      %v943 = vpop.permute.xlu0 %942
      %944 = vrot.lane.b32.xlu0 %v703, 32
      %v945 = vpop.permute.xlu0 %944
      %946 = vrot.lane.b32.xlu0 %v704, 32
      %v947 = vpop.permute.xlu0 %946
      %948 = vrot.lane.b32.xlu0 %v705, 32
      %v949 = vpop.permute.xlu0 %948
      %950 = vrot.lane.b32.xlu0 %v706, 32
      %v951 = vpop.permute.xlu0 %950
      %952 = vrot.lane.b32.xlu0 %v707, 32
      %v953 = vpop.permute.xlu0 %952
      %954 = vrot.lane.b32.xlu0 %v708, 32
      %v955 = vpop.permute.xlu0 %954
      %956 = vrot.lane.b32.xlu0 %v709, 32
      %v957 = vpop.permute.xlu0 %956
      %v966 = vsel %vm478, %v637, %v719
      %v967 = vsel %vm478, %v638, %v721
      %v968 = vsel %vm478, %v639, %v723
      %v969 = vsel %vm478, %v640, %v725
      %v970 = vsel %vm478, %v641, %v727
      %v971 = vsel %vm478, %v642, %v729
      %v972 = vsel %vm478, %v643, %v731
      %v973 = vsel %vm478, %v644, %v733
      %vm974 = vcmask 64512
      %v975 = vsel %vm974, %v966, %v751
      %v976 = vsel %vm974, %v967, %v753
      %v977 = vsel %vm974, %v968, %v755
      %v978 = vsel %vm974, %v969, %v757
      %v979 = vsel %vm974, %v970, %v759
      %v980 = vsel %vm974, %v971, %v761
      %v981 = vsel %vm974, %v972, %v763
      %v982 = vsel %vm974, %v973, %v765
      %vm983 = vcmask 97280
      %v984 = vsel %vm983, %v975, %v783
      %v985 = vsel %vm983, %v976, %v785
      %v986 = vsel %vm983, %v977, %v787
      %v987 = vsel %vm983, %v978, %v789
      %v988 = vsel %vm983, %v979, %v791
      %v989 = vsel %vm983, %v980, %v793
      %v990 = vsel %vm983, %v981, %v795
      %v991 = vsel %vm983, %v982, %v797
      %vm992 = vcmask 130048
      %v993 = vsel %vm992, %v984, %v815
      %v994 = vsel %vm992, %v985, %v817
      %v995 = vsel %vm992, %v986, %v819
      %v996 = vsel %vm992, %v987, %v821
      %v997 = vsel %vm992, %v988, %v823
      %v998 = vsel %vm992, %v989, %v825
      %v999 = vsel %vm992, %v990, %v827
      %v1000 = vsel %vm992, %v991, %v829
      %vm1001 = vcmask 162816
      %v1002 = vsel %vm1001, %v993, %v847
      %v1003 = vsel %vm1001, %v994, %v849
      %v1004 = vsel %vm1001, %v995, %v851
      %v1005 = vsel %vm1001, %v996, %v853
      %v1006 = vsel %vm1001, %v997, %v855
      %v1007 = vsel %vm1001, %v998, %v857
      %v1008 = vsel %vm1001, %v999, %v859
      %v1009 = vsel %vm1001, %v1000, %v861
      %vm1010 = vcmask 195584
      %v1011 = vsel %vm1010, %v1002, %v879
      %v1012 = vsel %vm1010, %v1003, %v881
      %v1013 = vsel %vm1010, %v1004, %v883
      %v1014 = vsel %vm1010, %v1005, %v885
      %v1015 = vsel %vm1010, %v1006, %v887
      %v1016 = vsel %vm1010, %v1007, %v889
      %v1017 = vsel %vm1010, %v1008, %v891
      %v1018 = vsel %vm1010, %v1009, %v893
      %vm1019 = vcmask 228352
      %v1020 = vsel %vm1019, %v1011, %v911
      %v1021 = vsel %vm1019, %v1012, %v913
      %v1022 = vsel %vm1019, %v1013, %v915
      %v1023 = vsel %vm1019, %v1014, %v917
      %v1024 = vsel %vm1019, %v1015, %v919
      %v1025 = vsel %vm1019, %v1016, %v921
      %v1026 = vsel %vm1019, %v1017, %v923
      %v1027 = vsel %vm1019, %v1018, %v925
      %vm1028 = vcmask 261120
      %v1029 = vsel %vm1028, %v1020, %v943
      %v1030 = vsel %vm1028, %v1021, %v945
      %v1031 = vsel %vm1028, %v1022, %v947
      %v1032 = vsel %vm1028, %v1023, %v949
      %v1033 = vsel %vm1028, %v1024, %v951
      %v1034 = vsel %vm1028, %v1025, %v953
      %v1035 = vsel %vm1028, %v1026, %v955
      %v1036 = vsel %vm1028, %v1027, %v957
      %v1037 = vpack.c.bf16 %v1030, %v1029
      %v1038 = vpack.c.bf16 %v1032, %v1031
      %v1039 = vpack.c.bf16 %v1034, %v1033
      %v1040 = vpack.c.bf16 %v1036, %v1035
      %vm1041 = vcmask 293888
      %1042 = vst.msk [vmem:[#allocation3] sm:$0xff] %vm1041, %v1037
      %1043 = vst.msk [vmem:[#allocation3 + $0x8] sm:$0xff] %vm1041, %v1038
      %1044 = vst.msk [vmem:[#allocation3 + $0x10] sm:$0xff] %vm1041, %v1039
      %1045 = vst.msk [vmem:[#allocation3 + $0x18] sm:$0xff] %vm1041, %v1040
      %v1046 = vld [vmem:[#allocation3] sm:$0xff]
      %v1047 = vld [vmem:[#allocation3 + $0x8] sm:$0xff]
      %v1048 = vld [vmem:[#allocation3 + $0x10] sm:$0xff]
      %v1049 = vld [vmem:[#allocation3 + $0x18] sm:$0xff]
      %v1050 = vld [vmem:[%s3] sm:$0xf]
      %v1051 = vld [vmem:[%s3 + $0x4] sm:$0xf]
      %v1052 = vld [vmem:[%s3 + $0x8] sm:$0xf]
      %v1053 = vld [vmem:[%s3 + $0xc] sm:$0xf]
      %v1054 = vld [vmem:[%s3 + $0x10] sm:$0x3]
      %v1060 = vunpack.c.l.b16 %v1050
      %v1061 = vunpack.c.l.b16 %v1051
      %v1062 = vunpack.c.l.b16 %v1052
      %v1063 = vunpack.c.l.b16 %v1053
      %v1064 = vunpack.c.l.b16 %v1054
      %v1065 = vpack.c.b16 %v1061, %v1060
      %v1066 = vpack.c.b16 %v1063, %v1062
      %v1067 = vpack.c.b16 %v1064, %v1064
      %v1071 = vsel %vm1041, %v1046, 0
      %v1074 = vsel %vm1041, %v1047, 0
      %v1077 = vsel %vm1041, %v1048, 0
      %v1080 = vsel %vm1041, %v1049, 0
      %vm1082 = vcmask 1041408
      %v1084 = vsel %vm1082, %v1067, 0
      %1086 = vmatprep.subr.bf16.mxu0 0
      %1087 = vmatpush1.bf16.msra.mxu0 %v1065
      %1088 = vmatprep.subr.bf16.mxu0 0
      %1089 = vmatpush1.bf16.msra.mxu0 %v1066
      %1090 = vmatprep.subr.bf16.mxu0 0
      %1091 = vmatpush1.bf16.msra.mxu0 %v1084
      %1092 = vmatprep.subr.bf16.mxu0 0
      %1093 = vmatpush1.bf16.msra.mxu0 0
      %1094 = vmatprep.subr.bf16.mxu0 0
      %1095 = vmatpush1.bf16.msra.mxu0 0
      %1096 = vmatprep.subr.bf16.mxu0 0
      %1097 = vmatpush1.bf16.msra.mxu0 0
      %1098 = vmatprep.subr.bf16.mxu0 0
      %1099 = vmatpush1.bf16.msra.mxu0 0
      %1100 = vmatprep.subr.bf16.mxu0 0
      %1101 = vmatpush1.bf16.msra.mxu0 0
      %1102 = vmatprep.subr.bf16.mxu0 0
      %1103 = vmatpush1.bf16.msra.mxu0 0
      %1104 = vmatprep.subr.bf16.mxu0 0
      %1105 = vmatpush1.bf16.msra.mxu0 0
      %1106 = vmatprep.subr.bf16.mxu0 0
      %1107 = vmatpush1.bf16.msra.mxu0 0
      %1108 = vmatprep.subr.bf16.mxu0 0
      %1109 = vmatpush1.bf16.msra.mxu0 0
      %1110 = vmatprep.subr.bf16.mxu0 0
      %1111 = vmatpush1.bf16.msra.mxu0 0
      %1112 = vmatprep.subr.bf16.mxu0 0
      %1113 = vmatpush1.bf16.msra.mxu0 0
      %1114 = vmatprep.subr.bf16.mxu0 0
      %1115 = vmatpush1.bf16.msra.mxu0 0
      %1116 = vmatprep.subr.bf16.mxu0 0
      %1117 = vmatpush1.bf16.msra.mxu0 0
      %1118 = vmatprep.mubr.bf16.mxu0 0
      %1119 = vmatmul.mubr.bf16.gmra.mrb[0].mxu0 %v1071
      %v1120 = vpop.f32.mrb[0].mxu0
      %v1121 = vadd.f32 0.0, %v1120
      %v1122 = vpop.f32.mrb[0].mxu0
      %v1123 = vpop.f32.mrb[0].mxu0
      %v1124 = vadd.f32 0.0, %v1123
      %v1125 = vpop.f32.mrb[0].mxu0
      %1126 = vmatprep.mubr.bf16.mxu0 0
      %1127 = vmatmul.mubr.bf16.gmra.mrb[0].mxu0 %v1074
      %v1128 = vpop.f32.mrb[0].mxu0
      %v1129 = vadd.f32 0.0, %v1128
      %v1130 = vpop.f32.mrb[0].mxu0
      %v1131 = vpop.f32.mrb[0].mxu0
      %v1132 = vadd.f32 0.0, %v1131
      %v1133 = vpop.f32.mrb[0].mxu0
      %1134 = vmatprep.mubr.bf16.mxu0 0
      %1135 = vmatmul.mubr.bf16.gmra.mrb[0].mxu0 %v1077
      %v1136 = vpop.f32.mrb[0].mxu0
      %v1137 = vadd.f32 0.0, %v1136
      %v1138 = vpop.f32.mrb[0].mxu0
      %v1139 = vpop.f32.mrb[0].mxu0
      %v1140 = vadd.f32 0.0, %v1139
      %v1141 = vpop.f32.mrb[0].mxu0
      %1142 = vmatprep.mubr.bf16.mxu0 0
      %1143 = vmatmul.mubr.bf16.gmra.mrb[0].mxu0 %v1080
      %v1144 = vpop.f32.mrb[0].mxu0
      %v1145 = vadd.f32 0.0, %v1144
      %v1146 = vpop.f32.mrb[0].mxu0
      %v1147 = vpop.f32.mrb[0].mxu0
      %v1148 = vadd.f32 0.0, %v1147
      %v1149 = vpop.f32.mrb[0].mxu0
      %1150 = vdwg.mxu0
      %v1151 = vpack.c.bf16 %v1124, %v1121
      %v1152 = vpack.c.bf16 %v1132, %v1129
      %v1153 = vpack.c.bf16 %v1140, %v1137
      %v1154 = vpack.c.bf16 %v1148, %v1145
      %v1159 = vunpack.c.l.b16 %v1151
      %v1160 = vunpack.c.h.b16 %v1151
      %v1161 = vunpack.c.l.b16 %v1152
      %v1162 = vunpack.c.h.b16 %v1152
      %v1163 = vunpack.c.l.b16 %v1153
      %v1164 = vunpack.c.h.b16 %v1153
      %v1165 = vunpack.c.l.b16 %v1154
      %v1166 = vunpack.c.h.b16 %v1154
      %v1167 = vpack.c.b16 %v1159, %v1159
      %v1168 = vpack.c.b16 %v1160, %v1160
      %v1169 = vpack.c.b16 %v1161, %v1161
      %v1170 = vpack.c.b16 %v1162, %v1162
      %v1171 = vpack.c.b16 %v1163, %v1163
      %v1172 = vpack.c.b16 %v1164, %v1164
      %v1173 = vpack.c.b16 %v1165, %v1165
      %v1174 = vpack.c.b16 %v1166, %v1166
      %vm1183 = vcmask 60416
      %1184 = vst.msk [vmem:[%s330] sm:$0xf] %vm1183, %v1167
      %1185 = vst.msk [vmem:[%s330 + $0x4] sm:$0xf] %vm1183, %v1168
      %1186 = vst.msk [vmem:[%s330 + $0x8] sm:$0xf] %vm1183, %v1169
      %1187 = vst.msk [vmem:[%s330 + $0xc] sm:$0xf] %vm1183, %v1170
      %1188 = vst.msk [vmem:[%s330 + $0x10] sm:$0xf] %vm1183, %v1171
      %1189 = vst.msk [vmem:[%s330 + $0x14] sm:$0xf] %vm1183, %v1172
      %1190 = vst.msk [vmem:[%s330 + $0x18] sm:$0xf] %vm1183, %v1173
      %1191 = vst.msk [vmem:[%s330 + $0x1c] sm:$0xf] %vm1183, %v1174
      %v1192 = vsel %vm974, %v1121, 0.0
      %v1193 = vsel %vm974, %v1124, 0.0
      %v1194 = vadd.f32 %v1192, %v1193
      %v1195 = vsel %vm974, %v1129, 0.0
      %v1196 = vadd.f32 %v1194, %v1195
      %v1197 = vsel %vm974, %v1132, 0.0
      %v1198 = vadd.f32 %v1196, %v1197
      %v1199 = vsel %vm974, %v1137, 0.0
      %v1200 = vadd.f32 %v1198, %v1199
      %v1201 = vsel %vm974, %v1140, 0.0
      %v1202 = vadd.f32 %v1200, %v1201
      %v1203 = vsel %vm974, %v1145, 0.0
      %v1204 = vadd.f32 %v1202, %v1203
      %v1205 = vsel %vm974, %v1148, 0.0
      %v1206 = vadd.f32 %v1204, %v1205
      %v1207 = vrot.slane %v1206, 4
      %v1208 = vadd.f32 %v1206, %v1207
      %v1209 = vrot.slane %v1208, 2
      %v1210 = vadd.f32 %v1208, %v1209
      %v1211 = vrot.slane %v1210, 1
      %v1212 = vadd.f32 %v1210, %v1211
      %v1213 = vmul.f32 %v1121, %v1121
      %v1214 = vmul.f32 %v1124, %v1124
      %v1215 = vmul.f32 %v1129, %v1129
      %v1216 = vmul.f32 %v1132, %v1132
      %v1217 = vmul.f32 %v1137, %v1137
      %v1218 = vmul.f32 %v1140, %v1140
      %v1219 = vmul.f32 %v1145, %v1145
      %v1220 = vmul.f32 %v1148, %v1148
      %v1221 = vsel %vm974, %v1213, 0.0
      %v1222 = vsel %vm974, %v1214, 0.0
      %v1223 = vadd.f32 %v1221, %v1222
      %v1224 = vsel %vm974, %v1215, 0.0
      %v1225 = vadd.f32 %v1223, %v1224
      %v1226 = vsel %vm974, %v1216, 0.0
      %v1227 = vadd.f32 %v1225, %v1226
      %v1228 = vsel %vm974, %v1217, 0.0
      %v1229 = vadd.f32 %v1227, %v1228
      %v1230 = vsel %vm974, %v1218, 0.0
      %v1231 = vadd.f32 %v1229, %v1230
      %v1232 = vsel %vm974, %v1219, 0.0
      %v1233 = vadd.f32 %v1231, %v1232
      %v1234 = vsel %vm974, %v1220, 0.0
      %v1235 = vadd.f32 %v1233, %v1234
      %v1236 = vrot.slane %v1235, 4
      %v1237 = vadd.f32 %v1235, %v1236
      %v1238 = vrot.slane %v1237, 2
      %v1239 = vadd.f32 %v1237, %v1238
      %v1240 = vrot.slane %v1239, 1
      %v1241 = vadd.f32 %v1239, %v1240
      %vm1242 = vcmask 1040384
      %v1243 = vsel %vm1242, %v1212, %v1241
      %vm1244 = vcmask 58368
      %1245 = vst.msk [vmem:[%s334] sm:$0x3] %vm1244, %v1243
      %v1246 = vld [vmem:[%s324] sm:$0xf]
      %v1247 = vld [vmem:[%s324 + $0x4] sm:$0xf]
      %v1248 = vld [vmem:[%s324 + $0x8] sm:$0xf]
      %v1249 = vld [vmem:[%s324 + $0xc] sm:$0xf]
      %v1250 = vld [vmem:[%s324 + $0x10] sm:$0xf]
      %v1251 = vld [vmem:[%s324 + $0x14] sm:$0xf]
      %v1252 = vld [vmem:[%s324 + $0x18] sm:$0xf]
      %v1253 = vld [vmem:[%s324 + $0x1c] sm:$0xf]
      %v1254 = vunpack.c.l.bf16 %v1246
      %v1255 = vunpack.c.l.bf16 %v1247
      %v1256 = vunpack.c.l.bf16 %v1248
      %v1257 = vunpack.c.l.bf16 %v1249
      %v1258 = vunpack.c.l.bf16 %v1250
      %v1259 = vunpack.c.l.bf16 %v1251
      %v1260 = vunpack.c.l.bf16 %v1252
      %v1261 = vunpack.c.l.bf16 %v1253
      %v1262 = vpack.c.bf16 %v1255, %v1254
      %v1263 = vpack.c.bf16 %v1257, %v1256
      %v1264 = vpack.c.bf16 %v1259, %v1258
      %v1265 = vpack.c.bf16 %v1261, %v1260
      %v1266 = vld [vmem:[%s4] sm:$0x3]
      %v1268 = vsel %vm478, %v1262, 0
      %v1271 = vsel %vm478, %v1263, 0
      %v1274 = vsel %vm478, %v1264, 0
      %v1277 = vsel %vm478, %v1265, 0
      %v1280 = vsel %vm1082, %v1266, 0
      %1282 = vmatprep.subr.bf16.mxu0 0
      %1283 = vmatpush1.bf16.msra.mxu0 %v1280
      %1284 = vmatprep.subr.bf16.mxu0 0
      %1285 = vmatpush1.bf16.msra.mxu0 0
      %1286 = vmatprep.subr.bf16.mxu0 0
      %1287 = vmatpush1.bf16.msra.mxu0 0
      %1288 = vmatprep.subr.bf16.mxu0 0
      %1289 = vmatpush1.bf16.msra.mxu0 0
      %1290 = vmatprep.subr.bf16.mxu0 0
      %1291 = vmatpush1.bf16.msra.mxu0 0
      %1292 = vmatprep.subr.bf16.mxu0 0
      %1293 = vmatpush1.bf16.msra.mxu0 0
      %1294 = vmatprep.subr.bf16.mxu0 0
      %1295 = vmatpush1.bf16.msra.mxu0 0
      %1296 = vmatprep.subr.bf16.mxu0 0
      %1297 = vmatpush1.bf16.msra.mxu0 0
      %1298 = vmatprep.subr.bf16.mxu0 0
      %1299 = vmatpush1.bf16.msra.mxu0 0
      %1300 = vmatprep.subr.bf16.mxu0 0
      %1301 = vmatpush1.bf16.msra.mxu0 0
      %1302 = vmatprep.subr.bf16.mxu0 0
      %1303 = vmatpush1.bf16.msra.mxu0 0
      %1304 = vmatprep.subr.bf16.mxu0 0
      %1305 = vmatpush1.bf16.msra.mxu0 0
      %1306 = vmatprep.subr.bf16.mxu0 0
      %1307 = vmatpush1.bf16.msra.mxu0 0
      %1308 = vmatprep.subr.bf16.mxu0 0
      %1309 = vmatpush1.bf16.msra.mxu0 0
      %1310 = vmatprep.subr.bf16.mxu0 0
      %1311 = vmatpush1.bf16.msra.mxu0 0
      %1312 = vmatprep.subr.bf16.mxu0 0
      %1313 = vmatpush1.bf16.msra.mxu0 0
      %1314 = vmatprep.mubr.bf16.mxu0 0
      %1315 = vmatmul.mubr.bf16.gmra.mrb[0].mxu0 %v1268
      %v1316 = vpop.f32.mrb[0].mxu0
      %v1317 = vadd.f32 0.0, %v1316
      %v1318 = vpop.f32.mrb[0].mxu0
      %v1319 = vpop.f32.mrb[0].mxu0
      %v1320 = vadd.f32 0.0, %v1319
      %v1321 = vpop.f32.mrb[0].mxu0
      %1322 = vmatprep.mubr.bf16.mxu0 0
      %1323 = vmatmul.mubr.bf16.gmra.mrb[0].mxu0 %v1271
      %v1324 = vpop.f32.mrb[0].mxu0
      %v1325 = vadd.f32 0.0, %v1324
      %v1326 = vpop.f32.mrb[0].mxu0
      %v1327 = vpop.f32.mrb[0].mxu0
      %v1328 = vadd.f32 0.0, %v1327
      %v1329 = vpop.f32.mrb[0].mxu0
      %1330 = vmatprep.mubr.bf16.mxu0 0
      %1331 = vmatmul.mubr.bf16.gmra.mrb[0].mxu0 %v1274
      %v1332 = vpop.f32.mrb[0].mxu0
      %v1333 = vadd.f32 0.0, %v1332
      %v1334 = vpop.f32.mrb[0].mxu0
      %v1335 = vpop.f32.mrb[0].mxu0
      %v1336 = vadd.f32 0.0, %v1335
      %v1337 = vpop.f32.mrb[0].mxu0
      %1338 = vmatprep.mubr.bf16.mxu0 0
      %1339 = vmatmul.mubr.bf16.gmra.mrb[0].mxu0 %v1277
      %v1340 = vpop.f32.mrb[0].mxu0
      %v1341 = vadd.f32 0.0, %v1340
      %v1342 = vpop.f32.mrb[0].mxu0
      %v1343 = vpop.f32.mrb[0].mxu0
      %v1344 = vadd.f32 0.0, %v1343
      %v1345 = vpop.f32.mrb[0].mxu0
      %1346 = vdwg.mxu0
      %v1347 = vpack.c.bf16 %v1320, %v1317
      %v1348 = vpack.c.bf16 %v1328, %v1325
      %v1349 = vpack.c.bf16 %v1336, %v1333
      %v1350 = vpack.c.bf16 %v1344, %v1341
      %v1355 = vunpack.c.l.b16 %v1347
      %v1356 = vunpack.c.h.b16 %v1347
      %v1357 = vunpack.c.l.b16 %v1348
      %v1358 = vunpack.c.h.b16 %v1348
      %v1359 = vunpack.c.l.b16 %v1349
      %v1360 = vunpack.c.h.b16 %v1349
      %v1361 = vunpack.c.l.b16 %v1350
      %v1362 = vunpack.c.h.b16 %v1350
      %v1363 = vpack.c.b16 %v1355, %v1355
      %v1364 = vpack.c.b16 %v1356, %v1356
      %v1365 = vpack.c.b16 %v1357, %v1357
      %v1366 = vpack.c.b16 %v1358, %v1358
      %v1367 = vpack.c.b16 %v1359, %v1359
      %v1368 = vpack.c.b16 %v1360, %v1360
      %v1369 = vpack.c.b16 %v1361, %v1361
      %v1370 = vpack.c.b16 %v1362, %v1362
      %1379 = vst.msk [vmem:[%s339] sm:$0xf] %vm1183, %v1363
      %1380 = vst.msk [vmem:[%s339 + $0x4] sm:$0xf] %vm1183, %v1364
      %1381 = vst.msk [vmem:[%s339 + $0x8] sm:$0xf] %vm1183, %v1365
      %1382 = vst.msk [vmem:[%s339 + $0xc] sm:$0xf] %vm1183, %v1366
      %1383 = vst.msk [vmem:[%s339 + $0x10] sm:$0xf] %vm1183, %v1367
      %1384 = vst.msk [vmem:[%s339 + $0x14] sm:$0xf] %vm1183, %v1368
      %1385 = vst.msk [vmem:[%s339 + $0x18] sm:$0xf] %vm1183, %v1369
      %1386 = vst.msk [vmem:[%s339 + $0x1c] sm:$0xf] %vm1183, %v1370
      %v1387 = vsel %vm974, %v1317, 0.0
      %v1388 = vsel %vm974, %v1320, 0.0
      %v1389 = vadd.f32 %v1387, %v1388
      %v1390 = vsel %vm974, %v1325, 0.0
      %v1391 = vadd.f32 %v1389, %v1390
      %v1392 = vsel %vm974, %v1328, 0.0
      %v1393 = vadd.f32 %v1391, %v1392
      %v1394 = vsel %vm974, %v1333, 0.0
      %v1395 = vadd.f32 %v1393, %v1394
      %v1396 = vsel %vm974, %v1336, 0.0
      %v1397 = vadd.f32 %v1395, %v1396
      %v1398 = vsel %vm974, %v1341, 0.0
      %v1399 = vadd.f32 %v1397, %v1398
      %v1400 = vsel %vm974, %v1344, 0.0
      %v1401 = vadd.f32 %v1399, %v1400
      %v1402 = vrot.slane %v1401, 4
      %v1403 = vadd.f32 %v1401, %v1402
      %v1404 = vrot.slane %v1403, 2
      %v1405 = vadd.f32 %v1403, %v1404
      %v1406 = vrot.slane %v1405, 1
      %v1407 = vadd.f32 %v1405, %v1406
      %v1408 = vmul.f32 %v1317, %v1317
      %v1409 = vmul.f32 %v1320, %v1320
      %v1410 = vmul.f32 %v1325, %v1325
      %v1411 = vmul.f32 %v1328, %v1328
      %v1412 = vmul.f32 %v1333, %v1333
      %v1413 = vmul.f32 %v1336, %v1336
      %v1414 = vmul.f32 %v1341, %v1341
      %v1415 = vmul.f32 %v1344, %v1344
      %v1416 = vsel %vm974, %v1408, 0.0
      %v1417 = vsel %vm974, %v1409, 0.0
      %v1418 = vadd.f32 %v1416, %v1417
      %v1419 = vsel %vm974, %v1410, 0.0
      %v1420 = vadd.f32 %v1418, %v1419
      %v1421 = vsel %vm974, %v1411, 0.0
      %v1422 = vadd.f32 %v1420, %v1421
      %v1423 = vsel %vm974, %v1412, 0.0
      %v1424 = vadd.f32 %v1422, %v1423
      %v1425 = vsel %vm974, %v1413, 0.0
      %v1426 = vadd.f32 %v1424, %v1425
      %v1427 = vsel %vm974, %v1414, 0.0
      %v1428 = vadd.f32 %v1426, %v1427
      %v1429 = vsel %vm974, %v1415, 0.0
      %v1430 = vadd.f32 %v1428, %v1429
      %v1431 = vrot.slane %v1430, 4
      %v1432 = vadd.f32 %v1430, %v1431
      %v1433 = vrot.slane %v1432, 2
      %v1434 = vadd.f32 %v1432, %v1433
      %v1435 = vrot.slane %v1434, 1
      %v1436 = vadd.f32 %v1434, %v1435
      %v1437 = vsel %vm1242, %v1407, %v1436
      %1438 = vst.msk [vmem:[%s343] sm:$0x3] %vm1244, %v1437
      %p1439 = scmp.lt.s32.totalorder %s20, 1
      %s1440 = scalar_select %p1439, %s20, 1
      %s1441 = smul.addr %s1440, 8
      %s1442 = smul.addr %s1441, 4
      %s1443 = scalar_lea.vmem %s5, %s1442
      %p1444 = scmp.lt.s32.totalorder %s20, 1
      %s1445 = scalar_select %p1444, %s20, 1
      %s1446 = smul.addr %s1445, 2
      %s1447 = scalar_lea.vmem %s6, %s1446
      %p1448 = scmp.lt.s32.totalorder %s20, 1
      %s1449 = scalar_select %p1448, %s20, 1
      %s1450 = smul.addr %s1449, 8
      %s1451 = smul.addr %s1450, 4
      %s1452 = scalar_lea.vmem %s7, %s1451
      %p1453 = scmp.lt.s32.totalorder %s20, 1
      %s1454 = scalar_select %p1453, %s20, 1
      %s1455 = smul.addr %s1454, 2
      %s1456 = scalar_lea.vmem %s8, %s1455
      // Predicated region
      $region45: #{resblock_forward.5} parent=39 // pred_check
        %p1457 = pneg %p148
      $region46: #{resblock_forward.5} parent=39 // pred_check_branch
        %1459 = sbr.rel (%p1457) target = $region48
      $region47: #{resblock_forward.5} parent=39 // pred_region
        _
      $region48: #{resblock_forward.5} parent=39 // pred_fallthru
        _
      // Predicated region
      $region49: #{resblock_forward.5} parent=39 // pred_check
        %p1460 = pneg %p174
      $region50: #{resblock_forward.5} parent=39 // pred_check_branch
        %1462 = sbr.rel (%p1460) target = $region52
      $region51: #{resblock_forward.5} parent=39 // pred_region
        _
      $region52: #{resblock_forward.5} parent=39 // pred_fallthru
        _
      // Predicated region
      $region53: #{resblock_forward.5} parent=39 // pred_check
        %p1463 = pneg %p200
      $region54: #{resblock_forward.5} parent=39 // pred_check_branch
        %1465 = sbr.rel (%p1463) target = $region56
      $region55: #{resblock_forward.5} parent=39 // pred_region
        _
      $region56: #{resblock_forward.5} parent=39 // pred_fallthru
        _
      // Predicated region
      $region57: #{resblock_forward.5} parent=39 // pred_check
        %p1466 = pneg %p226
      $region58: #{resblock_forward.5} parent=39 // pred_check_branch
        %1468 = sbr.rel (%p1466) target = $region60
      $region59: #{resblock_forward.5} parent=39 // pred_region
        _
      $region60: #{resblock_forward.5} parent=39 // pred_fallthru
        _
    $region40: #{resblock_forward.5} parent=5 // pred_fallthru
      _
    %p1469 = scmp.le.s32.totalorder 2, %s15
    // Predicated region
    $region61: #{resblock_forward.5} parent=5 // pred_check
      %p1470 = pneg %p1469
    $region62: #{resblock_forward.5} parent=5 // pred_check_branch
      %1472 = sbr.rel (%p1470) target = $region64
    $region63: #{resblock_forward.5} parent=5 // pred_region
      %s1473 = ssub.s32 %s15, 2
      // Predicated region
      $region65: #{resblock_forward.5} parent=63 // pred_check
        %p1474 = pneg %p154
      $region66: #{resblock_forward.5} parent=63 // pred_check_branch
        %1476 = sbr.rel (%p1474) target = $region68
      $region67: #{resblock_forward.5} parent=63 // pred_region
        %p1477 = scmp.lt.s32.totalorder %s21, 1
        %s1478 = scalar_select %p1477, %s21, 1
        %s1479 = smul.addr %s1478, 8
        %s1480 = smul.addr %s1479, 4
        %s1481 = scalar_lea.vmem %s5, %s1480
      $region68: #{resblock_forward.5} parent=63 // pred_fallthru
        _
      // Predicated region
      $region69: #{resblock_forward.5} parent=63 // pred_check
        %p1482 = pneg %p180
      $region70: #{resblock_forward.5} parent=63 // pred_check_branch
        %1484 = sbr.rel (%p1482) target = $region72
      $region71: #{resblock_forward.5} parent=63 // pred_region
        %p1485 = scmp.lt.s32.totalorder %s21, 1
        %s1486 = scalar_select %p1485, %s21, 1
        %s1487 = smul.addr %s1486, 2
        %s1488 = scalar_lea.vmem %s6, %s1487
      $region72: #{resblock_forward.5} parent=63 // pred_fallthru
        _
      // Predicated region
      $region73: #{resblock_forward.5} parent=63 // pred_check
        %p1489 = pneg %p206
      $region74: #{resblock_forward.5} parent=63 // pred_check_branch
        %1491 = sbr.rel (%p1489) target = $region76
      $region75: #{resblock_forward.5} parent=63 // pred_region
        %p1492 = scmp.lt.s32.totalorder %s21, 1
        %s1493 = scalar_select %p1492, %s21, 1
        %s1494 = smul.addr %s1493, 8
        %s1495 = smul.addr %s1494, 4
        %s1496 = scalar_lea.vmem %s7, %s1495
      $region76: #{resblock_forward.5} parent=63 // pred_fallthru
        _
      // Predicated region
      $region77: #{resblock_forward.5} parent=63 // pred_check
        %p1497 = pneg %p232
      $region78: #{resblock_forward.5} parent=63 // pred_check_branch
        %1499 = sbr.rel (%p1497) target = $region80
      $region79: #{resblock_forward.5} parent=63 // pred_region
        %p1500 = scmp.lt.s32.totalorder %s21, 1
        %s1501 = scalar_select %p1500, %s21, 1
        %s1502 = smul.addr %s1501, 2
        %s1503 = scalar_lea.vmem %s8, %s1502
      $region80: #{resblock_forward.5} parent=63 // pred_fallthru
        _
    $region64: #{resblock_forward.5} parent=5 // pred_fallthru
      _
  $region6: #{resblock_forward.5} parent=0 // loop_footer
    %s19 = sadd.s32 1, %s15
  $region7: #{resblock_forward.5} parent=0 // loop_footer_branch
    %14 = sbr.rel target = $region3
  $region8: #{resblock_forward.5} parent=0 // loop_exit
    _

</llo_original>
